<compile_context>
chip_gen: v6e
topology: v6e:2x2x1
jax: 0.10.0
libtpu: 0.0.40
codegen_flags: <defaults>
</compile_context>

<pallas_src>
import functools

import jax
import jax.numpy as jnp
from jax import lax
from jax.experimental import pallas as pl
from jax.experimental.pallas import tpu as pltpu

# Architecture constants (16x16 MiniGrid image).
HIDDEN = 64        # GRU hidden size
HP = 128           # padded per-gate / hidden lane width (lane-aligned gates)
DIR_EMB = 8        # direction embedding size
OH1 = OW1 = 7      # conv1 output spatial (16 -> 7 -> 3 -> 1 with k=3, s=2)
K1_COLS = 27       # 3*3*3 conv1 patch size
C1 = 32            # conv1 output channels
C2 = 64            # conv2/conv3 output channels
TB = 8             # timestep block (sublane tile) for the recurrence


# ----------------------------------------------------------------------------
# Fused Pallas kernel: conv1 + conv2 + conv3 + GRU recurrence + heads + softmax
# ----------------------------------------------------------------------------
def _rnn_agent_kernel(p1_ref, emb_ref,
                      w1_ref, b1_ref, w2b_ref, b2t_ref, w3_ref, b3_ref,
                      wih_c_ref, wih_d_ref, bih_ref, whh_ref, bhh_ref,
                      head_w_ref, head_b_ref,
                      out_ref,
                      gi_sc, hs_sc,
                      *, num_actions):
    f32 = jnp.float32
    bf16 = jnp.bfloat16
    T = emb_ref.shape[0]                      # padded to a multiple of TB

    # --- conv1: one matmul vs block-diagonal bf16 weight (1/255 folded in) ---
    # p1 rows = oh*T + t, cols = ow*27 + (dy,dx,c); y1 rows = h*T + t, cols = w*32 + c
    y1 = jnp.dot(p1_ref[...], w1_ref[...], preferred_element_type=f32) + b1_ref[...]
    y1 = jnp.maximum(y1, 0.0).astype(bf16)                            # (7*T, 224)

    # --- conv2 (block-banded, lane-aligned) + conv3 ---------------------------
    y3 = jnp.zeros((T, C2), f32)
    for oy in range(3):
        acc2 = jnp.zeros((T, 3 * C2), f32)
        for dy in range(3):
            h_in = 2 * oy + dy
            acc2 = acc2 + jnp.dot(y1[h_in * T:(h_in + 1) * T, :],      # (T, 224)
                                  w2b_ref[dy * 224:(dy + 1) * 224, :], # ref slice at use
                                  preferred_element_type=f32)
        y2p = jnp.maximum(acc2 + b2t_ref[...], 0.0).astype(bf16)       # (T,192), cols=ox*64+c
        y3 = y3 + jnp.dot(y2p, w3_ref[oy * 192:(oy + 1) * 192, :],
                          preferred_element_type=f32)
    conv_out = jnp.maximum(y3 + b3_ref[...], 0.0).astype(bf16)         # (T, 64)

    # --- GRU input projection hoisted out of the recurrence (gate-padded) ----
    # gi columns: gate g occupies [g*HP, g*HP + HIDDEN), rest are exact zeros.
    gi_sc[...] = (jnp.dot(conv_out, wih_c_ref[...], preferred_element_type=f32)
                  + jnp.dot(emb_ref[...], wih_d_ref[...], preferred_element_type=f32)
                  + bih_ref[...])                                      # (T, 3*HP)

    # --- sequential GRUCell: fori_loop over TB-blocks, inner steps unrolled ---
    sub = lax.broadcasted_iota(jnp.int32, (TB, 1), 0)                  # sublane index

    def blk_body(blk, h):
        row0 = pl.multiple_of(blk * TB, TB)
        gi_blk = gi_sc[pl.ds(row0, TB), :]                             # one (8, 3*HP) load
        hblk = jnp.zeros((TB, HP), f32)
        for s in range(TB):
            gi_t = gi_blk[s:s + 1, :]                                  # (1, 3*HP)
            gh = jnp.dot(h[:, :HIDDEN], whh_ref[...],                  # K=64, ref at use
                         preferred_element_type=f32) + bhh_ref[...]    # (1, 3*HP)
            r = jax.nn.sigmoid(gi_t[:, 0:HP] + gh[:, 0:HP])
            z = jax.nn.sigmoid(gi_t[:, HP:2 * HP] + gh[:, HP:2 * HP])
            n = jnp.tanh(gi_t[:, 2 * HP:3 * HP] + r * gh[:, 2 * HP:3 * HP])
            h = (1.0 - z) * n + z * h                                  # pad lanes stay 0
            hblk = hblk + jnp.where(sub == s, h, 0.0)                  # row s <- h
        hs_sc[pl.ds(row0, TB), :] = hblk                               # one (8,128) store
        return h

    lax.fori_loop(0, T // TB, blk_body, jnp.zeros((1, HP), f32))

    # --- batched actor/critic heads + masked softmax, one lane-dense store ---
    heads = jnp.dot(hs_sc[...].astype(bf16), head_w_ref[...],
                    preferred_element_type=f32) + head_b_ref[...]      # (T, HP)
    lane = lax.broadcasted_iota(jnp.int32, (T, HP), 1)
    amask = lane < num_actions
    logits = jnp.where(amask, heads, -1e30)
    m = jnp.max(logits, axis=-1, keepdims=True)
    e = jnp.where(amask, jnp.exp(logits - m), 0.0)
    pol = e / jnp.sum(e, axis=-1, keepdims=True)                       # exact divide
    # cols [0, A): softmax policy, col A: critic value, cols > A: zeros
    out_ref[...] = jnp.where(amask, pol, heads)


# ----------------------------------------------------------------------------
# Parameter init (torch-equivalent layouts) and packing into kernel layouts
# ----------------------------------------------------------------------------
def init_params(key, num_actions=7, hidden_size=HIDDEN, direction_embed_size=DIR_EMB):
    ks = jax.random.split(key, 12)
    f32 = jnp.float32
    s = 0.05
    rnn_in = C2 + direction_embed_size
    return {
        # conv weights in im2col matrix form (k*k*Cin, Cout), row order (dy, dx, c)
        # == torch_weight.permute(2, 3, 1, 0).reshape(-1, Cout)
        "conv1_w": jax.random.normal(ks[0], (K1_COLS, C1), f32) * s,
        "conv1_b": jax.random.normal(ks[1], (C1,), f32) * s,
        "conv2_w": jax.random.normal(ks[2], (3 * 3 * C1, C2), f32) * s,
        "conv2_b": jax.random.normal(ks[3], (C2,), f32) * s,
        "conv3_w": jax.random.normal(ks[4], (3 * 3 * C2, C2), f32) * s,
        "conv3_b": jax.random.normal(ks[5], (C2,), f32) * s,
        "dir_emb": jax.random.normal(ks[6], (4, direction_embed_size), f32) * s,
        # GRUCell weights stored transposed vs torch: (in, 3H) / (H, 3H); gates [r, z, n]
        "gru_wih": jax.random.normal(ks[7], (rnn_in, 3 * hidden_size), f32) * s,
        "gru_whh": jax.random.normal(ks[8], (hidden_size, 3 * hidden_size), f32) * s,
        "gru_bih": jnp.zeros((3 * hidden_size,), f32),
        "gru_bhh": jnp.zeros((3 * hidden_size,), f32),
        "actor_w": jax.random.normal(ks[9], (hidden_size, num_actions), f32) * s,
        "actor_b": jnp.zeros((num_actions,), f32),
        "critic_w": jax.random.normal(ks[10], (hidden_size, 1), f32) * s,
        "critic_b": jnp.zeros((1,), f32),
    }


def pack_params(p, num_actions=7, hidden_size=HIDDEN):
    """One-time repacking into lane-aligned / block-diagonal / block-banded layouts."""
    f32, bf16 = jnp.float32, jnp.bfloat16
    H = hidden_size
    assert H <= HP and num_actions + 1 <= HP

    # conv1: block-diagonal (one 27x32 block per output column), /255 folded in.
    c1 = p["conv1_w"].astype(f32) / 255.0
    w1bd = jnp.zeros((OW1 * K1_COLS, OW1 * C1), f32)
    for i in range(OW1):
        w1bd = w1bd.at[i * K1_COLS:(i + 1) * K1_COLS, i * C1:(i + 1) * C1].set(c1)
    b1t = jnp.tile(p["conv1_b"].reshape(1, C1), (1, OW1))              # (1, 224)

    # conv2: block-banded per dy.  Row (w*32 + c), col (ox*64 + co) holds
    # conv2_w[(dy*3 + (w - 2*ox))*32 + c, co]; zero where (w - 2*ox) not in {0,1,2}.
    w2 = p["conv2_w"].astype(f32)                                      # (288, 64), rows (dy,dx,c)
    w2b = jnp.zeros((3, OW1 * C1, 3 * C2), f32)
    for dy in range(3):
        for ox in range(3):
            for dx in range(3):
                w_in = 2 * ox + dx
                blk = w2[(dy * 3 + dx) * C1:(dy * 3 + dx + 1) * C1, :]
                w2b = w2b.at[dy, w_in * C1:(w_in + 1) * C1,
                             ox * C2:(ox + 1) * C2].set(blk)
    w2b = w2b.reshape(3 * OW1 * C1, 3 * C2)                            # (672, 192)
    b2t = jnp.tile(p["conv2_b"].reshape(1, C2), (1, 3))                # (1, 192)

    def pad_gate_cols(w2d):
        out = jnp.zeros((w2d.shape[0], 3 * HP), f32)
        for g in range(3):
            out = out.at[:, g * HP:g * HP + H].set(w2d[:, g * H:(g + 1) * H])
        return out

    wih = p["gru_wih"]                                                 # (72, 3H), rows [conv | dir]

    head_w = jnp.zeros((HP, HP), f32)
    head_w = head_w.at[:H, :num_actions].set(p["actor_w"])
    head_w = head_w.at[:H, num_actions:num_actions + 1].set(p["critic_w"])
    head_b = jnp.zeros((1, HP), f32)
    head_b = head_b.at[0, :num_actions].set(p["actor_b"])
    head_b = head_b.at[0, num_actions].set(p["critic_b"][0])

    return {
        # bf16 MXU-feed weights (accumulation stays f32 in-kernel)
        "w1bd": w1bd.astype(bf16),                                     # (189, 224)
        "w2b": w2b.astype(bf16),                                       # (672, 192)
        "w3": p["conv3_w"].astype(bf16),                               # (576, 64), rows (oy,ox,c)
        "wih_c": pad_gate_cols(wih[:C2]).astype(bf16),                 # (64, 384)
        "wih_d": pad_gate_cols(wih[C2:]).astype(bf16),                 # (8, 384)
        "head_w": head_w.astype(bf16),                                 # (128, 128)
        "dir_emb": p["dir_emb"].astype(bf16),                          # (4, 8)
        # f32 recurrence weight (precision, no per-step casts) + f32 biases
        "whh": pad_gate_cols(p["gru_whh"]),                            # (64, 384)
        "b1t": b1t, "b2t": b2t, "b3": p["conv3_b"].reshape(1, C2),
        "bih": pad_gate_cols(p["gru_bih"].reshape(1, 3 * H)),          # (1, 384)
        "bhh": pad_gate_cols(p["gru_bhh"].reshape(1, 3 * H)),          # (1, 384)
        "head_b": head_b,                                              # (1, 128)
    }


# ----------------------------------------------------------------------------
# XLA glue: conv1 im2col (input side only), embedding gather, pallas_call
# ----------------------------------------------------------------------------
def _conv1_im2col(x):
    """x: (T, 16, 16, 3) -> (7*T, 7*27); rows = oh*T + t, cols = ow*27 + (dy*9 + dx*3 + c)."""
    T, Hh, Ww, C = x.shape
    k, s = 3, 2
    OH = (Hh - k) // s + 1
    OW = (Ww - k) // s + 1
    cols = []
    for dy in range(k):
        for dx in range(k):
            cols.append(x[:, dy:dy + s * (OH - 1) + 1:s, dx:dx + s * (OW - 1) + 1:s, :])
    patches = jnp.stack(cols, axis=3)                  # (T, OH, OW, k*k, C)
    patches = jnp.transpose(patches, (1, 0, 2, 3, 4))  # (OH, T, OW, k*k, C)
    return patches.reshape(OH * T, OW * k * k * C)


def _full_spec(a):
    nd = a.ndim
    return pl.BlockSpec(a.shape, lambda *_: (0,) * nd)


@functools.partial(jax.jit, static_argnames=("num_actions",))
def rnn_agent_forward(packed, img, direction, *, num_actions=7):
    """Sequence path of RNNAgent.forward.

    img:       (T, 1, H, W, 3) float32 in [0, 255]
    direction: (T, 1) int32 in {0..3}
    returns (policy (T, num_actions), values (T,))
    """
    x = img[:, 0]                               # (T, 16, 16, 3) NHWC
    d = direction[:, 0]                         # (T,)
    T = x.shape[0]
    T_pad = ((T + TB - 1) // TB) * TB           # sublane-align the time axis

    if T_pad != T:
        x = jnp.pad(x, ((0, T_pad - T), (0, 0), (0, 0), (0, 0)))
        d = jnp.pad(d, ((0, T_pad - T),))

    p1 = _conv1_im2col(x).astype(jnp.bfloat16)  # (7*T_pad, 189), 0..255 exact in bf16
    emb = packed["dir_emb"][d]                  # (T_pad, 8) bf16

    args = (p1, emb,
            packed["w1bd"], packed["b1t"],
            packed["w2b"], packed["b2t"],
            packed["w3"], packed["b3"],
            packed["wih_c"], packed["wih_d"], packed["bih"],
            packed["whh"], packed["bhh"],
            packed["head_w"], packed["head_b"])

    kernel = functools.partial(_rnn_agent_kernel, num_actions=num_actions)
    out = pl.pallas_call(
        kernel,
        out_shape=jax.ShapeDtypeStruct((T_pad, HP), jnp.float32),
        in_specs=[_full_spec(a) for a in args],
        out_specs=pl.BlockSpec((T_pad, HP), lambda *_: (0, 0)),
        scratch_shapes=[pltpu.VMEM((T_pad, 3 * HP), jnp.float32),   # hoisted GRU input proj
                        pltpu.VMEM((T_pad, HP), jnp.float32)],      # hidden states h_t
    )(*args)

    policy = out[:T, :num_actions]
    values = out[:T, num_actions]
    return policy, values


# ----------------------------------------------------------------------------
# Pure-JAX f32 reference (same math as torch RNNAgent.forward, sequence path)
# ----------------------------------------------------------------------------
def _ref_forward(params, img, direction):
    x = img[:, 0] / 255.0                                              # (T, 16, 16, 3)

    def conv(inp, w_mat, b, k=3, s=2):
        T, Hh, Ww, C = inp.shape
        OH = (Hh - k) // s + 1
        OW = (Ww - k) // s + 1
        cols = []
        for dy in range(k):
            for dx in range(k):
                cols.append(inp[:, dy:dy + s * (OH - 1) + 1:s, dx:dx + s * (OW - 1) + 1:s, :])
        pat = jnp.stack(cols, axis=3).reshape(T, OH, OW, k * k * C)
        return jnp.einsum("towk,kc->towc", pat, w_mat) + b

    y1 = jax.nn.relu(conv(x, params["conv1_w"], params["conv1_b"]))
    y2 = jax.nn.relu(conv(y1, params["conv2_w"], params["conv2_b"]))
    y3 = jax.nn.relu(conv(y2, params["conv3_w"], params["conv3_b"]))
    conv_out = y3.reshape(y3.shape[0], -1)                             # (T, 64)
    emb = params["dir_emb"][direction[:, 0]]                           # (T, 8)
    feat = jnp.concatenate([conv_out, emb], axis=1)                    # (T, 72)

    gi = feat @ params["gru_wih"] + params["gru_bih"]                  # (T, 3H)
    Hn = HIDDEN
    h = jnp.zeros((Hn,), jnp.float32)
    hs = []
    for t in range(feat.shape[0]):
        gh = h @ params["gru_whh"] + params["gru_bhh"]
        r = jax.nn.sigmoid(gi[t, :Hn] + gh[:Hn])
        z = jax.nn.sigmoid(gi[t, Hn:2 * Hn] + gh[Hn:2 * Hn])
        n = jnp.tanh(gi[t, 2 * Hn:] + r * gh[2 * Hn:])
        h = (1.0 - z) * n + z * h
        hs.append(h)
    hs = jnp.stack(hs)                                                 # (T, H)

    logits = hs @ params["actor_w"] + params["actor_b"]
    values = (hs @ params["critic_w"] + params["critic_b"])[:, 0]
    return jax.nn.softmax(logits, axis=-1), values


if __name__ == "__main__":
    key = jax.random.PRNGKey(0)
    k_img, k_dir, k_par = jax.random.split(key, 3)

    T, H, W = 8, 16, 16
    num_actions = 7

    img = jax.random.randint(k_img, (T, 1, H, W, 3), 0, 256).astype(jnp.float32)
    direction = jax.random.randint(k_dir, (T, 1), 0, 4, dtype=jnp.int32)
    params = init_params(k_par, num_actions=num_actions)
    packed = pack_params(params, num_actions=num_actions)

    policy, values = rnn_agent_forward(packed, img, direction, num_actions=num_actions)
    jax.block_until_ready((policy, values))

    assert policy.shape == (T, num_actions)
    assert values.shape == (T,)
    assert bool(jnp.all(jnp.isfinite(policy))) and bool(jnp.all(jnp.isfinite(values)))
    # exact softmax divide -> rows sum to 1 at f32 accuracy
    assert bool(jnp.allclose(jnp.sum(policy, axis=-1), 1.0, atol=1e-3))

    # compare against the pure-JAX f32 reference (bf16 MXU feeds -> loose tol)
    ref_policy, ref_values = _ref_forward(params, img, direction)
    assert bool(jnp.allclose(policy, ref_policy, atol=2e-2))
    assert bool(jnp.allclose(values, ref_values, atol=2e-2))

    print("KERNEL_OK")
</pallas_src>

<mosaic_0001>
module attributes {stable_mosaic.version = 11 : i64} {
  func.func @_rnn_agent_kernel(%arg0: memref<56x189xbf16, #tpu.memory_space<vmem>>, %arg1: memref<8x8xbf16, #tpu.memory_space<vmem>>, %arg2: memref<189x224xbf16, #tpu.memory_space<vmem>>, %arg3: memref<1x224xf32, #tpu.memory_space<vmem>>, %arg4: memref<672x192xbf16, #tpu.memory_space<vmem>>, %arg5: memref<1x192xf32, #tpu.memory_space<vmem>>, %arg6: memref<576x64xbf16, #tpu.memory_space<vmem>>, %arg7: memref<1x64xf32, #tpu.memory_space<vmem>>, %arg8: memref<64x384xbf16, #tpu.memory_space<vmem>>, %arg9: memref<8x384xbf16, #tpu.memory_space<vmem>>, %arg10: memref<1x384xf32, #tpu.memory_space<vmem>>, %arg11: memref<64x384xf32, #tpu.memory_space<vmem>>, %arg12: memref<1x384xf32, #tpu.memory_space<vmem>>, %arg13: memref<128x128xbf16, #tpu.memory_space<vmem>>, %arg14: memref<1x128xf32, #tpu.memory_space<vmem>>, %arg15: memref<8x128xf32, #tpu.memory_space<vmem>>, %arg16: memref<8x384xf32, #tpu.memory_space<vmem>>, %arg17: memref<8x128xf32, #tpu.memory_space<vmem>>) attributes {dimension_semantics = [], scalar_prefetch = 0 : i64, scratch_operands = 2 : i64, tpu.core_type = #tpu.core_type<tc>} {
    %c0 = arith.constant 0 : index
    %c0_0 = arith.constant 0 : index
    %0 = vector.load %arg0[%c0, %c0_0] : memref<56x189xbf16, #tpu.memory_space<vmem>>, vector<56x189xbf16>
    %c0_1 = arith.constant 0 : index
    %c0_2 = arith.constant 0 : index
    %1 = vector.load %arg2[%c0_1, %c0_2] : memref<189x224xbf16, #tpu.memory_space<vmem>>, vector<189x224xbf16>
    %cst = arith.constant dense<0.000000e+00> : vector<56x224xf32>
    %2 = tpu.matmul %0, %1, %cst {dimension_numbers = #tpu.dot_dimension_numbers<[1], [0], [0], [1], [0, 0, 1, 1], [], []>} : vector<56x189xbf16>, vector<189x224xbf16>, vector<56x224xf32> -> vector<56x224xf32>
    %c0_3 = arith.constant 0 : index
    %c0_4 = arith.constant 0 : index
    %3 = vector.load %arg3[%c0_3, %c0_4] : memref<1x224xf32, #tpu.memory_space<vmem>>, vector<1x224xf32>
    %4 = vector.broadcast %3 : vector<1x224xf32> to vector<56x224xf32>
    %5 = arith.addf %2, %4 : vector<56x224xf32>
    %cst_5 = arith.constant 0.000000e+00 : f32
    %6 = vector.broadcast %cst_5 : f32 to vector<56x224xf32>
    %7 = arith.maximumf %5, %6 : vector<56x224xf32>
    %8 = arith.truncf %7 : vector<56x224xf32> to vector<56x224xbf16>
    %cst_6 = arith.constant 0.000000e+00 : f32
    %9 = vector.broadcast %cst_6 : f32 to vector<8x64xf32>
    %cst_7 = arith.constant 0.000000e+00 : f32
    %10 = vector.broadcast %cst_7 : f32 to vector<8x192xf32>
    %11 = vector.extract_strided_slice %8 {offsets = [0, 0], sizes = [8, 224], strides = [1, 1]} : vector<56x224xbf16> to vector<8x224xbf16>
    %c0_8 = arith.constant 0 : index
    %c0_9 = arith.constant 0 : index
    %12 = vector.load %arg4[%c0_8, %c0_9] : memref<672x192xbf16, #tpu.memory_space<vmem>>, vector<224x192xbf16>
    %cst_10 = arith.constant dense<0.000000e+00> : vector<8x192xf32>
    %13 = tpu.matmul %11, %12, %cst_10 {dimension_numbers = #tpu.dot_dimension_numbers<[1], [0], [0], [1], [0, 0, 1, 1], [], []>} : vector<8x224xbf16>, vector<224x192xbf16>, vector<8x192xf32> -> vector<8x192xf32>
    %14 = arith.addf %10, %13 : vector<8x192xf32>
    %15 = vector.extract_strided_slice %8 {offsets = [8, 0], sizes = [8, 224], strides = [1, 1]} : vector<56x224xbf16> to vector<8x224xbf16>
    %c224 = arith.constant 224 : index
    %c0_11 = arith.constant 0 : index
    %16 = vector.load %arg4[%c224, %c0_11] : memref<672x192xbf16, #tpu.memory_space<vmem>>, vector<224x192xbf16>
    %cst_12 = arith.constant dense<0.000000e+00> : vector<8x192xf32>
    %17 = tpu.matmul %15, %16, %cst_12 {dimension_numbers = #tpu.dot_dimension_numbers<[1], [0], [0], [1], [0, 0, 1, 1], [], []>} : vector<8x224xbf16>, vector<224x192xbf16>, vector<8x192xf32> -> vector<8x192xf32>
    %18 = arith.addf %14, %17 : vector<8x192xf32>
    %19 = vector.extract_strided_slice %8 {offsets = [16, 0], sizes = [8, 224], strides = [1, 1]} : vector<56x224xbf16> to vector<8x224xbf16>
    %c448 = arith.constant 448 : index
    %c0_13 = arith.constant 0 : index
    %20 = vector.load %arg4[%c448, %c0_13] : memref<672x192xbf16, #tpu.memory_space<vmem>>, vector<224x192xbf16>
    %cst_14 = arith.constant dense<0.000000e+00> : vector<8x192xf32>
    %21 = tpu.matmul %19, %20, %cst_14 {dimension_numbers = #tpu.dot_dimension_numbers<[1], [0], [0], [1], [0, 0, 1, 1], [], []>} : vector<8x224xbf16>, vector<224x192xbf16>, vector<8x192xf32> -> vector<8x192xf32>
    %22 = arith.addf %18, %21 : vector<8x192xf32>
    %c0_15 = arith.constant 0 : index
    %c0_16 = arith.constant 0 : index
    %23 = vector.load %arg5[%c0_15, %c0_16] : memref<1x192xf32, #tpu.memory_space<vmem>>, vector<1x192xf32>
    %24 = vector.broadcast %23 : vector<1x192xf32> to vector<8x192xf32>
    %25 = arith.addf %22, %24 : vector<8x192xf32>
    %cst_17 = arith.constant 0.000000e+00 : f32
    %26 = vector.broadcast %cst_17 : f32 to vector<8x192xf32>
    %27 = arith.maximumf %25, %26 : vector<8x192xf32>
    %28 = arith.truncf %27 : vector<8x192xf32> to vector<8x192xbf16>
    %c0_18 = arith.constant 0 : index
    %c0_19 = arith.constant 0 : index
    %29 = vector.load %arg6[%c0_18, %c0_19] : memref<576x64xbf16, #tpu.memory_space<vmem>>, vector<192x64xbf16>
    %cst_20 = arith.constant dense<0.000000e+00> : vector<8x64xf32>
    %30 = tpu.matmul %28, %29, %cst_20 {dimension_numbers = #tpu.dot_dimension_numbers<[1], [0], [0], [1], [0, 0, 1, 1], [], []>} : vector<8x192xbf16>, vector<192x64xbf16>, vector<8x64xf32> -> vector<8x64xf32>
    %31 = arith.addf %9, %30 : vector<8x64xf32>
    %cst_21 = arith.constant 0.000000e+00 : f32
    %32 = vector.broadcast %cst_21 : f32 to vector<8x192xf32>
    %33 = vector.extract_strided_slice %8 {offsets = [16, 0], sizes = [8, 224], strides = [1, 1]} : vector<56x224xbf16> to vector<8x224xbf16>
    %c0_22 = arith.constant 0 : index
    %c0_23 = arith.constant 0 : index
    %34 = vector.load %arg4[%c0_22, %c0_23] : memref<672x192xbf16, #tpu.memory_space<vmem>>, vector<224x192xbf16>
    %cst_24 = arith.constant dense<0.000000e+00> : vector<8x192xf32>
    %35 = tpu.matmul %33, %34, %cst_24 {dimension_numbers = #tpu.dot_dimension_numbers<[1], [0], [0], [1], [0, 0, 1, 1], [], []>} : vector<8x224xbf16>, vector<224x192xbf16>, vector<8x192xf32> -> vector<8x192xf32>
    %36 = arith.addf %32, %35 : vector<8x192xf32>
    %37 = vector.extract_strided_slice %8 {offsets = [24, 0], sizes = [8, 224], strides = [1, 1]} : vector<56x224xbf16> to vector<8x224xbf16>
    %c224_25 = arith.constant 224 : index
    %c0_26 = arith.constant 0 : index
    %38 = vector.load %arg4[%c224_25, %c0_26] : memref<672x192xbf16, #tpu.memory_space<vmem>>, vector<224x192xbf16>
    %cst_27 = arith.constant dense<0.000000e+00> : vector<8x192xf32>
    %39 = tpu.matmul %37, %38, %cst_27 {dimension_numbers = #tpu.dot_dimension_numbers<[1], [0], [0], [1], [0, 0, 1, 1], [], []>} : vector<8x224xbf16>, vector<224x192xbf16>, vector<8x192xf32> -> vector<8x192xf32>
    %40 = arith.addf %36, %39 : vector<8x192xf32>
    %41 = vector.extract_strided_slice %8 {offsets = [32, 0], sizes = [8, 224], strides = [1, 1]} : vector<56x224xbf16> to vector<8x224xbf16>
    %c448_28 = arith.constant 448 : index
    %c0_29 = arith.constant 0 : index
    %42 = vector.load %arg4[%c448_28, %c0_29] : memref<672x192xbf16, #tpu.memory_space<vmem>>, vector<224x192xbf16>
    %cst_30 = arith.constant dense<0.000000e+00> : vector<8x192xf32>
    %43 = tpu.matmul %41, %42, %cst_30 {dimension_numbers = #tpu.dot_dimension_numbers<[1], [0], [0], [1], [0, 0, 1, 1], [], []>} : vector<8x224xbf16>, vector<224x192xbf16>, vector<8x192xf32> -> vector<8x192xf32>
    %44 = arith.addf %40, %43 : vector<8x192xf32>
    %c0_31 = arith.constant 0 : index
    %c0_32 = arith.constant 0 : index
    %45 = vector.load %arg5[%c0_31, %c0_32] : memref<1x192xf32, #tpu.memory_space<vmem>>, vector<1x192xf32>
    %46 = vector.broadcast %45 : vector<1x192xf32> to vector<8x192xf32>
    %47 = arith.addf %44, %46 : vector<8x192xf32>
    %cst_33 = arith.constant 0.000000e+00 : f32
    %48 = vector.broadcast %cst_33 : f32 to vector<8x192xf32>
    %49 = arith.maximumf %47, %48 : vector<8x192xf32>
    %50 = arith.truncf %49 : vector<8x192xf32> to vector<8x192xbf16>
    %c192 = arith.constant 192 : index
    %c0_34 = arith.constant 0 : index
    %51 = vector.load %arg6[%c192, %c0_34] : memref<576x64xbf16, #tpu.memory_space<vmem>>, vector<192x64xbf16>
    %cst_35 = arith.constant dense<0.000000e+00> : vector<8x64xf32>
    %52 = tpu.matmul %50, %51, %cst_35 {dimension_numbers = #tpu.dot_dimension_numbers<[1], [0], [0], [1], [0, 0, 1, 1], [], []>} : vector<8x192xbf16>, vector<192x64xbf16>, vector<8x64xf32> -> vector<8x64xf32>
    %53 = arith.addf %31, %52 : vector<8x64xf32>
    %cst_36 = arith.constant 0.000000e+00 : f32
    %54 = vector.broadcast %cst_36 : f32 to vector<8x192xf32>
    %55 = vector.extract_strided_slice %8 {offsets = [32, 0], sizes = [8, 224], strides = [1, 1]} : vector<56x224xbf16> to vector<8x224xbf16>
    %c0_37 = arith.constant 0 : index
    %c0_38 = arith.constant 0 : index
    %56 = vector.load %arg4[%c0_37, %c0_38] : memref<672x192xbf16, #tpu.memory_space<vmem>>, vector<224x192xbf16>
    %cst_39 = arith.constant dense<0.000000e+00> : vector<8x192xf32>
    %57 = tpu.matmul %55, %56, %cst_39 {dimension_numbers = #tpu.dot_dimension_numbers<[1], [0], [0], [1], [0, 0, 1, 1], [], []>} : vector<8x224xbf16>, vector<224x192xbf16>, vector<8x192xf32> -> vector<8x192xf32>
    %58 = arith.addf %54, %57 : vector<8x192xf32>
    %59 = vector.extract_strided_slice %8 {offsets = [40, 0], sizes = [8, 224], strides = [1, 1]} : vector<56x224xbf16> to vector<8x224xbf16>
    %c224_40 = arith.constant 224 : index
    %c0_41 = arith.constant 0 : index
    %60 = vector.load %arg4[%c224_40, %c0_41] : memref<672x192xbf16, #tpu.memory_space<vmem>>, vector<224x192xbf16>
    %cst_42 = arith.constant dense<0.000000e+00> : vector<8x192xf32>
    %61 = tpu.matmul %59, %60, %cst_42 {dimension_numbers = #tpu.dot_dimension_numbers<[1], [0], [0], [1], [0, 0, 1, 1], [], []>} : vector<8x224xbf16>, vector<224x192xbf16>, vector<8x192xf32> -> vector<8x192xf32>
    %62 = arith.addf %58, %61 : vector<8x192xf32>
    %63 = vector.extract_strided_slice %8 {offsets = [48, 0], sizes = [8, 224], strides = [1, 1]} : vector<56x224xbf16> to vector<8x224xbf16>
    %c448_43 = arith.constant 448 : index
    %c0_44 = arith.constant 0 : index
    %64 = vector.load %arg4[%c448_43, %c0_44] : memref<672x192xbf16, #tpu.memory_space<vmem>>, vector<224x192xbf16>
    %cst_45 = arith.constant dense<0.000000e+00> : vector<8x192xf32>
    %65 = tpu.matmul %63, %64, %cst_45 {dimension_numbers = #tpu.dot_dimension_numbers<[1], [0], [0], [1], [0, 0, 1, 1], [], []>} : vector<8x224xbf16>, vector<224x192xbf16>, vector<8x192xf32> -> vector<8x192xf32>
    %66 = arith.addf %62, %65 : vector<8x192xf32>
    %c0_46 = arith.constant 0 : index
    %c0_47 = arith.constant 0 : index
    %67 = vector.load %arg5[%c0_46, %c0_47] : memref<1x192xf32, #tpu.memory_space<vmem>>, vector<1x192xf32>
    %68 = vector.broadcast %67 : vector<1x192xf32> to vector<8x192xf32>
    %69 = arith.addf %66, %68 : vector<8x192xf32>
    %cst_48 = arith.constant 0.000000e+00 : f32
    %70 = vector.broadcast %cst_48 : f32 to vector<8x192xf32>
    %71 = arith.maximumf %69, %70 : vector<8x192xf32>
    %72 = arith.truncf %71 : vector<8x192xf32> to vector<8x192xbf16>
    %c384 = arith.constant 384 : index
    %c0_49 = arith.constant 0 : index
    %73 = vector.load %arg6[%c384, %c0_49] : memref<576x64xbf16, #tpu.memory_space<vmem>>, vector<192x64xbf16>
    %cst_50 = arith.constant dense<0.000000e+00> : vector<8x64xf32>
    %74 = tpu.matmul %72, %73, %cst_50 {dimension_numbers = #tpu.dot_dimension_numbers<[1], [0], [0], [1], [0, 0, 1, 1], [], []>} : vector<8x192xbf16>, vector<192x64xbf16>, vector<8x64xf32> -> vector<8x64xf32>
    %75 = arith.addf %53, %74 : vector<8x64xf32>
    %c0_51 = arith.constant 0 : index
    %c0_52 = arith.constant 0 : index
    %76 = vector.load %arg7[%c0_51, %c0_52] : memref<1x64xf32, #tpu.memory_space<vmem>>, vector<1x64xf32>
    %77 = vector.broadcast %76 : vector<1x64xf32> to vector<8x64xf32>
    %78 = arith.addf %75, %77 : vector<8x64xf32>
    %cst_53 = arith.constant 0.000000e+00 : f32
    %79 = vector.broadcast %cst_53 : f32 to vector<8x64xf32>
    %80 = arith.maximumf %78, %79 : vector<8x64xf32>
    %81 = arith.truncf %80 : vector<8x64xf32> to vector<8x64xbf16>
    %c0_54 = arith.constant 0 : index
    %c0_55 = arith.constant 0 : index
    %82 = vector.load %arg8[%c0_54, %c0_55] : memref<64x384xbf16, #tpu.memory_space<vmem>>, vector<64x384xbf16>
    %cst_56 = arith.constant dense<0.000000e+00> : vector<8x384xf32>
    %83 = tpu.matmul %81, %82, %cst_56 {dimension_numbers = #tpu.dot_dimension_numbers<[1], [0], [0], [1], [0, 0, 1, 1], [], []>} : vector<8x64xbf16>, vector<64x384xbf16>, vector<8x384xf32> -> vector<8x384xf32>
    %c0_57 = arith.constant 0 : index
    %c0_58 = arith.constant 0 : index
    %84 = vector.load %arg1[%c0_57, %c0_58] : memref<8x8xbf16, #tpu.memory_space<vmem>>, vector<8x8xbf16>
    %c0_59 = arith.constant 0 : index
    %c0_60 = arith.constant 0 : index
    %85 = vector.load %arg9[%c0_59, %c0_60] : memref<8x384xbf16, #tpu.memory_space<vmem>>, vector<8x384xbf16>
    %cst_61 = arith.constant dense<0.000000e+00> : vector<8x384xf32>
    %86 = tpu.matmul %84, %85, %cst_61 {dimension_numbers = #tpu.dot_dimension_numbers<[1], [0], [0], [1], [0, 0, 1, 1], [], []>} : vector<8x8xbf16>, vector<8x384xbf16>, vector<8x384xf32> -> vector<8x384xf32>
    %87 = arith.addf %83, %86 : vector<8x384xf32>
    %c0_62 = arith.constant 0 : index
    %c0_63 = arith.constant 0 : index
    %88 = vector.load %arg10[%c0_62, %c0_63] : memref<1x384xf32, #tpu.memory_space<vmem>>, vector<1x384xf32>
    %89 = vector.broadcast %88 : vector<1x384xf32> to vector<8x384xf32>
    %90 = arith.addf %87, %89 : vector<8x384xf32>
    %c0_64 = arith.constant 0 : index
    %c0_65 = arith.constant 0 : index
    %91 = vector.load %arg16[%c0_64, %c0_65] : memref<8x384xf32, #tpu.memory_space<vmem>>, vector<8x384xf32>
    tpu.vector_store %arg16[%c0_64, %c0_65], %90 {strides = array<i32>} : memref<8x384xf32, #tpu.memory_space<vmem>>, vector<8x384xf32>,
    %92 = tpu.iota {dimensions = array<i32: 0>} : vector<8x1xi32>
    %cst_66 = arith.constant 0.000000e+00 : f32
    %93 = vector.broadcast %cst_66 : f32 to vector<1x128xf32>
    %c0_i32 = arith.constant 0 : i32
    %c8_i32 = arith.constant 8 : i32
    %94 = arith.muli %c0_i32, %c8_i32 : i32
    %95 = tpu.assume_multiple %94, 8 : i32
    %96 = arith.index_cast %95 : i32 to index
    %c0_67 = arith.constant 0 : index
    %97 = vector.load %arg16[%96, %c0_67] : memref<8x384xf32, #tpu.memory_space<vmem>>, vector<8x384xf32>
    %cst_68 = arith.constant 0.000000e+00 : f32
    %98 = vector.broadcast %cst_68 : f32 to vector<8x128xf32>
    %99 = vector.extract_strided_slice %97 {offsets = [0, 0], sizes = [1, 384], strides = [1, 1]} : vector<8x384xf32> to vector<1x384xf32>
    %100 = vector.extract_strided_slice %93 {offsets = [0, 0], sizes = [1, 64], strides = [1, 1]} : vector<1x128xf32> to vector<1x64xf32>
    %c0_69 = arith.constant 0 : index
    %c0_70 = arith.constant 0 : index
    %101 = vector.load %arg11[%c0_69, %c0_70] : memref<64x384xf32, #tpu.memory_space<vmem>>, vector<64x384xf32>
    %cst_71 = arith.constant dense<0.000000e+00> : vector<1x384xf32>
    %102 = tpu.matmul %100, %101, %cst_71 {dimension_numbers = #tpu.dot_dimension_numbers<[1], [0], [0], [1], [0, 0, 1, 1], [], []>} : vector<1x64xf32>, vector<64x384xf32>, vector<1x384xf32> -> vector<1x384xf32>
    %c0_72 = arith.constant 0 : index
    %c0_73 = arith.constant 0 : index
    %103 = vector.load %arg12[%c0_72, %c0_73] : memref<1x384xf32, #tpu.memory_space<vmem>>, vector<1x384xf32>
    %104 = arith.addf %102, %103 : vector<1x384xf32>
    %105 = vector.extract_strided_slice %99 {offsets = [0, 0], sizes = [1, 128], strides = [1, 1]} : vector<1x384xf32> to vector<1x128xf32>
    %106 = vector.extract_strided_slice %104 {offsets = [0, 0], sizes = [1, 128], strides = [1, 1]} : vector<1x384xf32> to vector<1x128xf32>
    %107 = arith.addf %105, %106 : vector<1x128xf32>
    %108 = arith.negf %107 : vector<1x128xf32>
    %109 = math.exp %108 : vector<1x128xf32>
    %cst_74 = arith.constant 1.000000e+00 : f32
    %110 = vector.broadcast %cst_74 : f32 to vector<1x128xf32>
    %111 = arith.addf %110, %109 : vector<1x128xf32>
    %112 = arith.divf %110, %111 : vector<1x128xf32>
    %113 = vector.extract_strided_slice %99 {offsets = [0, 128], sizes = [1, 128], strides = [1, 1]} : vector<1x384xf32> to vector<1x128xf32>
    %114 = vector.extract_strided_slice %104 {offsets = [0, 128], sizes = [1, 128], strides = [1, 1]} : vector<1x384xf32> to vector<1x128xf32>
    %115 = arith.addf %113, %114 : vector<1x128xf32>
    %116 = arith.negf %115 : vector<1x128xf32>
    %117 = math.exp %116 : vector<1x128xf32>
    %cst_75 = arith.constant 1.000000e+00 : f32
    %118 = vector.broadcast %cst_75 : f32 to vector<1x128xf32>
    %119 = arith.addf %118, %117 : vector<1x128xf32>
    %120 = arith.divf %118, %119 : vector<1x128xf32>
    %121 = vector.extract_strided_slice %99 {offsets = [0, 256], sizes = [1, 128], strides = [1, 1]} : vector<1x384xf32> to vector<1x128xf32>
    %122 = vector.extract_strided_slice %104 {offsets = [0, 256], sizes = [1, 128], strides = [1, 1]} : vector<1x384xf32> to vector<1x128xf32>
    %123 = arith.mulf %112, %122 : vector<1x128xf32>
    %124 = arith.addf %121, %123 : vector<1x128xf32>
    %125 = math.tanh %124 : vector<1x128xf32>
    %cst_76 = arith.constant 1.000000e+00 : f32
    %126 = vector.broadcast %cst_76 : f32 to vector<1x128xf32>
    %127 = arith.subf %126, %120 : vector<1x128xf32>
    %128 = arith.mulf %127, %125 : vector<1x128xf32>
    %129 = arith.mulf %120, %93 : vector<1x128xf32>
    %130 = arith.addf %128, %129 : vector<1x128xf32>
    %c0_i32_77 = arith.constant 0 : i32
    %131 = vector.broadcast %c0_i32_77 : i32 to vector<8x1xi32>
    %132 = arith.cmpi eq, %92, %131 : vector<8x1xi32>
    %cst_78 = arith.constant 0.000000e+00 : f32
    %133 = vector.shape_cast %132 : vector<8x1xi1> to vector<8x1xi1>
    %134 = vector.broadcast %133 : vector<8x1xi1> to vector<8x128xi1>
    %135 = vector.shape_cast %130 : vector<1x128xf32> to vector<1x128xf32>
    %136 = vector.broadcast %135 : vector<1x128xf32> to vector<8x128xf32>
    %137 = vector.broadcast %cst_78 : f32 to vector<8x128xf32>
    %138 = arith.select %134, %136, %137 : vector<8x128xi1>, vector<8x128xf32>
    %139 = arith.addf %98, %138 : vector<8x128xf32>
    %140 = vector.extract_strided_slice %97 {offsets = [1, 0], sizes = [1, 384], strides = [1, 1]} : vector<8x384xf32> to vector<1x384xf32>
    %141 = vector.extract_strided_slice %130 {offsets = [0, 0], sizes = [1, 64], strides = [1, 1]} : vector<1x128xf32> to vector<1x64xf32>
    %c0_79 = arith.constant 0 : index
    %c0_80 = arith.constant 0 : index
    %142 = vector.load %arg11[%c0_79, %c0_80] : memref<64x384xf32, #tpu.memory_space<vmem>>, vector<64x384xf32>
    %cst_81 = arith.constant dense<0.000000e+00> : vector<1x384xf32>
    %143 = tpu.matmul %141, %142, %cst_81 {dimension_numbers = #tpu.dot_dimension_numbers<[1], [0], [0], [1], [0, 0, 1, 1], [], []>} : vector<1x64xf32>, vector<64x384xf32>, vector<1x384xf32> -> vector<1x384xf32>
    %c0_82 = arith.constant 0 : index
    %c0_83 = arith.constant 0 : index
    %144 = vector.load %arg12[%c0_82, %c0_83] : memref<1x384xf32, #tpu.memory_space<vmem>>, vector<1x384xf32>
    %145 = arith.addf %143, %144 : vector<1x384xf32>
    %146 = vector.extract_strided_slice %140 {offsets = [0, 0], sizes = [1, 128], strides = [1, 1]} : vector<1x384xf32> to vector<1x128xf32>
    %147 = vector.extract_strided_slice %145 {offsets = [0, 0], sizes = [1, 128], strides = [1, 1]} : vector<1x384xf32> to vector<1x128xf32>
    %148 = arith.addf %146, %147 : vector<1x128xf32>
    %149 = arith.negf %148 : vector<1x128xf32>
    %150 = math.exp %149 : vector<1x128xf32>
    %cst_84 = arith.constant 1.000000e+00 : f32
    %151 = vector.broadcast %cst_84 : f32 to vector<1x128xf32>
    %152 = arith.addf %151, %150 : vector<1x128xf32>
    %153 = arith.divf %151, %152 : vector<1x128xf32>
    %154 = vector.extract_strided_slice %140 {offsets = [0, 128], sizes = [1, 128], strides = [1, 1]} : vector<1x384xf32> to vector<1x128xf32>
    %155 = vector.extract_strided_slice %145 {offsets = [0, 128], sizes = [1, 128], strides = [1, 1]} : vector<1x384xf32> to vector<1x128xf32>
    %156 = arith.addf %154, %155 : vector<1x128xf32>
    %157 = arith.negf %156 : vector<1x128xf32>
    %158 = math.exp %157 : vector<1x128xf32>
    %cst_85 = arith.constant 1.000000e+00 : f32
    %159 = vector.broadcast %cst_85 : f32 to vector<1x128xf32>
    %160 = arith.addf %159, %158 : vector<1x128xf32>
    %161 = arith.divf %159, %160 : vector<1x128xf32>
    %162 = vector.extract_strided_slice %140 {offsets = [0, 256], sizes = [1, 128], strides = [1, 1]} : vector<1x384xf32> to vector<1x128xf32>
    %163 = vector.extract_strided_slice %145 {offsets = [0, 256], sizes = [1, 128], strides = [1, 1]} : vector<1x384xf32> to vector<1x128xf32>
    %164 = arith.mulf %153, %163 : vector<1x128xf32>
    %165 = arith.addf %162, %164 : vector<1x128xf32>
    %166 = math.tanh %165 : vector<1x128xf32>
    %cst_86 = arith.constant 1.000000e+00 : f32
    %167 = vector.broadcast %cst_86 : f32 to vector<1x128xf32>
    %168 = arith.subf %167, %161 : vector<1x128xf32>
    %169 = arith.mulf %168, %166 : vector<1x128xf32>
    %170 = arith.mulf %161, %130 : vector<1x128xf32>
    %171 = arith.addf %169, %170 : vector<1x128xf32>
    %c1_i32 = arith.constant 1 : i32
    %172 = vector.broadcast %c1_i32 : i32 to vector<8x1xi32>
    %173 = arith.cmpi eq, %92, %172 : vector<8x1xi32>
    %cst_87 = arith.constant 0.000000e+00 : f32
    %174 = vector.shape_cast %173 : vector<8x1xi1> to vector<8x1xi1>
    %175 = vector.broadcast %174 : vector<8x1xi1> to vector<8x128xi1>
    %176 = vector.shape_cast %171 : vector<1x128xf32> to vector<1x128xf32>
    %177 = vector.broadcast %176 : vector<1x128xf32> to vector<8x128xf32>
    %178 = vector.broadcast %cst_87 : f32 to vector<8x128xf32>
    %179 = arith.select %175, %177, %178 : vector<8x128xi1>, vector<8x128xf32>
    %180 = arith.addf %139, %179 : vector<8x128xf32>
    %181 = vector.extract_strided_slice %97 {offsets = [2, 0], sizes = [1, 384], strides = [1, 1]} : vector<8x384xf32> to vector<1x384xf32>
    %182 = vector.extract_strided_slice %171 {offsets = [0, 0], sizes = [1, 64], strides = [1, 1]} : vector<1x128xf32> to vector<1x64xf32>
    %c0_88 = arith.constant 0 : index
    %c0_89 = arith.constant 0 : index
    %183 = vector.load %arg11[%c0_88, %c0_89] : memref<64x384xf32, #tpu.memory_space<vmem>>, vector<64x384xf32>
    %cst_90 = arith.constant dense<0.000000e+00> : vector<1x384xf32>
    %184 = tpu.matmul %182, %183, %cst_90 {dimension_numbers = #tpu.dot_dimension_numbers<[1], [0], [0], [1], [0, 0, 1, 1], [], []>} : vector<1x64xf32>, vector<64x384xf32>, vector<1x384xf32> -> vector<1x384xf32>
    %c0_91 = arith.constant 0 : index
    %c0_92 = arith.constant 0 : index
    %185 = vector.load %arg12[%c0_91, %c0_92] : memref<1x384xf32, #tpu.memory_space<vmem>>, vector<1x384xf32>
    %186 = arith.addf %184, %185 : vector<1x384xf32>
    %187 = vector.extract_strided_slice %181 {offsets = [0, 0], sizes = [1, 128], strides = [1, 1]} : vector<1x384xf32> to vector<1x128xf32>
    %188 = vector.extract_strided_slice %186 {offsets = [0, 0], sizes = [1, 128], strides = [1, 1]} : vector<1x384xf32> to vector<1x128xf32>
    %189 = arith.addf %187, %188 : vector<1x128xf32>
    %190 = arith.negf %189 : vector<1x128xf32>
    %191 = math.exp %190 : vector<1x128xf32>
    %cst_93 = arith.constant 1.000000e+00 : f32
    %192 = vector.broadcast %cst_93 : f32 to vector<1x128xf32>
    %193 = arith.addf %192, %191 : vector<1x128xf32>
    %194 = arith.divf %192, %193 : vector<1x128xf32>
    %195 = vector.extract_strided_slice %181 {offsets = [0, 128], sizes = [1, 128], strides = [1, 1]} : vector<1x384xf32> to vector<1x128xf32>
    %196 = vector.extract_strided_slice %186 {offsets = [0, 128], sizes = [1, 128], strides = [1, 1]} : vector<1x384xf32> to vector<1x128xf32>
    %197 = arith.addf %195, %196 : vector<1x128xf32>
    %198 = arith.negf %197 : vector<1x128xf32>
    %199 = math.exp %198 : vector<1x128xf32>
    %cst_94 = arith.constant 1.000000e+00 : f32
    %200 = vector.broadcast %cst_94 : f32 to vector<1x128xf32>
    %201 = arith.addf %200, %199 : vector<1x128xf32>
    %202 = arith.divf %200, %201 : vector<1x128xf32>
    %203 = vector.extract_strided_slice %181 {offsets = [0, 256], sizes = [1, 128], strides = [1, 1]} : vector<1x384xf32> to vector<1x128xf32>
    %204 = vector.extract_strided_slice %186 {offsets = [0, 256], sizes = [1, 128], strides = [1, 1]} : vector<1x384xf32> to vector<1x128xf32>
    %205 = arith.mulf %194, %204 : vector<1x128xf32>
    %206 = arith.addf %203, %205 : vector<1x128xf32>
    %207 = math.tanh %206 : vector<1x128xf32>
    %cst_95 = arith.constant 1.000000e+00 : f32
    %208 = vector.broadcast %cst_95 : f32 to vector<1x128xf32>
    %209 = arith.subf %208, %202 : vector<1x128xf32>
    %210 = arith.mulf %209, %207 : vector<1x128xf32>
    %211 = arith.mulf %202, %171 : vector<1x128xf32>
    %212 = arith.addf %210, %211 : vector<1x128xf32>
    %c2_i32 = arith.constant 2 : i32
    %213 = vector.broadcast %c2_i32 : i32 to vector<8x1xi32>
    %214 = arith.cmpi eq, %92, %213 : vector<8x1xi32>
    %cst_96 = arith.constant 0.000000e+00 : f32
    %215 = vector.shape_cast %214 : vector<8x1xi1> to vector<8x1xi1>
    %216 = vector.broadcast %215 : vector<8x1xi1> to vector<8x128xi1>
    %217 = vector.shape_cast %212 : vector<1x128xf32> to vector<1x128xf32>
    %218 = vector.broadcast %217 : vector<1x128xf32> to vector<8x128xf32>
    %219 = vector.broadcast %cst_96 : f32 to vector<8x128xf32>
    %220 = arith.select %216, %218, %219 : vector<8x128xi1>, vector<8x128xf32>
    %221 = arith.addf %180, %220 : vector<8x128xf32>
    %222 = vector.extract_strided_slice %97 {offsets = [3, 0], sizes = [1, 384], strides = [1, 1]} : vector<8x384xf32> to vector<1x384xf32>
    %223 = vector.extract_strided_slice %212 {offsets = [0, 0], sizes = [1, 64], strides = [1, 1]} : vector<1x128xf32> to vector<1x64xf32>
    %c0_97 = arith.constant 0 : index
    %c0_98 = arith.constant 0 : index
    %224 = vector.load %arg11[%c0_97, %c0_98] : memref<64x384xf32, #tpu.memory_space<vmem>>, vector<64x384xf32>
    %cst_99 = arith.constant dense<0.000000e+00> : vector<1x384xf32>
    %225 = tpu.matmul %223, %224, %cst_99 {dimension_numbers = #tpu.dot_dimension_numbers<[1], [0], [0], [1], [0, 0, 1, 1], [], []>} : vector<1x64xf32>, vector<64x384xf32>, vector<1x384xf32> -> vector<1x384xf32>
    %c0_100 = arith.constant 0 : index
    %c0_101 = arith.constant 0 : index
    %226 = vector.load %arg12[%c0_100, %c0_101] : memref<1x384xf32, #tpu.memory_space<vmem>>, vector<1x384xf32>
    %227 = arith.addf %225, %226 : vector<1x384xf32>
    %228 = vector.extract_strided_slice %222 {offsets = [0, 0], sizes = [1, 128], strides = [1, 1]} : vector<1x384xf32> to vector<1x128xf32>
    %229 = vector.extract_strided_slice %227 {offsets = [0, 0], sizes = [1, 128], strides = [1, 1]} : vector<1x384xf32> to vector<1x128xf32>
    %230 = arith.addf %228, %229 : vector<1x128xf32>
    %231 = arith.negf %230 : vector<1x128xf32>
    %232 = math.exp %231 : vector<1x128xf32>
    %cst_102 = arith.constant 1.000000e+00 : f32
    %233 = vector.broadcast %cst_102 : f32 to vector<1x128xf32>
    %234 = arith.addf %233, %232 : vector<1x128xf32>
    %235 = arith.divf %233, %234 : vector<1x128xf32>
    %236 = vector.extract_strided_slice %222 {offsets = [0, 128], sizes = [1, 128], strides = [1, 1]} : vector<1x384xf32> to vector<1x128xf32>
    %237 = vector.extract_strided_slice %227 {offsets = [0, 128], sizes = [1, 128], strides = [1, 1]} : vector<1x384xf32> to vector<1x128xf32>
    %238 = arith.addf %236, %237 : vector<1x128xf32>
    %239 = arith.negf %238 : vector<1x128xf32>
    %240 = math.exp %239 : vector<1x128xf32>
    %cst_103 = arith.constant 1.000000e+00 : f32
    %241 = vector.broadcast %cst_103 : f32 to vector<1x128xf32>
    %242 = arith.addf %241, %240 : vector<1x128xf32>
    %243 = arith.divf %241, %242 : vector<1x128xf32>
    %244 = vector.extract_strided_slice %222 {offsets = [0, 256], sizes = [1, 128], strides = [1, 1]} : vector<1x384xf32> to vector<1x128xf32>
    %245 = vector.extract_strided_slice %227 {offsets = [0, 256], sizes = [1, 128], strides = [1, 1]} : vector<1x384xf32> to vector<1x128xf32>
    %246 = arith.mulf %235, %245 : vector<1x128xf32>
    %247 = arith.addf %244, %246 : vector<1x128xf32>
    %248 = math.tanh %247 : vector<1x128xf32>
    %cst_104 = arith.constant 1.000000e+00 : f32
    %249 = vector.broadcast %cst_104 : f32 to vector<1x128xf32>
    %250 = arith.subf %249, %243 : vector<1x128xf32>
    %251 = arith.mulf %250, %248 : vector<1x128xf32>
    %252 = arith.mulf %243, %212 : vector<1x128xf32>
    %253 = arith.addf %251, %252 : vector<1x128xf32>
    %c3_i32 = arith.constant 3 : i32
    %254 = vector.broadcast %c3_i32 : i32 to vector<8x1xi32>
    %255 = arith.cmpi eq, %92, %254 : vector<8x1xi32>
    %cst_105 = arith.constant 0.000000e+00 : f32
    %256 = vector.shape_cast %255 : vector<8x1xi1> to vector<8x1xi1>
    %257 = vector.broadcast %256 : vector<8x1xi1> to vector<8x128xi1>
    %258 = vector.shape_cast %253 : vector<1x128xf32> to vector<1x128xf32>
    %259 = vector.broadcast %258 : vector<1x128xf32> to vector<8x128xf32>
    %260 = vector.broadcast %cst_105 : f32 to vector<8x128xf32>
    %261 = arith.select %257, %259, %260 : vector<8x128xi1>, vector<8x128xf32>
    %262 = arith.addf %221, %261 : vector<8x128xf32>
    %263 = vector.extract_strided_slice %97 {offsets = [4, 0], sizes = [1, 384], strides = [1, 1]} : vector<8x384xf32> to vector<1x384xf32>
    %264 = vector.extract_strided_slice %253 {offsets = [0, 0], sizes = [1, 64], strides = [1, 1]} : vector<1x128xf32> to vector<1x64xf32>
    %c0_106 = arith.constant 0 : index
    %c0_107 = arith.constant 0 : index
    %265 = vector.load %arg11[%c0_106, %c0_107] : memref<64x384xf32, #tpu.memory_space<vmem>>, vector<64x384xf32>
    %cst_108 = arith.constant dense<0.000000e+00> : vector<1x384xf32>
    %266 = tpu.matmul %264, %265, %cst_108 {dimension_numbers = #tpu.dot_dimension_numbers<[1], [0], [0], [1], [0, 0, 1, 1], [], []>} : vector<1x64xf32>, vector<64x384xf32>, vector<1x384xf32> -> vector<1x384xf32>
    %c0_109 = arith.constant 0 : index
    %c0_110 = arith.constant 0 : index
    %267 = vector.load %arg12[%c0_109, %c0_110] : memref<1x384xf32, #tpu.memory_space<vmem>>, vector<1x384xf32>
    %268 = arith.addf %266, %267 : vector<1x384xf32>
    %269 = vector.extract_strided_slice %263 {offsets = [0, 0], sizes = [1, 128], strides = [1, 1]} : vector<1x384xf32> to vector<1x128xf32>
    %270 = vector.extract_strided_slice %268 {offsets = [0, 0], sizes = [1, 128], strides = [1, 1]} : vector<1x384xf32> to vector<1x128xf32>
    %271 = arith.addf %269, %270 : vector<1x128xf32>
    %272 = arith.negf %271 : vector<1x128xf32>
    %273 = math.exp %272 : vector<1x128xf32>
    %cst_111 = arith.constant 1.000000e+00 : f32
    %274 = vector.broadcast %cst_111 : f32 to vector<1x128xf32>
    %275 = arith.addf %274, %273 : vector<1x128xf32>
    %276 = arith.divf %274, %275 : vector<1x128xf32>
    %277 = vector.extract_strided_slice %263 {offsets = [0, 128], sizes = [1, 128], strides = [1, 1]} : vector<1x384xf32> to vector<1x128xf32>
    %278 = vector.extract_strided_slice %268 {offsets = [0, 128], sizes = [1, 128], strides = [1, 1]} : vector<1x384xf32> to vector<1x128xf32>
    %279 = arith.addf %277, %278 : vector<1x128xf32>
    %280 = arith.negf %279 : vector<1x128xf32>
    %281 = math.exp %280 : vector<1x128xf32>
    %cst_112 = arith.constant 1.000000e+00 : f32
    %282 = vector.broadcast %cst_112 : f32 to vector<1x128xf32>
    %283 = arith.addf %282, %281 : vector<1x128xf32>
    %284 = arith.divf %282, %283 : vector<1x128xf32>
    %285 = vector.extract_strided_slice %263 {offsets = [0, 256], sizes = [1, 128], strides = [1, 1]} : vector<1x384xf32> to vector<1x128xf32>
    %286 = vector.extract_strided_slice %268 {offsets = [0, 256], sizes = [1, 128], strides = [1, 1]} : vector<1x384xf32> to vector<1x128xf32>
    %287 = arith.mulf %276, %286 : vector<1x128xf32>
    %288 = arith.addf %285, %287 : vector<1x128xf32>
    %289 = math.tanh %288 : vector<1x128xf32>
    %cst_113 = arith.constant 1.000000e+00 : f32
    %290 = vector.broadcast %cst_113 : f32 to vector<1x128xf32>
    %291 = arith.subf %290, %284 : vector<1x128xf32>
    %292 = arith.mulf %291, %289 : vector<1x128xf32>
    %293 = arith.mulf %284, %253 : vector<1x128xf32>
    %294 = arith.addf %292, %293 : vector<1x128xf32>
    %c4_i32 = arith.constant 4 : i32
    %295 = vector.broadcast %c4_i32 : i32 to vector<8x1xi32>
    %296 = arith.cmpi eq, %92, %295 : vector<8x1xi32>
    %cst_114 = arith.constant 0.000000e+00 : f32
    %297 = vector.shape_cast %296 : vector<8x1xi1> to vector<8x1xi1>
    %298 = vector.broadcast %297 : vector<8x1xi1> to vector<8x128xi1>
    %299 = vector.shape_cast %294 : vector<1x128xf32> to vector<1x128xf32>
    %300 = vector.broadcast %299 : vector<1x128xf32> to vector<8x128xf32>
    %301 = vector.broadcast %cst_114 : f32 to vector<8x128xf32>
    %302 = arith.select %298, %300, %301 : vector<8x128xi1>, vector<8x128xf32>
    %303 = arith.addf %262, %302 : vector<8x128xf32>
    %304 = vector.extract_strided_slice %97 {offsets = [5, 0], sizes = [1, 384], strides = [1, 1]} : vector<8x384xf32> to vector<1x384xf32>
    %305 = vector.extract_strided_slice %294 {offsets = [0, 0], sizes = [1, 64], strides = [1, 1]} : vector<1x128xf32> to vector<1x64xf32>
    %c0_115 = arith.constant 0 : index
    %c0_116 = arith.constant 0 : index
    %306 = vector.load %arg11[%c0_115, %c0_116] : memref<64x384xf32, #tpu.memory_space<vmem>>, vector<64x384xf32>
    %cst_117 = arith.constant dense<0.000000e+00> : vector<1x384xf32>
    %307 = tpu.matmul %305, %306, %cst_117 {dimension_numbers = #tpu.dot_dimension_numbers<[1], [0], [0], [1], [0, 0, 1, 1], [], []>} : vector<1x64xf32>, vector<64x384xf32>, vector<1x384xf32> -> vector<1x384xf32>
    %c0_118 = arith.constant 0 : index
    %c0_119 = arith.constant 0 : index
    %308 = vector.load %arg12[%c0_118, %c0_119] : memref<1x384xf32, #tpu.memory_space<vmem>>, vector<1x384xf32>
    %309 = arith.addf %307, %308 : vector<1x384xf32>
    %310 = vector.extract_strided_slice %304 {offsets = [0, 0], sizes = [1, 128], strides = [1, 1]} : vector<1x384xf32> to vector<1x128xf32>
    %311 = vector.extract_strided_slice %309 {offsets = [0, 0], sizes = [1, 128], strides = [1, 1]} : vector<1x384xf32> to vector<1x128xf32>
    %312 = arith.addf %310, %311 : vector<1x128xf32>
    %313 = arith.negf %312 : vector<1x128xf32>
    %314 = math.exp %313 : vector<1x128xf32>
    %cst_120 = arith.constant 1.000000e+00 : f32
    %315 = vector.broadcast %cst_120 : f32 to vector<1x128xf32>
    %316 = arith.addf %315, %314 : vector<1x128xf32>
    %317 = arith.divf %315, %316 : vector<1x128xf32>
    %318 = vector.extract_strided_slice %304 {offsets = [0, 128], sizes = [1, 128], strides = [1, 1]} : vector<1x384xf32> to vector<1x128xf32>
    %319 = vector.extract_strided_slice %309 {offsets = [0, 128], sizes = [1, 128], strides = [1, 1]} : vector<1x384xf32> to vector<1x128xf32>
    %320 = arith.addf %318, %319 : vector<1x128xf32>
    %321 = arith.negf %320 : vector<1x128xf32>
    %322 = math.exp %321 : vector<1x128xf32>
    %cst_121 = arith.constant 1.000000e+00 : f32
    %323 = vector.broadcast %cst_121 : f32 to vector<1x128xf32>
    %324 = arith.addf %323, %322 : vector<1x128xf32>
    %325 = arith.divf %323, %324 : vector<1x128xf32>
    %326 = vector.extract_strided_slice %304 {offsets = [0, 256], sizes = [1, 128], strides = [1, 1]} : vector<1x384xf32> to vector<1x128xf32>
    %327 = vector.extract_strided_slice %309 {offsets = [0, 256], sizes = [1, 128], strides = [1, 1]} : vector<1x384xf32> to vector<1x128xf32>
    %328 = arith.mulf %317, %327 : vector<1x128xf32>
    %329 = arith.addf %326, %328 : vector<1x128xf32>
    %330 = math.tanh %329 : vector<1x128xf32>
    %cst_122 = arith.constant 1.000000e+00 : f32
    %331 = vector.broadcast %cst_122 : f32 to vector<1x128xf32>
    %332 = arith.subf %331, %325 : vector<1x128xf32>
    %333 = arith.mulf %332, %330 : vector<1x128xf32>
    %334 = arith.mulf %325, %294 : vector<1x128xf32>
    %335 = arith.addf %333, %334 : vector<1x128xf32>
    %c5_i32 = arith.constant 5 : i32
    %336 = vector.broadcast %c5_i32 : i32 to vector<8x1xi32>
    %337 = arith.cmpi eq, %92, %336 : vector<8x1xi32>
    %cst_123 = arith.constant 0.000000e+00 : f32
    %338 = vector.shape_cast %337 : vector<8x1xi1> to vector<8x1xi1>
    %339 = vector.broadcast %338 : vector<8x1xi1> to vector<8x128xi1>
    %340 = vector.shape_cast %335 : vector<1x128xf32> to vector<1x128xf32>
    %341 = vector.broadcast %340 : vector<1x128xf32> to vector<8x128xf32>
    %342 = vector.broadcast %cst_123 : f32 to vector<8x128xf32>
    %343 = arith.select %339, %341, %342 : vector<8x128xi1>, vector<8x128xf32>
    %344 = arith.addf %303, %343 : vector<8x128xf32>
    %345 = vector.extract_strided_slice %97 {offsets = [6, 0], sizes = [1, 384], strides = [1, 1]} : vector<8x384xf32> to vector<1x384xf32>
    %346 = vector.extract_strided_slice %335 {offsets = [0, 0], sizes = [1, 64], strides = [1, 1]} : vector<1x128xf32> to vector<1x64xf32>
    %c0_124 = arith.constant 0 : index
    %c0_125 = arith.constant 0 : index
    %347 = vector.load %arg11[%c0_124, %c0_125] : memref<64x384xf32, #tpu.memory_space<vmem>>, vector<64x384xf32>
    %cst_126 = arith.constant dense<0.000000e+00> : vector<1x384xf32>
    %348 = tpu.matmul %346, %347, %cst_126 {dimension_numbers = #tpu.dot_dimension_numbers<[1], [0], [0], [1], [0, 0, 1, 1], [], []>} : vector<1x64xf32>, vector<64x384xf32>, vector<1x384xf32> -> vector<1x384xf32>
    %c0_127 = arith.constant 0 : index
    %c0_128 = arith.constant 0 : index
    %349 = vector.load %arg12[%c0_127, %c0_128] : memref<1x384xf32, #tpu.memory_space<vmem>>, vector<1x384xf32>
    %350 = arith.addf %348, %349 : vector<1x384xf32>
    %351 = vector.extract_strided_slice %345 {offsets = [0, 0], sizes = [1, 128], strides = [1, 1]} : vector<1x384xf32> to vector<1x128xf32>
    %352 = vector.extract_strided_slice %350 {offsets = [0, 0], sizes = [1, 128], strides = [1, 1]} : vector<1x384xf32> to vector<1x128xf32>
    %353 = arith.addf %351, %352 : vector<1x128xf32>
    %354 = arith.negf %353 : vector<1x128xf32>
    %355 = math.exp %354 : vector<1x128xf32>
    %cst_129 = arith.constant 1.000000e+00 : f32
    %356 = vector.broadcast %cst_129 : f32 to vector<1x128xf32>
    %357 = arith.addf %356, %355 : vector<1x128xf32>
    %358 = arith.divf %356, %357 : vector<1x128xf32>
    %359 = vector.extract_strided_slice %345 {offsets = [0, 128], sizes = [1, 128], strides = [1, 1]} : vector<1x384xf32> to vector<1x128xf32>
    %360 = vector.extract_strided_slice %350 {offsets = [0, 128], sizes = [1, 128], strides = [1, 1]} : vector<1x384xf32> to vector<1x128xf32>
    %361 = arith.addf %359, %360 : vector<1x128xf32>
    %362 = arith.negf %361 : vector<1x128xf32>
    %363 = math.exp %362 : vector<1x128xf32>
    %cst_130 = arith.constant 1.000000e+00 : f32
    %364 = vector.broadcast %cst_130 : f32 to vector<1x128xf32>
    %365 = arith.addf %364, %363 : vector<1x128xf32>
    %366 = arith.divf %364, %365 : vector<1x128xf32>
    %367 = vector.extract_strided_slice %345 {offsets = [0, 256], sizes = [1, 128], strides = [1, 1]} : vector<1x384xf32> to vector<1x128xf32>
    %368 = vector.extract_strided_slice %350 {offsets = [0, 256], sizes = [1, 128], strides = [1, 1]} : vector<1x384xf32> to vector<1x128xf32>
    %369 = arith.mulf %358, %368 : vector<1x128xf32>
    %370 = arith.addf %367, %369 : vector<1x128xf32>
    %371 = math.tanh %370 : vector<1x128xf32>
    %cst_131 = arith.constant 1.000000e+00 : f32
    %372 = vector.broadcast %cst_131 : f32 to vector<1x128xf32>
    %373 = arith.subf %372, %366 : vector<1x128xf32>
    %374 = arith.mulf %373, %371 : vector<1x128xf32>
    %375 = arith.mulf %366, %335 : vector<1x128xf32>
    %376 = arith.addf %374, %375 : vector<1x128xf32>
    %c6_i32 = arith.constant 6 : i32
    %377 = vector.broadcast %c6_i32 : i32 to vector<8x1xi32>
    %378 = arith.cmpi eq, %92, %377 : vector<8x1xi32>
    %cst_132 = arith.constant 0.000000e+00 : f32
    %379 = vector.shape_cast %378 : vector<8x1xi1> to vector<8x1xi1>
    %380 = vector.broadcast %379 : vector<8x1xi1> to vector<8x128xi1>
    %381 = vector.shape_cast %376 : vector<1x128xf32> to vector<1x128xf32>
    %382 = vector.broadcast %381 : vector<1x128xf32> to vector<8x128xf32>
    %383 = vector.broadcast %cst_132 : f32 to vector<8x128xf32>
    %384 = arith.select %380, %382, %383 : vector<8x128xi1>, vector<8x128xf32>
    %385 = arith.addf %344, %384 : vector<8x128xf32>
    %386 = vector.extract_strided_slice %97 {offsets = [7, 0], sizes = [1, 384], strides = [1, 1]} : vector<8x384xf32> to vector<1x384xf32>
    %387 = vector.extract_strided_slice %376 {offsets = [0, 0], sizes = [1, 64], strides = [1, 1]} : vector<1x128xf32> to vector<1x64xf32>
    %c0_133 = arith.constant 0 : index
    %c0_134 = arith.constant 0 : index
    %388 = vector.load %arg11[%c0_133, %c0_134] : memref<64x384xf32, #tpu.memory_space<vmem>>, vector<64x384xf32>
    %cst_135 = arith.constant dense<0.000000e+00> : vector<1x384xf32>
    %389 = tpu.matmul %387, %388, %cst_135 {dimension_numbers = #tpu.dot_dimension_numbers<[1], [0], [0], [1], [0, 0, 1, 1], [], []>} : vector<1x64xf32>, vector<64x384xf32>, vector<1x384xf32> -> vector<1x384xf32>
    %c0_136 = arith.constant 0 : index
    %c0_137 = arith.constant 0 : index
    %390 = vector.load %arg12[%c0_136, %c0_137] : memref<1x384xf32, #tpu.memory_space<vmem>>, vector<1x384xf32>
    %391 = arith.addf %389, %390 : vector<1x384xf32>
    %392 = vector.extract_strided_slice %386 {offsets = [0, 0], sizes = [1, 128], strides = [1, 1]} : vector<1x384xf32> to vector<1x128xf32>
    %393 = vector.extract_strided_slice %391 {offsets = [0, 0], sizes = [1, 128], strides = [1, 1]} : vector<1x384xf32> to vector<1x128xf32>
    %394 = arith.addf %392, %393 : vector<1x128xf32>
    %395 = arith.negf %394 : vector<1x128xf32>
    %396 = math.exp %395 : vector<1x128xf32>
    %cst_138 = arith.constant 1.000000e+00 : f32
    %397 = vector.broadcast %cst_138 : f32 to vector<1x128xf32>
    %398 = arith.addf %397, %396 : vector<1x128xf32>
    %399 = arith.divf %397, %398 : vector<1x128xf32>
    %400 = vector.extract_strided_slice %386 {offsets = [0, 128], sizes = [1, 128], strides = [1, 1]} : vector<1x384xf32> to vector<1x128xf32>
    %401 = vector.extract_strided_slice %391 {offsets = [0, 128], sizes = [1, 128], strides = [1, 1]} : vector<1x384xf32> to vector<1x128xf32>
    %402 = arith.addf %400, %401 : vector<1x128xf32>
    %403 = arith.negf %402 : vector<1x128xf32>
    %404 = math.exp %403 : vector<1x128xf32>
    %cst_139 = arith.constant 1.000000e+00 : f32
    %405 = vector.broadcast %cst_139 : f32 to vector<1x128xf32>
    %406 = arith.addf %405, %404 : vector<1x128xf32>
    %407 = arith.divf %405, %406 : vector<1x128xf32>
    %408 = vector.extract_strided_slice %386 {offsets = [0, 256], sizes = [1, 128], strides = [1, 1]} : vector<1x384xf32> to vector<1x128xf32>
    %409 = vector.extract_strided_slice %391 {offsets = [0, 256], sizes = [1, 128], strides = [1, 1]} : vector<1x384xf32> to vector<1x128xf32>
    %410 = arith.mulf %399, %409 : vector<1x128xf32>
    %411 = arith.addf %408, %410 : vector<1x128xf32>
    %412 = math.tanh %411 : vector<1x128xf32>
    %cst_140 = arith.constant 1.000000e+00 : f32
    %413 = vector.broadcast %cst_140 : f32 to vector<1x128xf32>
    %414 = arith.subf %413, %407 : vector<1x128xf32>
    %415 = arith.mulf %414, %412 : vector<1x128xf32>
    %416 = arith.mulf %407, %376 : vector<1x128xf32>
    %417 = arith.addf %415, %416 : vector<1x128xf32>
    %c7_i32 = arith.constant 7 : i32
    %418 = vector.broadcast %c7_i32 : i32 to vector<8x1xi32>
    %419 = arith.cmpi eq, %92, %418 : vector<8x1xi32>
    %cst_141 = arith.constant 0.000000e+00 : f32
    %420 = vector.shape_cast %419 : vector<8x1xi1> to vector<8x1xi1>
    %421 = vector.broadcast %420 : vector<8x1xi1> to vector<8x128xi1>
    %422 = vector.shape_cast %417 : vector<1x128xf32> to vector<1x128xf32>
    %423 = vector.broadcast %422 : vector<1x128xf32> to vector<8x128xf32>
    %424 = vector.broadcast %cst_141 : f32 to vector<8x128xf32>
    %425 = arith.select %421, %423, %424 : vector<8x128xi1>, vector<8x128xf32>
    %426 = arith.addf %385, %425 : vector<8x128xf32>
    %427 = arith.index_cast %95 : i32 to index
    %c0_142 = arith.constant 0 : index
    %428 = vector.load %arg17[%427, %c0_142] : memref<8x128xf32, #tpu.memory_space<vmem>>, vector<8x128xf32>
    tpu.vector_store %arg17[%427, %c0_142], %426 {strides = array<i32>} : memref<8x128xf32, #tpu.memory_space<vmem>>, vector<8x128xf32>,
    %c1_i32_143 = arith.constant 1 : i32
    %c0_144 = arith.constant 0 : index
    %c0_145 = arith.constant 0 : index
    %429 = vector.load %arg17[%c0_144, %c0_145] : memref<8x128xf32, #tpu.memory_space<vmem>>, vector<8x128xf32>
    %430 = arith.truncf %429 : vector<8x128xf32> to vector<8x128xbf16>
    %c0_146 = arith.constant 0 : index
    %c0_147 = arith.constant 0 : index
    %431 = vector.load %arg13[%c0_146, %c0_147] : memref<128x128xbf16, #tpu.memory_space<vmem>>, vector<128x128xbf16>
    %cst_148 = arith.constant dense<0.000000e+00> : vector<8x128xf32>
    %432 = tpu.matmul %430, %431, %cst_148 {dimension_numbers = #tpu.dot_dimension_numbers<[1], [0], [0], [1], [0, 0, 1, 1], [], []>} : vector<8x128xbf16>, vector<128x128xbf16>, vector<8x128xf32> -> vector<8x128xf32>
    %c0_149 = arith.constant 0 : index
    %c0_150 = arith.constant 0 : index
    %433 = vector.load %arg14[%c0_149, %c0_150] : memref<1x128xf32, #tpu.memory_space<vmem>>, vector<1x128xf32>
    %434 = vector.broadcast %433 : vector<1x128xf32> to vector<8x128xf32>
    %435 = arith.addf %432, %434 : vector<8x128xf32>
    %436 = tpu.iota {dimensions = array<i32: 1>} : vector<8x128xi32>
    %c7_i32_151 = arith.constant 7 : i32
    %437 = vector.broadcast %c7_i32_151 : i32 to vector<8x128xi32>
    %438 = arith.cmpi slt, %436, %437 : vector<8x128xi32>
    %cst_152 = arith.constant -1.000000e+30 : f32
    %439 = vector.broadcast %cst_152 : f32 to vector<8x128xf32>
    %440 = arith.select %438, %435, %439 : vector<8x128xi1>, vector<8x128xf32>
    %cst_153 = arith.constant dense<0xFF800000> : vector<8xf32>
    %441 = vector.multi_reduction <maximumf>, %440, %cst_153 [1] : vector<8x128xf32> to vector<8xf32>
    %442 = vector.shape_cast %441 : vector<8xf32> to vector<8x1xf32>
    %443 = vector.broadcast %442 : vector<8x1xf32> to vector<8x128xf32>
    %444 = arith.subf %440, %443 : vector<8x128xf32>
    %445 = math.exp %444 : vector<8x128xf32>
    %cst_154 = arith.constant 0.000000e+00 : f32
    %446 = vector.broadcast %cst_154 : f32 to vector<8x128xf32>
    %447 = arith.select %438, %445, %446 : vector<8x128xi1>, vector<8x128xf32>
    %cst_155 = arith.constant dense<0.000000e+00> : vector<8xf32>
    %448 = vector.multi_reduction <add>, %447, %cst_155 [1] : vector<8x128xf32> to vector<8xf32>
    %449 = vector.shape_cast %448 : vector<8xf32> to vector<8x1xf32>
    %450 = vector.broadcast %449 : vector<8x1xf32> to vector<8x128xf32>
    %451 = arith.divf %447, %450 : vector<8x128xf32>
    %452 = arith.select %438, %451, %435 : vector<8x128xi1>, vector<8x128xf32>
    %c0_156 = arith.constant 0 : index
    %c0_157 = arith.constant 0 : index
    %453 = vector.load %arg15[%c0_156, %c0_157] : memref<8x128xf32, #tpu.memory_space<vmem>>, vector<8x128xf32>
    tpu.vector_store %arg15[%c0_156, %c0_157], %452 {strides = array<i32>} : memref<8x128xf32, #tpu.memory_space<vmem>>, vector<8x128xf32>,
    return
  }
}

</mosaic_0001>

<llo_original>
// kernel: rnn_agent_forward.1
$region0: #{rnn_agent_forward.1}
  #allocation0 [shape = 'u32[]', space=smem, size = 0x4, offset = 0x4, fixed_abs, tag = 'smem constant byte address 0x4 - core index']
  #allocation1 [shape = 'u32[144,128]{1,0:T(1,128)}', space=vmem, size = 0x12000, scoped, tag = 'internal scratch']
  #allocation2 [shape = 'f32[8,384]{1,0:T(8,128)}', space=vmem, size = 0x3000, scoped, tag = 'scratch operand']
  #allocation3 [shape = 'f32[8,128]{1,0:T(8,128)}', space=vmem, size = 0x1000, scoped, tag = 'scratch operand']
  %s0 = inlined_call_operand.vmem [shape: bf16[56,189], index: 0, kind: input, shape index: {}]
  %s1 = inlined_call_operand.vmem [shape: bf16[8,8], index: 1, kind: input, shape index: {}]
  %s2 = inlined_call_operand.vmem [shape: bf16[189,224], index: 2, kind: input, shape index: {}]
  %s3 = inlined_call_operand.vmem [shape: f32[1,224], index: 3, kind: input, shape index: {}]
  %s4 = inlined_call_operand.vmem [shape: bf16[672,192], index: 4, kind: input, shape index: {}]
  %s5 = inlined_call_operand.vmem [shape: f32[1,192], index: 5, kind: input, shape index: {}]
  %s6 = inlined_call_operand.vmem [shape: bf16[576,64], index: 6, kind: input, shape index: {}]
  %s7 = inlined_call_operand.vmem [shape: f32[1,64], index: 7, kind: input, shape index: {}]
  %s8 = inlined_call_operand.vmem [shape: bf16[64,384], index: 8, kind: input, shape index: {}]
  %s9 = inlined_call_operand.vmem [shape: bf16[8,384], index: 9, kind: input, shape index: {}]
  %s10 = inlined_call_operand.vmem [shape: f32[1,384], index: 10, kind: input, shape index: {}]
  %s11 = inlined_call_operand.vmem [shape: f32[64,384], index: 11, kind: input, shape index: {}]
  %s12 = inlined_call_operand.vmem [shape: f32[1,384], index: 12, kind: input, shape index: {}]
  %s13 = inlined_call_operand.vmem [shape: bf16[128,128], index: 13, kind: input, shape index: {}]
  %s14 = inlined_call_operand.vmem [shape: f32[1,128], index: 14, kind: input, shape index: {}]
  %s15 = inlined_call_operand.vmem [shape: f32[8,128], index: 15, kind: output, shape index: {}]
  %s16 = sld [smem:[#allocation0]]
  $region70: #{rnn_agent_forward.1} parent=0
    _
  %s18 = ssub.s32 1, %s16
  %s19 = scalar_select 0, %s18, %s16
  // Predicated region
  $region2: #{rnn_agent_forward.1} parent=0 // pred_check
    _
  $region3: #{rnn_agent_forward.1} parent=0 // pred_check_branch
    %21 = sbr.rel (0) target = $region5
  $region4: #{rnn_agent_forward.1} parent=0 // pred_region
    _
  $region5: #{rnn_agent_forward.1} parent=0 // pred_fallthru
    _
  // Predicated region
  $region6: #{rnn_agent_forward.1} parent=0 // pred_check
    _
  $region7: #{rnn_agent_forward.1} parent=0 // pred_check_branch
    %23 = sbr.rel (0) target = $region9
  $region8: #{rnn_agent_forward.1} parent=0 // pred_region
    _
  $region9: #{rnn_agent_forward.1} parent=0 // pred_fallthru
    _
  // Predicated region
  $region10: #{rnn_agent_forward.1} parent=0 // pred_check
    _
  $region11: #{rnn_agent_forward.1} parent=0 // pred_check_branch
    %25 = sbr.rel (0) target = $region13
  $region12: #{rnn_agent_forward.1} parent=0 // pred_region
    _
  $region13: #{rnn_agent_forward.1} parent=0 // pred_fallthru
    _
  // Predicated region
  $region14: #{rnn_agent_forward.1} parent=0 // pred_check
    _
  $region15: #{rnn_agent_forward.1} parent=0 // pred_check_branch
    %27 = sbr.rel (0) target = $region17
  $region16: #{rnn_agent_forward.1} parent=0 // pred_region
    _
  $region17: #{rnn_agent_forward.1} parent=0 // pred_fallthru
    _
  // Predicated region
  $region18: #{rnn_agent_forward.1} parent=0 // pred_check
    _
  $region19: #{rnn_agent_forward.1} parent=0 // pred_check_branch
    %29 = sbr.rel (0) target = $region21
  $region20: #{rnn_agent_forward.1} parent=0 // pred_region
    _
  $region21: #{rnn_agent_forward.1} parent=0 // pred_fallthru
    _
  // Predicated region
  $region22: #{rnn_agent_forward.1} parent=0 // pred_check
    _
  $region23: #{rnn_agent_forward.1} parent=0 // pred_check_branch
    %31 = sbr.rel (0) target = $region25
  $region24: #{rnn_agent_forward.1} parent=0 // pred_region
    _
  $region25: #{rnn_agent_forward.1} parent=0 // pred_fallthru
    _
  // Predicated region
  $region26: #{rnn_agent_forward.1} parent=0 // pred_check
    _
  $region27: #{rnn_agent_forward.1} parent=0 // pred_check_branch
    %33 = sbr.rel (0) target = $region29
  $region28: #{rnn_agent_forward.1} parent=0 // pred_region
    _
  $region29: #{rnn_agent_forward.1} parent=0 // pred_fallthru
    _
  // Predicated region
  $region30: #{rnn_agent_forward.1} parent=0 // pred_check
    _
  $region31: #{rnn_agent_forward.1} parent=0 // pred_check_branch
    %35 = sbr.rel (0) target = $region33
  $region32: #{rnn_agent_forward.1} parent=0 // pred_region
    _
  $region33: #{rnn_agent_forward.1} parent=0 // pred_fallthru
    _
  // Predicated region
  $region34: #{rnn_agent_forward.1} parent=0 // pred_check
    _
  $region35: #{rnn_agent_forward.1} parent=0 // pred_check_branch
    %37 = sbr.rel (0) target = $region37
  $region36: #{rnn_agent_forward.1} parent=0 // pred_region
    _
  $region37: #{rnn_agent_forward.1} parent=0 // pred_fallthru
    _
  // Predicated region
  $region38: #{rnn_agent_forward.1} parent=0 // pred_check
    _
  $region39: #{rnn_agent_forward.1} parent=0 // pred_check_branch
    %39 = sbr.rel (0) target = $region41
  $region40: #{rnn_agent_forward.1} parent=0 // pred_region
    _
  $region41: #{rnn_agent_forward.1} parent=0 // pred_fallthru
    _
  // Predicated region
  $region42: #{rnn_agent_forward.1} parent=0 // pred_check
    _
  $region43: #{rnn_agent_forward.1} parent=0 // pred_check_branch
    %41 = sbr.rel (0) target = $region45
  $region44: #{rnn_agent_forward.1} parent=0 // pred_region
    _
  $region45: #{rnn_agent_forward.1} parent=0 // pred_fallthru
    _
  // Predicated region
  $region46: #{rnn_agent_forward.1} parent=0 // pred_check
    _
  $region47: #{rnn_agent_forward.1} parent=0 // pred_check_branch
    %43 = sbr.rel (0) target = $region49
  $region48: #{rnn_agent_forward.1} parent=0 // pred_region
    _
  $region49: #{rnn_agent_forward.1} parent=0 // pred_fallthru
    _
  // Predicated region
  $region50: #{rnn_agent_forward.1} parent=0 // pred_check
    _
  $region51: #{rnn_agent_forward.1} parent=0 // pred_check_branch
    %45 = sbr.rel (0) target = $region53
  $region52: #{rnn_agent_forward.1} parent=0 // pred_region
    _
  $region53: #{rnn_agent_forward.1} parent=0 // pred_fallthru
    _
  // Predicated region
  $region54: #{rnn_agent_forward.1} parent=0 // pred_check
    _
  $region55: #{rnn_agent_forward.1} parent=0 // pred_check_branch
    %47 = sbr.rel (0) target = $region57
  $region56: #{rnn_agent_forward.1} parent=0 // pred_region
    _
  $region57: #{rnn_agent_forward.1} parent=0 // pred_fallthru
    _
  // Predicated region
  $region58: #{rnn_agent_forward.1} parent=0 // pred_check
    _
  $region59: #{rnn_agent_forward.1} parent=0 // pred_check_branch
    %49 = sbr.rel (0) target = $region61
  $region60: #{rnn_agent_forward.1} parent=0 // pred_region
    _
  $region61: #{rnn_agent_forward.1} parent=0 // pred_fallthru
    _
  %v51 = vld [vmem:[%s0] sm:$0xff]
  %v52 = vld [vmem:[%s0 + $0x8] sm:$0xff]
  %v53 = vld [vmem:[%s0 + $0x10] sm:$0xff]
  %v54 = vld [vmem:[%s0 + $0x18] sm:$0xff]
  %v55 = vld [vmem:[%s0 + $0x20] sm:$0xff]
  %v56 = vld [vmem:[%s0 + $0x28] sm:$0xff]
  %v57 = vld [vmem:[%s0 + $0x30] sm:$0xff]
  %v58 = vld [vmem:[%s2] sm:$0xff]
  %v59 = vld [vmem:[%s2 + $0x8] sm:$0xff]
  %v60 = vld [vmem:[%s2 + $0x10] sm:$0xff]
  %v61 = vld [vmem:[%s2 + $0x18] sm:$0xff]
  %v62 = vld [vmem:[%s2 + $0x20] sm:$0xff]
  %v63 = vld [vmem:[%s2 + $0x28] sm:$0xff]
  %v64 = vld [vmem:[%s2 + $0x30] sm:$0xff]
  %v65 = vld [vmem:[%s2 + $0x38] sm:$0xff]
  %v66 = vld [vmem:[%s2 + $0x40] sm:$0xff]
  %v67 = vld [vmem:[%s2 + $0x48] sm:$0xff]
  %v68 = vld [vmem:[%s2 + $0x50] sm:$0xff]
  %v69 = vld [vmem:[%s2 + $0x58] sm:$0xff]
  %v70 = vld [vmem:[%s2 + $0x60] sm:$0xff]
  %v71 = vld [vmem:[%s2 + $0x68] sm:$0xff]
  %v72 = vld [vmem:[%s2 + $0x70] sm:$0xff]
  %v73 = vld [vmem:[%s2 + $0x78] sm:$0xff]
  %v74 = vld [vmem:[%s2 + $0x80] sm:$0xff]
  %v75 = vld [vmem:[%s2 + $0x88] sm:$0xff]
  %v76 = vld [vmem:[%s2 + $0x90] sm:$0xff]
  %v77 = vld [vmem:[%s2 + $0x98] sm:$0xff]
  %v78 = vld [vmem:[%s2 + $0xa0] sm:$0xff]
  %v79 = vld [vmem:[%s2 + $0xa8] sm:$0xff]
  %v80 = vld [vmem:[%s2 + $0xb0] sm:$0xff]
  %v81 = vld [vmem:[%s2 + $0xb8] sm:$0x77]
  %v82 = vld [vmem:[%s3] sm:$0x3]
  %v84 = vlaneseq
  %v85 = vshrl.u32 %v84, 7
  %v86 = vsub.s32 0, %v85
  %v87 = vrot.slane %v82, %v86
  %v88 = vlaneseq
  %v89 = vshrl.u32 %v88, 7
  %v90 = vsub.s32 1, %v89
  %v91 = vrot.slane %v82, %v90
  %v101 = vunpack.c.l.b16 %v51
  %v102 = vunpack.c.h.b16 %v51
  %v103 = vunpack.c.l.b16 %v52
  %v104 = vunpack.c.h.b16 %v52
  %v105 = vunpack.c.l.b16 %v53
  %v106 = vunpack.c.h.b16 %v53
  %v107 = vunpack.c.l.b16 %v54
  %v108 = vunpack.c.h.b16 %v54
  %v109 = vunpack.c.l.b16 %v55
  %v110 = vunpack.c.h.b16 %v55
  %v111 = vunpack.c.l.b16 %v56
  %v112 = vunpack.c.h.b16 %v56
  %v113 = vunpack.c.l.b16 %v57
  %v114 = vunpack.c.h.b16 %v57
  %v115 = vpack.c.b16 %v103, %v101
  %v116 = vpack.c.b16 %v104, %v102
  %v117 = vpack.c.b16 %v107, %v105
  %v118 = vpack.c.b16 %v108, %v106
  %v119 = vpack.c.b16 %v111, %v109
  %v120 = vpack.c.b16 %v112, %v110
  %v121 = vpack.c.b16 %v113, %v113
  %v122 = vpack.c.b16 %v114, %v114
  %v151 = vunpack.c.l.b16 %v58
  %v152 = vunpack.c.h.b16 %v58
  %v153 = vunpack.c.l.b16 %v59
  %v154 = vunpack.c.h.b16 %v59
  %v155 = vunpack.c.l.b16 %v60
  %v156 = vunpack.c.h.b16 %v60
  %v157 = vunpack.c.l.b16 %v61
  %v158 = vunpack.c.h.b16 %v61
  %v159 = vunpack.c.l.b16 %v62
  %v160 = vunpack.c.h.b16 %v62
  %v161 = vunpack.c.l.b16 %v63
  %v162 = vunpack.c.h.b16 %v63
  %v163 = vunpack.c.l.b16 %v64
  %v164 = vunpack.c.h.b16 %v64
  %v165 = vunpack.c.l.b16 %v65
  %v166 = vunpack.c.h.b16 %v65
  %v167 = vunpack.c.l.b16 %v66
  %v168 = vunpack.c.h.b16 %v66
  %v169 = vunpack.c.l.b16 %v67
  %v170 = vunpack.c.h.b16 %v67
  %v171 = vunpack.c.l.b16 %v68
  %v172 = vunpack.c.h.b16 %v68
  %v173 = vunpack.c.l.b16 %v69
  %v174 = vunpack.c.h.b16 %v69
  %v175 = vunpack.c.l.b16 %v70
  %v176 = vunpack.c.h.b16 %v70
  %v177 = vunpack.c.l.b16 %v71
  %v178 = vunpack.c.h.b16 %v71
  %v179 = vunpack.c.l.b16 %v72
  %v180 = vunpack.c.h.b16 %v72
  %v181 = vunpack.c.l.b16 %v73
  %v182 = vunpack.c.h.b16 %v73
  %v183 = vunpack.c.l.b16 %v74
  %v184 = vunpack.c.h.b16 %v74
  %v185 = vunpack.c.l.b16 %v75
  %v186 = vunpack.c.h.b16 %v75
  %v187 = vunpack.c.l.b16 %v76
  %v188 = vunpack.c.h.b16 %v76
  %v189 = vunpack.c.l.b16 %v77
  %v190 = vunpack.c.h.b16 %v77
  %v191 = vunpack.c.l.b16 %v78
  %v192 = vunpack.c.h.b16 %v78
  %v193 = vunpack.c.l.b16 %v79
  %v194 = vunpack.c.h.b16 %v79
  %v195 = vunpack.c.l.b16 %v80
  %v196 = vunpack.c.h.b16 %v80
  %v197 = vunpack.c.l.b16 %v81
  %v198 = vunpack.c.h.b16 %v81
  %v199 = vpack.c.b16 %v153, %v151
  %v200 = vpack.c.b16 %v154, %v152
  %v201 = vpack.c.b16 %v157, %v155
  %v202 = vpack.c.b16 %v158, %v156
  %v203 = vpack.c.b16 %v161, %v159
  %v204 = vpack.c.b16 %v162, %v160
  %v205 = vpack.c.b16 %v165, %v163
  %v206 = vpack.c.b16 %v166, %v164
  %v207 = vpack.c.b16 %v169, %v167
  %v208 = vpack.c.b16 %v170, %v168
  %v209 = vpack.c.b16 %v173, %v171
  %v210 = vpack.c.b16 %v174, %v172
  %v211 = vpack.c.b16 %v177, %v175
  %v212 = vpack.c.b16 %v178, %v176
  %v213 = vpack.c.b16 %v181, %v179
  %v214 = vpack.c.b16 %v182, %v180
  %v215 = vpack.c.b16 %v185, %v183
  %v216 = vpack.c.b16 %v186, %v184
  %v217 = vpack.c.b16 %v189, %v187
  %v218 = vpack.c.b16 %v190, %v188
  %v219 = vpack.c.b16 %v193, %v191
  %v220 = vpack.c.b16 %v194, %v192
  %v221 = vpack.c.b16 %v197, %v195
  %v222 = vpack.c.b16 %v198, %v196
  %vm245 = vcmask 498688
  %v247 = vsel %vm245, %v116, 0
  %v250 = vsel %vm245, %v118, 0
  %v253 = vsel %vm245, %v120, 0
  %v256 = vsel %vm245, %v122, 0
  %vm258 = vcmask 1045504
  %vm259 = vcmask 1046528
  %v260 = vsel %vm258, 4294967295, 65535
  %v261 = vsel %vm259, %v260, 0
  %v263 = vand.u32 %v221, %v261
  %v266 = vand.u32 %v222, %v261
  %268 = vmatprep.subr.bf16.mxu0 %v214
  %269 = vmatpush1.bf16.msra.mxu0 %v213
  %270 = vmatprep.subr.bf16.mxu0 %v212
  %271 = vmatpush1.bf16.msra.mxu0 %v211
  %272 = vmatprep.subr.bf16.mxu0 %v210
  %273 = vmatpush1.bf16.msra.mxu0 %v209
  %274 = vmatprep.subr.bf16.mxu0 %v208
  %275 = vmatpush1.bf16.msra.mxu0 %v207
  %276 = vmatprep.subr.bf16.mxu0 %v206
  %277 = vmatpush1.bf16.msra.mxu0 %v205
  %278 = vmatprep.subr.bf16.mxu0 %v204
  %279 = vmatpush1.bf16.msra.mxu0 %v203
  %280 = vmatprep.subr.bf16.mxu0 %v202
  %281 = vmatpush1.bf16.msra.mxu0 %v201
  %282 = vmatprep.subr.bf16.mxu0 %v200
  %283 = vmatpush1.bf16.msra.mxu0 %v199
  %284 = vmatprep.subr.bf16.mxu0 0
  %285 = vmatpush2.bf16.msra.mxu0 0
  %286 = vmatprep.subr.bf16.mxu0 0
  %287 = vmatpush2.bf16.msra.mxu0 0
  %288 = vmatprep.subr.bf16.mxu0 0
  %289 = vmatpush2.bf16.msra.mxu0 0
  %290 = vmatprep.subr.bf16.mxu0 0
  %291 = vmatpush2.bf16.msra.mxu0 0
  %292 = vmatprep.subr.bf16.mxu0 %v266
  %293 = vmatpush2.bf16.msra.mxu0 %v263
  %294 = vmatprep.subr.bf16.mxu0 %v220
  %295 = vmatpush2.bf16.msra.mxu0 %v219
  %296 = vmatprep.subr.bf16.mxu0 %v218
  %297 = vmatpush2.bf16.msra.mxu0 %v217
  %298 = vmatprep.subr.bf16.mxu0 %v216
  %299 = vmatpush2.bf16.msra.mxu0 %v215
  %300 = vmatprep.mubr.bf16.mxu0 %v247
  %301 = vmatmul.mubr.bf16.gmra.mxu0 %v115
  %v302 = vpop.f32.mrf.mxu0
  %v303 = vadd.f32 %v87, %v302
  %v304 = vpop.f32.mrf.mxu0
  %v305 = vadd.f32 %v91, %v304
  %v306 = vpop.f32.mrf.mxu0
  %v307 = vadd.f32 %v87, %v306
  %v308 = vpop.f32.mrf.mxu0
  %v309 = vadd.f32 %v91, %v308
  %310 = vmatprep.mubr.bf16.mxu0 %v250
  %311 = vmatmul.mubr.bf16.gmra.mxu0 %v117
  %v312 = vpop.f32.mrf.mxu0
  %v313 = vadd.f32 %v87, %v312
  %v314 = vpop.f32.mrf.mxu0
  %v315 = vadd.f32 %v91, %v314
  %v316 = vpop.f32.mrf.mxu0
  %v317 = vadd.f32 %v87, %v316
  %v318 = vpop.f32.mrf.mxu0
  %v319 = vadd.f32 %v91, %v318
  %320 = vmatprep.mubr.bf16.mxu0 %v253
  %321 = vmatmul.mubr.bf16.gmra.mxu0 %v119
  %v322 = vpop.f32.mrf.mxu0
  %v323 = vadd.f32 %v87, %v322
  %v324 = vpop.f32.mrf.mxu0
  %v325 = vadd.f32 %v91, %v324
  %v326 = vpop.f32.mrf.mxu0
  %v327 = vadd.f32 %v87, %v326
  %v328 = vpop.f32.mrf.mxu0
  %v329 = vadd.f32 %v91, %v328
  %330 = vmatprep.mubr.bf16.mxu0 %v256
  %331 = vmatmul.mubr.bf16.gmra.mxu0 %v121
  %v332 = vpop.f32.mrf.mxu0
  %v333 = vadd.f32 %v87, %v332
  %v334 = vpop.f32.mrf.mxu0
  %v335 = vadd.f32 %v91, %v334
  %v336 = vpop.f32.mrf.mxu0
  %v337 = vpop.f32.mrf.mxu0
  %338 = vdwg.mxu0
  %v339 = vmax.f32 %v303, 0.0
  %v340 = vmax.f32 %v305, 0.0
  %v341 = vmax.f32 %v307, 0.0
  %v342 = vmax.f32 %v309, 0.0
  %v343 = vmax.f32 %v313, 0.0
  %v344 = vmax.f32 %v315, 0.0
  %v345 = vmax.f32 %v317, 0.0
  %v346 = vmax.f32 %v319, 0.0
  %v347 = vmax.f32 %v323, 0.0
  %v348 = vmax.f32 %v325, 0.0
  %v349 = vmax.f32 %v327, 0.0
  %v350 = vmax.f32 %v329, 0.0
  %v351 = vmax.f32 %v333, 0.0
  %v352 = vmax.f32 %v335, 0.0
  %v353 = vpack.c.bf16 %v341, %v339
  %v354 = vpack.c.bf16 %v342, %v340
  %v355 = vpack.c.bf16 %v345, %v343
  %v356 = vpack.c.bf16 %v346, %v344
  %v357 = vpack.c.bf16 %v349, %v347
  %v358 = vpack.c.bf16 %v350, %v348
  %v359 = vpack.c.bf16 %v351, %v351
  %v360 = vpack.c.bf16 %v352, %v352
  %v361 = vld [vmem:[%s4] sm:$0xff]
  %v362 = vld [vmem:[%s4 + $0x8] sm:$0xff]
  %v363 = vld [vmem:[%s4 + $0x10] sm:$0xff]
  %v364 = vld [vmem:[%s4 + $0x18] sm:$0xff]
  %v365 = vld [vmem:[%s4 + $0x20] sm:$0xff]
  %v366 = vld [vmem:[%s4 + $0x28] sm:$0xff]
  %v367 = vld [vmem:[%s4 + $0x30] sm:$0xff]
  %v368 = vld [vmem:[%s4 + $0x38] sm:$0xff]
  %v369 = vld [vmem:[%s4 + $0x40] sm:$0xff]
  %v370 = vld [vmem:[%s4 + $0x48] sm:$0xff]
  %v371 = vld [vmem:[%s4 + $0x50] sm:$0xff]
  %v372 = vld [vmem:[%s4 + $0x58] sm:$0xff]
  %v373 = vld [vmem:[%s4 + $0x60] sm:$0xff]
  %v374 = vld [vmem:[%s4 + $0x68] sm:$0xff]
  %v375 = vld [vmem:[%s4 + $0x70] sm:$0xff]
  %v376 = vld [vmem:[%s4 + $0x78] sm:$0xff]
  %v377 = vld [vmem:[%s4 + $0x80] sm:$0xff]
  %v378 = vld [vmem:[%s4 + $0x88] sm:$0xff]
  %v379 = vld [vmem:[%s4 + $0x90] sm:$0xff]
  %v380 = vld [vmem:[%s4 + $0x98] sm:$0xff]
  %v381 = vld [vmem:[%s4 + $0xa0] sm:$0xff]
  %v382 = vld [vmem:[%s4 + $0xa8] sm:$0xff]
  %v383 = vld [vmem:[%s4 + $0xb0] sm:$0xff]
  %v384 = vld [vmem:[%s4 + $0xb8] sm:$0xff]
  %v385 = vld [vmem:[%s4 + $0xc0] sm:$0xff]
  %v386 = vld [vmem:[%s4 + $0xc8] sm:$0xff]
  %v387 = vld [vmem:[%s4 + $0xd0] sm:$0xff]
  %v388 = vld [vmem:[%s4 + $0xd8] sm:$0xff]
  %v389 = vld [vmem:[%s4 + $0xe0] sm:$0xff]
  %v390 = vld [vmem:[%s4 + $0xe8] sm:$0xff]
  %v391 = vld [vmem:[%s4 + $0xf0] sm:$0xff]
  %v392 = vld [vmem:[%s4 + $0xf8] sm:$0xff]
  %v393 = vld [vmem:[%s4 + $0x100] sm:$0xff]
  %v394 = vld [vmem:[%s4 + $0x108] sm:$0xff]
  %v395 = vld [vmem:[%s4 + $0x110] sm:$0xff]
  %v396 = vld [vmem:[%s4 + $0x118] sm:$0xff]
  %v397 = vld [vmem:[%s4 + $0x120] sm:$0xff]
  %v398 = vld [vmem:[%s4 + $0x128] sm:$0xff]
  %v399 = vld [vmem:[%s4 + $0x130] sm:$0xff]
  %v400 = vld [vmem:[%s4 + $0x138] sm:$0xff]
  %v401 = vld [vmem:[%s4 + $0x140] sm:$0xff]
  %v402 = vld [vmem:[%s4 + $0x148] sm:$0xff]
  %v403 = vld [vmem:[%s4 + $0x150] sm:$0xff]
  %v404 = vld [vmem:[%s4 + $0x158] sm:$0xff]
  %v405 = vld [vmem:[%s4 + $0x160] sm:$0xff]
  %v406 = vld [vmem:[%s4 + $0x168] sm:$0xff]
  %v407 = vld [vmem:[%s4 + $0x170] sm:$0xff]
  %v408 = vld [vmem:[%s4 + $0x178] sm:$0xff]
  %v409 = vld [vmem:[%s4 + $0x180] sm:$0xff]
  %v410 = vld [vmem:[%s4 + $0x188] sm:$0xff]
  %v411 = vld [vmem:[%s4 + $0x190] sm:$0xff]
  %v412 = vld [vmem:[%s4 + $0x198] sm:$0xff]
  %v413 = vld [vmem:[%s4 + $0x1a0] sm:$0xff]
  %v414 = vld [vmem:[%s4 + $0x1a8] sm:$0xff]
  %v415 = vld [vmem:[%s4 + $0x1b0] sm:$0xff]
  %v416 = vld [vmem:[%s4 + $0x1b8] sm:$0xff]
  %v419 = vrot.slane %v353, 4
  %v420 = vrot.slane %v354, 4
  %v450 = vunpack.c.l.b16 %v389
  %v451 = vunpack.c.h.b16 %v389
  %v452 = vunpack.c.l.b16 %v390
  %v453 = vunpack.c.h.b16 %v390
  %v454 = vunpack.c.l.b16 %v391
  %v455 = vunpack.c.h.b16 %v391
  %v456 = vunpack.c.l.b16 %v392
  %v457 = vunpack.c.h.b16 %v392
  %v458 = vunpack.c.l.b16 %v393
  %v459 = vunpack.c.h.b16 %v393
  %v460 = vunpack.c.l.b16 %v394
  %v461 = vunpack.c.h.b16 %v394
  %v462 = vunpack.c.l.b16 %v395
  %v463 = vunpack.c.h.b16 %v395
  %v464 = vunpack.c.l.b16 %v396
  %v465 = vunpack.c.h.b16 %v396
  %v466 = vunpack.c.l.b16 %v397
  %v467 = vunpack.c.h.b16 %v397
  %v468 = vunpack.c.l.b16 %v398
  %v469 = vunpack.c.h.b16 %v398
  %v470 = vunpack.c.l.b16 %v399
  %v471 = vunpack.c.h.b16 %v399
  %v472 = vunpack.c.l.b16 %v400
  %v473 = vunpack.c.h.b16 %v400
  %v474 = vunpack.c.l.b16 %v401
  %v475 = vunpack.c.h.b16 %v401
  %v476 = vunpack.c.l.b16 %v402
  %v477 = vunpack.c.h.b16 %v402
  %v478 = vunpack.c.l.b16 %v403
  %v479 = vunpack.c.h.b16 %v403
  %v480 = vunpack.c.l.b16 %v404
  %v481 = vunpack.c.h.b16 %v404
  %v482 = vunpack.c.l.b16 %v405
  %v483 = vunpack.c.h.b16 %v405
  %v484 = vunpack.c.l.b16 %v406
  %v485 = vunpack.c.h.b16 %v406
  %v486 = vunpack.c.l.b16 %v407
  %v487 = vunpack.c.h.b16 %v407
  %v488 = vunpack.c.l.b16 %v408
  %v489 = vunpack.c.h.b16 %v408
  %v490 = vunpack.c.l.b16 %v409
  %v491 = vunpack.c.h.b16 %v409
  %v492 = vunpack.c.l.b16 %v410
  %v493 = vunpack.c.h.b16 %v410
  %v494 = vunpack.c.l.b16 %v411
  %v495 = vunpack.c.h.b16 %v411
  %v496 = vunpack.c.l.b16 %v412
  %v497 = vunpack.c.h.b16 %v412
  %v498 = vunpack.c.l.b16 %v413
  %v499 = vunpack.c.h.b16 %v413
  %v500 = vunpack.c.l.b16 %v414
  %v501 = vunpack.c.h.b16 %v414
  %v502 = vunpack.c.l.b16 %v415
  %v503 = vunpack.c.h.b16 %v415
  %v504 = vunpack.c.l.b16 %v416
  %v505 = vunpack.c.h.b16 %v416
  %v506 = vpack.c.b16 %v452, %v450
  %v507 = vpack.c.b16 %v453, %v451
  %v508 = vpack.c.b16 %v456, %v454
  %v509 = vpack.c.b16 %v457, %v455
  %v510 = vpack.c.b16 %v460, %v458
  %v511 = vpack.c.b16 %v461, %v459
  %v512 = vpack.c.b16 %v464, %v462
  %v513 = vpack.c.b16 %v465, %v463
  %v514 = vpack.c.b16 %v468, %v466
  %v515 = vpack.c.b16 %v469, %v467
  %v516 = vpack.c.b16 %v472, %v470
  %v517 = vpack.c.b16 %v473, %v471
  %v518 = vpack.c.b16 %v476, %v474
  %v519 = vpack.c.b16 %v477, %v475
  %v520 = vpack.c.b16 %v480, %v478
  %v521 = vpack.c.b16 %v481, %v479
  %v522 = vpack.c.b16 %v484, %v482
  %v523 = vpack.c.b16 %v485, %v483
  %v524 = vpack.c.b16 %v488, %v486
  %v525 = vpack.c.b16 %v489, %v487
  %v526 = vpack.c.b16 %v492, %v490
  %v527 = vpack.c.b16 %v493, %v491
  %v528 = vpack.c.b16 %v496, %v494
  %v529 = vpack.c.b16 %v497, %v495
  %v530 = vpack.c.b16 %v500, %v498
  %v531 = vpack.c.b16 %v501, %v499
  %v532 = vpack.c.b16 %v504, %v502
  %v533 = vpack.c.b16 %v505, %v503
  %vm562 = vcmask 785408
  %v564 = vsel %vm562, %v420, 0
  %566 = vmatprep.subr.bf16.mxu0 %v521
  %567 = vmatpush1.bf16.msra.mxu0 %v520
  %568 = vmatprep.subr.bf16.mxu0 %v519
  %569 = vmatpush1.bf16.msra.mxu0 %v518
  %570 = vmatprep.subr.bf16.mxu0 %v517
  %571 = vmatpush1.bf16.msra.mxu0 %v516
  %572 = vmatprep.subr.bf16.mxu0 %v515
  %573 = vmatpush1.bf16.msra.mxu0 %v514
  %574 = vmatprep.subr.bf16.mxu0 %v513
  %575 = vmatpush1.bf16.msra.mxu0 %v512
  %576 = vmatprep.subr.bf16.mxu0 %v511
  %577 = vmatpush1.bf16.msra.mxu0 %v510
  %578 = vmatprep.subr.bf16.mxu0 %v509
  %579 = vmatpush1.bf16.msra.mxu0 %v508
  %580 = vmatprep.subr.bf16.mxu0 %v507
  %581 = vmatpush1.bf16.msra.mxu0 %v506
  %582 = vmatprep.subr.bf16.mxu0 0
  %583 = vmatpush2.bf16.msra.mxu0 0
  %584 = vmatprep.subr.bf16.mxu0 0
  %585 = vmatpush2.bf16.msra.mxu0 0
  %586 = vmatprep.subr.bf16.mxu0 %v533
  %587 = vmatpush2.bf16.msra.mxu0 %v532
  %588 = vmatprep.subr.bf16.mxu0 %v531
  %589 = vmatpush2.bf16.msra.mxu0 %v530
  %590 = vmatprep.subr.bf16.mxu0 %v529
  %591 = vmatpush2.bf16.msra.mxu0 %v528
  %592 = vmatprep.subr.bf16.mxu0 %v527
  %593 = vmatpush2.bf16.msra.mxu0 %v526
  %594 = vmatprep.subr.bf16.mxu0 %v525
  %595 = vmatpush2.bf16.msra.mxu0 %v524
  %596 = vmatprep.subr.bf16.mxu0 %v523
  %597 = vmatpush2.bf16.msra.mxu0 %v522
  %598 = vmatprep.mubr.bf16.mxu0 %v564
  %599 = vmatmul.mubr.bf16.gmra.mxu0 %v419
  %v600 = vpop.f32.mrf.mxu0
  %v601 = vadd.f32 0.0, %v600
  %v602 = vpop.f32.mrf.mxu0
  %v603 = vadd.f32 0.0, %v602
  %v604 = vpop.f32.mrf.mxu0
  %v605 = vpop.f32.mrf.mxu0
  %606 = vdwg.mxu0
  %v635 = vunpack.c.l.b16 %v361
  %v636 = vunpack.c.h.b16 %v361
  %v637 = vunpack.c.l.b16 %v362
  %v638 = vunpack.c.h.b16 %v362
  %v639 = vunpack.c.l.b16 %v363
  %v640 = vunpack.c.h.b16 %v363
  %v641 = vunpack.c.l.b16 %v364
  %v642 = vunpack.c.h.b16 %v364
  %v643 = vunpack.c.l.b16 %v365
  %v644 = vunpack.c.h.b16 %v365
  %v645 = vunpack.c.l.b16 %v366
  %v646 = vunpack.c.h.b16 %v366
  %v647 = vunpack.c.l.b16 %v367
  %v648 = vunpack.c.h.b16 %v367
  %v649 = vunpack.c.l.b16 %v368
  %v650 = vunpack.c.h.b16 %v368
  %v651 = vunpack.c.l.b16 %v369
  %v652 = vunpack.c.h.b16 %v369
  %v653 = vunpack.c.l.b16 %v370
  %v654 = vunpack.c.h.b16 %v370
  %v655 = vunpack.c.l.b16 %v371
  %v656 = vunpack.c.h.b16 %v371
  %v657 = vunpack.c.l.b16 %v372
  %v658 = vunpack.c.h.b16 %v372
  %v659 = vunpack.c.l.b16 %v373
  %v660 = vunpack.c.h.b16 %v373
  %v661 = vunpack.c.l.b16 %v374
  %v662 = vunpack.c.h.b16 %v374
  %v663 = vunpack.c.l.b16 %v375
  %v664 = vunpack.c.h.b16 %v375
  %v665 = vunpack.c.l.b16 %v376
  %v666 = vunpack.c.h.b16 %v376
  %v667 = vunpack.c.l.b16 %v377
  %v668 = vunpack.c.h.b16 %v377
  %v669 = vunpack.c.l.b16 %v378
  %v670 = vunpack.c.h.b16 %v378
  %v671 = vunpack.c.l.b16 %v379
  %v672 = vunpack.c.h.b16 %v379
  %v673 = vunpack.c.l.b16 %v380
  %v674 = vunpack.c.h.b16 %v380
  %v675 = vunpack.c.l.b16 %v381
  %v676 = vunpack.c.h.b16 %v381
  %v677 = vunpack.c.l.b16 %v382
  %v678 = vunpack.c.h.b16 %v382
  %v679 = vunpack.c.l.b16 %v383
  %v680 = vunpack.c.h.b16 %v383
  %v681 = vunpack.c.l.b16 %v384
  %v682 = vunpack.c.h.b16 %v384
  %v683 = vunpack.c.l.b16 %v385
  %v684 = vunpack.c.h.b16 %v385
  %v685 = vunpack.c.l.b16 %v386
  %v686 = vunpack.c.h.b16 %v386
  %v687 = vunpack.c.l.b16 %v387
  %v688 = vunpack.c.h.b16 %v387
  %v689 = vunpack.c.l.b16 %v388
  %v690 = vunpack.c.h.b16 %v388
  %v691 = vpack.c.b16 %v637, %v635
  %v692 = vpack.c.b16 %v638, %v636
  %v693 = vpack.c.b16 %v641, %v639
  %v694 = vpack.c.b16 %v642, %v640
  %v695 = vpack.c.b16 %v645, %v643
  %v696 = vpack.c.b16 %v646, %v644
  %v697 = vpack.c.b16 %v649, %v647
  %v698 = vpack.c.b16 %v650, %v648
  %v699 = vpack.c.b16 %v653, %v651
  %v700 = vpack.c.b16 %v654, %v652
  %v701 = vpack.c.b16 %v657, %v655
  %v702 = vpack.c.b16 %v658, %v656
  %v703 = vpack.c.b16 %v661, %v659
  %v704 = vpack.c.b16 %v662, %v660
  %v705 = vpack.c.b16 %v665, %v663
  %v706 = vpack.c.b16 %v666, %v664
  %v707 = vpack.c.b16 %v669, %v667
  %v708 = vpack.c.b16 %v670, %v668
  %v709 = vpack.c.b16 %v673, %v671
  %v710 = vpack.c.b16 %v674, %v672
  %v711 = vpack.c.b16 %v677, %v675
  %v712 = vpack.c.b16 %v678, %v676
  %v713 = vpack.c.b16 %v681, %v679
  %v714 = vpack.c.b16 %v682, %v680
  %v715 = vpack.c.b16 %v685, %v683
  %v716 = vpack.c.b16 %v686, %v684
  %v717 = vpack.c.b16 %v689, %v687
  %v718 = vpack.c.b16 %v690, %v688
  %v748 = vsel %vm562, %v354, 0
  %750 = vmatprep.subr.bf16.mxu0 %v706
  %751 = vmatpush1.bf16.msra.mxu0 %v705
  %752 = vmatprep.subr.bf16.mxu0 %v704
  %753 = vmatpush1.bf16.msra.mxu0 %v703
  %754 = vmatprep.subr.bf16.mxu0 %v702
  %755 = vmatpush1.bf16.msra.mxu0 %v701
  %756 = vmatprep.subr.bf16.mxu0 %v700
  %757 = vmatpush1.bf16.msra.mxu0 %v699
  %758 = vmatprep.subr.bf16.mxu0 %v698
  %759 = vmatpush1.bf16.msra.mxu0 %v697
  %760 = vmatprep.subr.bf16.mxu0 %v696
  %761 = vmatpush1.bf16.msra.mxu0 %v695
  %762 = vmatprep.subr.bf16.mxu0 %v694
  %763 = vmatpush1.bf16.msra.mxu0 %v693
  %764 = vmatprep.subr.bf16.mxu0 %v692
  %765 = vmatpush1.bf16.msra.mxu0 %v691
  %766 = vmatprep.subr.bf16.mxu0 0
  %767 = vmatpush2.bf16.msra.mxu0 0
  %768 = vmatprep.subr.bf16.mxu0 0
  %769 = vmatpush2.bf16.msra.mxu0 0
  %770 = vmatprep.subr.bf16.mxu0 %v718
  %771 = vmatpush2.bf16.msra.mxu0 %v717
  %772 = vmatprep.subr.bf16.mxu0 %v716
  %773 = vmatpush2.bf16.msra.mxu0 %v715
  %774 = vmatprep.subr.bf16.mxu0 %v714
  %775 = vmatpush2.bf16.msra.mxu0 %v713
  %776 = vmatprep.subr.bf16.mxu0 %v712
  %777 = vmatpush2.bf16.msra.mxu0 %v711
  %778 = vmatprep.subr.bf16.mxu0 %v710
  %779 = vmatpush2.bf16.msra.mxu0 %v709
  %780 = vmatprep.subr.bf16.mxu0 %v708
  %781 = vmatpush2.bf16.msra.mxu0 %v707
  %782 = vmatprep.mubr.bf16.mxu0 %v748
  %783 = vmatmul.mubr.bf16.gmra.mxu0 %v353
  %v784 = vpop.f32.mrf.mxu0
  %v785 = vadd.f32 %v601, %v784
  %v786 = vpop.f32.mrf.mxu0
  %v787 = vadd.f32 %v603, %v786
  %v788 = vpop.f32.mrf.mxu0
  %v789 = vpop.f32.mrf.mxu0
  %790 = vdwg.mxu0
  %v791 = vld [vmem:[%s4 + $0x1c0] sm:$0xff]
  %v792 = vld [vmem:[%s4 + $0x1c8] sm:$0xff]
  %v793 = vld [vmem:[%s4 + $0x1d0] sm:$0xff]
  %v794 = vld [vmem:[%s4 + $0x1d8] sm:$0xff]
  %v795 = vld [vmem:[%s4 + $0x1e0] sm:$0xff]
  %v796 = vld [vmem:[%s4 + $0x1e8] sm:$0xff]
  %v797 = vld [vmem:[%s4 + $0x1f0] sm:$0xff]
  %v798 = vld [vmem:[%s4 + $0x1f8] sm:$0xff]
  %v799 = vld [vmem:[%s4 + $0x200] sm:$0xff]
  %v800 = vld [vmem:[%s4 + $0x208] sm:$0xff]
  %v801 = vld [vmem:[%s4 + $0x210] sm:$0xff]
  %v802 = vld [vmem:[%s4 + $0x218] sm:$0xff]
  %v803 = vld [vmem:[%s4 + $0x220] sm:$0xff]
  %v804 = vld [vmem:[%s4 + $0x228] sm:$0xff]
  %v805 = vld [vmem:[%s4 + $0x230] sm:$0xff]
  %v806 = vld [vmem:[%s4 + $0x238] sm:$0xff]
  %v807 = vld [vmem:[%s4 + $0x240] sm:$0xff]
  %v808 = vld [vmem:[%s4 + $0x248] sm:$0xff]
  %v809 = vld [vmem:[%s4 + $0x250] sm:$0xff]
  %v810 = vld [vmem:[%s4 + $0x258] sm:$0xff]
  %v811 = vld [vmem:[%s4 + $0x260] sm:$0xff]
  %v812 = vld [vmem:[%s4 + $0x268] sm:$0xff]
  %v813 = vld [vmem:[%s4 + $0x270] sm:$0xff]
  %v814 = vld [vmem:[%s4 + $0x278] sm:$0xff]
  %v815 = vld [vmem:[%s4 + $0x280] sm:$0xff]
  %v816 = vld [vmem:[%s4 + $0x288] sm:$0xff]
  %v817 = vld [vmem:[%s4 + $0x290] sm:$0xff]
  %v818 = vld [vmem:[%s4 + $0x298] sm:$0xff]
  %v847 = vunpack.c.l.b16 %v791
  %v848 = vunpack.c.h.b16 %v791
  %v849 = vunpack.c.l.b16 %v792
  %v850 = vunpack.c.h.b16 %v792
  %v851 = vunpack.c.l.b16 %v793
  %v852 = vunpack.c.h.b16 %v793
  %v853 = vunpack.c.l.b16 %v794
  %v854 = vunpack.c.h.b16 %v794
  %v855 = vunpack.c.l.b16 %v795
  %v856 = vunpack.c.h.b16 %v795
  %v857 = vunpack.c.l.b16 %v796
  %v858 = vunpack.c.h.b16 %v796
  %v859 = vunpack.c.l.b16 %v797
  %v860 = vunpack.c.h.b16 %v797
  %v861 = vunpack.c.l.b16 %v798
  %v862 = vunpack.c.h.b16 %v798
  %v863 = vunpack.c.l.b16 %v799
  %v864 = vunpack.c.h.b16 %v799
  %v865 = vunpack.c.l.b16 %v800
  %v866 = vunpack.c.h.b16 %v800
  %v867 = vunpack.c.l.b16 %v801
  %v868 = vunpack.c.h.b16 %v801
  %v869 = vunpack.c.l.b16 %v802
  %v870 = vunpack.c.h.b16 %v802
  %v871 = vunpack.c.l.b16 %v803
  %v872 = vunpack.c.h.b16 %v803
  %v873 = vunpack.c.l.b16 %v804
  %v874 = vunpack.c.h.b16 %v804
  %v875 = vunpack.c.l.b16 %v805
  %v876 = vunpack.c.h.b16 %v805
  %v877 = vunpack.c.l.b16 %v806
  %v878 = vunpack.c.h.b16 %v806
  %v879 = vunpack.c.l.b16 %v807
  %v880 = vunpack.c.h.b16 %v807
  %v881 = vunpack.c.l.b16 %v808
  %v882 = vunpack.c.h.b16 %v808
  %v883 = vunpack.c.l.b16 %v809
  %v884 = vunpack.c.h.b16 %v809
  %v885 = vunpack.c.l.b16 %v810
  %v886 = vunpack.c.h.b16 %v810
  %v887 = vunpack.c.l.b16 %v811
  %v888 = vunpack.c.h.b16 %v811
  %v889 = vunpack.c.l.b16 %v812
  %v890 = vunpack.c.h.b16 %v812
  %v891 = vunpack.c.l.b16 %v813
  %v892 = vunpack.c.h.b16 %v813
  %v893 = vunpack.c.l.b16 %v814
  %v894 = vunpack.c.h.b16 %v814
  %v895 = vunpack.c.l.b16 %v815
  %v896 = vunpack.c.h.b16 %v815
  %v897 = vunpack.c.l.b16 %v816
  %v898 = vunpack.c.h.b16 %v816
  %v899 = vunpack.c.l.b16 %v817
  %v900 = vunpack.c.h.b16 %v817
  %v901 = vunpack.c.l.b16 %v818
  %v902 = vunpack.c.h.b16 %v818
  %v903 = vpack.c.b16 %v849, %v847
  %v904 = vpack.c.b16 %v850, %v848
  %v905 = vpack.c.b16 %v853, %v851
  %v906 = vpack.c.b16 %v854, %v852
  %v907 = vpack.c.b16 %v857, %v855
  %v908 = vpack.c.b16 %v858, %v856
  %v909 = vpack.c.b16 %v861, %v859
  %v910 = vpack.c.b16 %v862, %v860
  %v911 = vpack.c.b16 %v865, %v863
  %v912 = vpack.c.b16 %v866, %v864
  %v913 = vpack.c.b16 %v869, %v867
  %v914 = vpack.c.b16 %v870, %v868
  %v915 = vpack.c.b16 %v873, %v871
  %v916 = vpack.c.b16 %v874, %v872
  %v917 = vpack.c.b16 %v877, %v875
  %v918 = vpack.c.b16 %v878, %v876
  %v919 = vpack.c.b16 %v881, %v879
  %v920 = vpack.c.b16 %v882, %v880
  %v921 = vpack.c.b16 %v885, %v883
  %v922 = vpack.c.b16 %v886, %v884
  %v923 = vpack.c.b16 %v889, %v887
  %v924 = vpack.c.b16 %v890, %v888
  %v925 = vpack.c.b16 %v893, %v891
  %v926 = vpack.c.b16 %v894, %v892
  %v927 = vpack.c.b16 %v897, %v895
  %v928 = vpack.c.b16 %v898, %v896
  %v929 = vpack.c.b16 %v901, %v899
  %v930 = vpack.c.b16 %v902, %v900
  %v960 = vsel %vm562, %v356, 0
  %962 = vmatprep.subr.bf16.mxu0 %v918
  %963 = vmatpush1.bf16.msra.mxu0 %v917
  %964 = vmatprep.subr.bf16.mxu0 %v916
  %965 = vmatpush1.bf16.msra.mxu0 %v915
  %966 = vmatprep.subr.bf16.mxu0 %v914
  %967 = vmatpush1.bf16.msra.mxu0 %v913
  %968 = vmatprep.subr.bf16.mxu0 %v912
  %969 = vmatpush1.bf16.msra.mxu0 %v911
  %970 = vmatprep.subr.bf16.mxu0 %v910
  %971 = vmatpush1.bf16.msra.mxu0 %v909
  %972 = vmatprep.subr.bf16.mxu0 %v908
  %973 = vmatpush1.bf16.msra.mxu0 %v907
  %974 = vmatprep.subr.bf16.mxu0 %v906
  %975 = vmatpush1.bf16.msra.mxu0 %v905
  %976 = vmatprep.subr.bf16.mxu0 %v904
  %977 = vmatpush1.bf16.msra.mxu0 %v903
  %978 = vmatprep.subr.bf16.mxu0 0
  %979 = vmatpush2.bf16.msra.mxu0 0
  %980 = vmatprep.subr.bf16.mxu0 0
  %981 = vmatpush2.bf16.msra.mxu0 0
  %982 = vmatprep.subr.bf16.mxu0 %v930
  %983 = vmatpush2.bf16.msra.mxu0 %v929
  %984 = vmatprep.subr.bf16.mxu0 %v928
  %985 = vmatpush2.bf16.msra.mxu0 %v927
  %986 = vmatprep.subr.bf16.mxu0 %v926
  %987 = vmatpush2.bf16.msra.mxu0 %v925
  %988 = vmatprep.subr.bf16.mxu0 %v924
  %989 = vmatpush2.bf16.msra.mxu0 %v923
  %990 = vmatprep.subr.bf16.mxu0 %v922
  %991 = vmatpush2.bf16.msra.mxu0 %v921
  %992 = vmatprep.subr.bf16.mxu0 %v920
  %993 = vmatpush2.bf16.msra.mxu0 %v919
  %994 = vmatprep.mubr.bf16.mxu0 %v960
  %995 = vmatmul.mubr.bf16.gmra.mxu0 %v355
  %v996 = vpop.f32.mrf.mxu0
  %v997 = vadd.f32 0.0, %v996
  %v998 = vpop.f32.mrf.mxu0
  %v999 = vadd.f32 0.0, %v998
  %v1000 = vpop.f32.mrf.mxu0
  %v1001 = vpop.f32.mrf.mxu0
  %1002 = vdwg.mxu0
  %v1003 = vadd.f32 %v785, %v997
  %v1004 = vadd.f32 %v787, %v999
  %v1005 = vld [vmem:[%s5] sm:$0x3]
  %v1007 = vlaneseq
  %v1008 = vshrl.u32 %v1007, 7
  %v1009 = vsub.s32 0, %v1008
  %v1010 = vrot.slane %v1005, %v1009
  %v1011 = vlaneseq
  %v1012 = vshrl.u32 %v1011, 7
  %v1013 = vsub.s32 1, %v1012
  %v1014 = vrot.slane %v1005, %v1013
  %v1017 = vadd.f32 %v1003, %v1010
  %v1018 = vadd.f32 %v1004, %v1014
  %v1019 = vmax.f32 %v1017, 0.0
  %v1020 = vmax.f32 %v1018, 0.0
  %v1021 = vpack.c.bf16 %v1019, %v1019
  %v1022 = vpack.c.bf16 %v1020, %v1020
  %v1023 = vld [vmem:[%s6] sm:$0xf]
  %v1024 = vld [vmem:[%s6 + $0x4] sm:$0xf]
  %v1025 = vld [vmem:[%s6 + $0x8] sm:$0xf]
  %v1026 = vld [vmem:[%s6 + $0xc] sm:$0xf]
  %v1027 = vld [vmem:[%s6 + $0x10] sm:$0xf]
  %v1028 = vld [vmem:[%s6 + $0x14] sm:$0xf]
  %v1029 = vld [vmem:[%s6 + $0x18] sm:$0xf]
  %v1030 = vld [vmem:[%s6 + $0x1c] sm:$0xf]
  %v1031 = vld [vmem:[%s6 + $0x20] sm:$0xf]
  %v1032 = vld [vmem:[%s6 + $0x24] sm:$0xf]
  %v1033 = vld [vmem:[%s6 + $0x28] sm:$0xf]
  %v1034 = vld [vmem:[%s6 + $0x2c] sm:$0xf]
  %v1035 = vld [vmem:[%s6 + $0x30] sm:$0xf]
  %v1036 = vld [vmem:[%s6 + $0x34] sm:$0xf]
  %v1037 = vld [vmem:[%s6 + $0x38] sm:$0xf]
  %v1038 = vld [vmem:[%s6 + $0x3c] sm:$0xf]
  %v1039 = vld [vmem:[%s6 + $0x40] sm:$0xf]
  %v1040 = vld [vmem:[%s6 + $0x44] sm:$0xf]
  %v1041 = vld [vmem:[%s6 + $0x48] sm:$0xf]
  %v1042 = vld [vmem:[%s6 + $0x4c] sm:$0xf]
  %v1043 = vld [vmem:[%s6 + $0x50] sm:$0xf]
  %v1044 = vld [vmem:[%s6 + $0x54] sm:$0xf]
  %v1045 = vld [vmem:[%s6 + $0x58] sm:$0xf]
  %v1046 = vld [vmem:[%s6 + $0x5c] sm:$0xf]
  %v1049 = vrot.slane %v355, 4
  %v1050 = vrot.slane %v356, 4
  %v1053 = vsel %vm562, %v1050, 0
  %1055 = vmatprep.subr.bf16.mxu0 %v521
  %1056 = vmatpush1.bf16.msra.mxu0 %v520
  %1057 = vmatprep.subr.bf16.mxu0 %v519
  %1058 = vmatpush1.bf16.msra.mxu0 %v518
  %1059 = vmatprep.subr.bf16.mxu0 %v517
  %1060 = vmatpush1.bf16.msra.mxu0 %v516
  %1061 = vmatprep.subr.bf16.mxu0 %v515
  %1062 = vmatpush1.bf16.msra.mxu0 %v514
  %1063 = vmatprep.subr.bf16.mxu0 %v513
  %1064 = vmatpush1.bf16.msra.mxu0 %v512
  %1065 = vmatprep.subr.bf16.mxu0 %v511
  %1066 = vmatpush1.bf16.msra.mxu0 %v510
  %1067 = vmatprep.subr.bf16.mxu0 %v509
  %1068 = vmatpush1.bf16.msra.mxu0 %v508
  %1069 = vmatprep.subr.bf16.mxu0 %v507
  %1070 = vmatpush1.bf16.msra.mxu0 %v506
  %1071 = vmatprep.subr.bf16.mxu0 0
  %1072 = vmatpush2.bf16.msra.mxu0 0
  %1073 = vmatprep.subr.bf16.mxu0 0
  %1074 = vmatpush2.bf16.msra.mxu0 0
  %1075 = vmatprep.subr.bf16.mxu0 %v533
  %1076 = vmatpush2.bf16.msra.mxu0 %v532
  %1077 = vmatprep.subr.bf16.mxu0 %v531
  %1078 = vmatpush2.bf16.msra.mxu0 %v530
  %1079 = vmatprep.subr.bf16.mxu0 %v529
  %1080 = vmatpush2.bf16.msra.mxu0 %v528
  %1081 = vmatprep.subr.bf16.mxu0 %v527
  %1082 = vmatpush2.bf16.msra.mxu0 %v526
  %1083 = vmatprep.subr.bf16.mxu0 %v525
  %1084 = vmatpush2.bf16.msra.mxu0 %v524
  %1085 = vmatprep.subr.bf16.mxu0 %v523
  %1086 = vmatpush2.bf16.msra.mxu0 %v522
  %1087 = vmatprep.mubr.bf16.mxu0 %v1053
  %1088 = vmatmul.mubr.bf16.gmra.mxu0 %v1049
  %v1089 = vpop.f32.mrf.mxu0
  %v1090 = vadd.f32 0.0, %v1089
  %v1091 = vpop.f32.mrf.mxu0
  %v1092 = vadd.f32 0.0, %v1091
  %v1093 = vpop.f32.mrf.mxu0
  %v1094 = vpop.f32.mrf.mxu0
  %1095 = vdwg.mxu0
  %1096 = vmatprep.subr.bf16.mxu0 %v706
  %1097 = vmatpush1.bf16.msra.mxu0 %v705
  %1098 = vmatprep.subr.bf16.mxu0 %v704
  %1099 = vmatpush1.bf16.msra.mxu0 %v703
  %1100 = vmatprep.subr.bf16.mxu0 %v702
  %1101 = vmatpush1.bf16.msra.mxu0 %v701
  %1102 = vmatprep.subr.bf16.mxu0 %v700
  %1103 = vmatpush1.bf16.msra.mxu0 %v699
  %1104 = vmatprep.subr.bf16.mxu0 %v698
  %1105 = vmatpush1.bf16.msra.mxu0 %v697
  %1106 = vmatprep.subr.bf16.mxu0 %v696
  %1107 = vmatpush1.bf16.msra.mxu0 %v695
  %1108 = vmatprep.subr.bf16.mxu0 %v694
  %1109 = vmatpush1.bf16.msra.mxu0 %v693
  %1110 = vmatprep.subr.bf16.mxu0 %v692
  %1111 = vmatpush1.bf16.msra.mxu0 %v691
  %1112 = vmatprep.subr.bf16.mxu0 0
  %1113 = vmatpush2.bf16.msra.mxu0 0
  %1114 = vmatprep.subr.bf16.mxu0 0
  %1115 = vmatpush2.bf16.msra.mxu0 0
  %1116 = vmatprep.subr.bf16.mxu0 %v718
  %1117 = vmatpush2.bf16.msra.mxu0 %v717
  %1118 = vmatprep.subr.bf16.mxu0 %v716
  %1119 = vmatpush2.bf16.msra.mxu0 %v715
  %1120 = vmatprep.subr.bf16.mxu0 %v714
  %1121 = vmatpush2.bf16.msra.mxu0 %v713
  %1122 = vmatprep.subr.bf16.mxu0 %v712
  %1123 = vmatpush2.bf16.msra.mxu0 %v711
  %1124 = vmatprep.subr.bf16.mxu0 %v710
  %1125 = vmatpush2.bf16.msra.mxu0 %v709
  %1126 = vmatprep.subr.bf16.mxu0 %v708
  %1127 = vmatpush2.bf16.msra.mxu0 %v707
  %1128 = vmatprep.mubr.bf16.mxu0 %v960
  %1129 = vmatmul.mubr.bf16.gmra.mxu0 %v355
  %v1130 = vpop.f32.mrf.mxu0
  %v1131 = vadd.f32 %v1090, %v1130
  %v1132 = vpop.f32.mrf.mxu0
  %v1133 = vadd.f32 %v1092, %v1132
  %v1134 = vpop.f32.mrf.mxu0
  %v1135 = vpop.f32.mrf.mxu0
  %1136 = vdwg.mxu0
  %v1138 = vsel %vm562, %v358, 0
  %1140 = vmatprep.subr.bf16.mxu0 %v918
  %1141 = vmatpush1.bf16.msra.mxu0 %v917
  %1142 = vmatprep.subr.bf16.mxu0 %v916
  %1143 = vmatpush1.bf16.msra.mxu0 %v915
  %1144 = vmatprep.subr.bf16.mxu0 %v914
  %1145 = vmatpush1.bf16.msra.mxu0 %v913
  %1146 = vmatprep.subr.bf16.mxu0 %v912
  %1147 = vmatpush1.bf16.msra.mxu0 %v911
  %1148 = vmatprep.subr.bf16.mxu0 %v910
  %1149 = vmatpush1.bf16.msra.mxu0 %v909
  %1150 = vmatprep.subr.bf16.mxu0 %v908
  %1151 = vmatpush1.bf16.msra.mxu0 %v907
  %1152 = vmatprep.subr.bf16.mxu0 %v906
  %1153 = vmatpush1.bf16.msra.mxu0 %v905
  %1154 = vmatprep.subr.bf16.mxu0 %v904
  %1155 = vmatpush1.bf16.msra.mxu0 %v903
  %1156 = vmatprep.subr.bf16.mxu0 0
  %1157 = vmatpush2.bf16.msra.mxu0 0
  %1158 = vmatprep.subr.bf16.mxu0 0
  %1159 = vmatpush2.bf16.msra.mxu0 0
  %1160 = vmatprep.subr.bf16.mxu0 %v930
  %1161 = vmatpush2.bf16.msra.mxu0 %v929
  %1162 = vmatprep.subr.bf16.mxu0 %v928
  %1163 = vmatpush2.bf16.msra.mxu0 %v927
  %1164 = vmatprep.subr.bf16.mxu0 %v926
  %1165 = vmatpush2.bf16.msra.mxu0 %v925
  %1166 = vmatprep.subr.bf16.mxu0 %v924
  %1167 = vmatpush2.bf16.msra.mxu0 %v923
  %1168 = vmatprep.subr.bf16.mxu0 %v922
  %1169 = vmatpush2.bf16.msra.mxu0 %v921
  %1170 = vmatprep.subr.bf16.mxu0 %v920
  %1171 = vmatpush2.bf16.msra.mxu0 %v919
  %1172 = vmatprep.mubr.bf16.mxu0 %v1138
  %1173 = vmatmul.mubr.bf16.gmra.mxu0 %v357
  %v1174 = vpop.f32.mrf.mxu0
  %v1175 = vadd.f32 0.0, %v1174
  %v1176 = vpop.f32.mrf.mxu0
  %v1177 = vadd.f32 0.0, %v1176
  %v1178 = vpop.f32.mrf.mxu0
  %v1179 = vpop.f32.mrf.mxu0
  %1180 = vdwg.mxu0
  %v1181 = vadd.f32 %v1131, %v1175
  %v1182 = vadd.f32 %v1133, %v1177
  %v1183 = vadd.f32 %v1181, %v1010
  %v1184 = vadd.f32 %v1182, %v1014
  %v1185 = vmax.f32 %v1183, 0.0
  %v1186 = vmax.f32 %v1184, 0.0
  %v1187 = vpack.c.bf16 %v1185, %v1185
  %v1188 = vpack.c.bf16 %v1186, %v1186
  %v1189 = vld [vmem:[%s6 + $0x60] sm:$0xf]
  %v1190 = vld [vmem:[%s6 + $0x64] sm:$0xf]
  %v1191 = vld [vmem:[%s6 + $0x68] sm:$0xf]
  %v1192 = vld [vmem:[%s6 + $0x6c] sm:$0xf]
  %v1193 = vld [vmem:[%s6 + $0x70] sm:$0xf]
  %v1194 = vld [vmem:[%s6 + $0x74] sm:$0xf]
  %v1195 = vld [vmem:[%s6 + $0x78] sm:$0xf]
  %v1196 = vld [vmem:[%s6 + $0x7c] sm:$0xf]
  %v1197 = vld [vmem:[%s6 + $0x80] sm:$0xf]
  %v1198 = vld [vmem:[%s6 + $0x84] sm:$0xf]
  %v1199 = vld [vmem:[%s6 + $0x88] sm:$0xf]
  %v1200 = vld [vmem:[%s6 + $0x8c] sm:$0xf]
  %v1201 = vld [vmem:[%s6 + $0x90] sm:$0xf]
  %v1202 = vld [vmem:[%s6 + $0x94] sm:$0xf]
  %v1203 = vld [vmem:[%s6 + $0x98] sm:$0xf]
  %v1204 = vld [vmem:[%s6 + $0x9c] sm:$0xf]
  %v1205 = vld [vmem:[%s6 + $0xa0] sm:$0xf]
  %v1206 = vld [vmem:[%s6 + $0xa4] sm:$0xf]
  %v1207 = vld [vmem:[%s6 + $0xa8] sm:$0xf]
  %v1208 = vld [vmem:[%s6 + $0xac] sm:$0xf]
  %v1209 = vld [vmem:[%s6 + $0xb0] sm:$0xf]
  %v1210 = vld [vmem:[%s6 + $0xb4] sm:$0xf]
  %v1211 = vld [vmem:[%s6 + $0xb8] sm:$0xf]
  %v1212 = vld [vmem:[%s6 + $0xbc] sm:$0xf]
  %v1237 = vunpack.c.l.b16 %v1189
  %v1238 = vunpack.c.l.b16 %v1190
  %v1239 = vunpack.c.l.b16 %v1191
  %v1240 = vunpack.c.l.b16 %v1192
  %v1241 = vunpack.c.l.b16 %v1193
  %v1242 = vunpack.c.l.b16 %v1194
  %v1243 = vunpack.c.l.b16 %v1195
  %v1244 = vunpack.c.l.b16 %v1196
  %v1245 = vunpack.c.l.b16 %v1197
  %v1246 = vunpack.c.l.b16 %v1198
  %v1247 = vunpack.c.l.b16 %v1199
  %v1248 = vunpack.c.l.b16 %v1200
  %v1249 = vunpack.c.l.b16 %v1201
  %v1250 = vunpack.c.l.b16 %v1202
  %v1251 = vunpack.c.l.b16 %v1203
  %v1252 = vunpack.c.l.b16 %v1204
  %v1253 = vunpack.c.l.b16 %v1205
  %v1254 = vunpack.c.l.b16 %v1206
  %v1255 = vunpack.c.l.b16 %v1207
  %v1256 = vunpack.c.l.b16 %v1208
  %v1257 = vunpack.c.l.b16 %v1209
  %v1258 = vunpack.c.l.b16 %v1210
  %v1259 = vunpack.c.l.b16 %v1211
  %v1260 = vunpack.c.l.b16 %v1212
  %v1261 = vpack.c.b16 %v1238, %v1237
  %v1262 = vpack.c.b16 %v1240, %v1239
  %v1263 = vpack.c.b16 %v1242, %v1241
  %v1264 = vpack.c.b16 %v1244, %v1243
  %v1265 = vpack.c.b16 %v1246, %v1245
  %v1266 = vpack.c.b16 %v1248, %v1247
  %v1267 = vpack.c.b16 %v1250, %v1249
  %v1268 = vpack.c.b16 %v1252, %v1251
  %v1269 = vpack.c.b16 %v1254, %v1253
  %v1270 = vpack.c.b16 %v1256, %v1255
  %v1271 = vpack.c.b16 %v1258, %v1257
  %v1272 = vpack.c.b16 %v1260, %v1259
  %vm1285 = vcmask 523264
  %v1287 = vsel %vm1285, %v1188, 0
  %1289 = vmatprep.subr.bf16.mxu0 0
  %1290 = vmatpush1.bf16.msra.mxu0 %v1268
  %1291 = vmatprep.subr.bf16.mxu0 0
  %1292 = vmatpush1.bf16.msra.mxu0 %v1267
  %1293 = vmatprep.subr.bf16.mxu0 0
  %1294 = vmatpush1.bf16.msra.mxu0 %v1266
  %1295 = vmatprep.subr.bf16.mxu0 0
  %1296 = vmatpush1.bf16.msra.mxu0 %v1265
  %1297 = vmatprep.subr.bf16.mxu0 0
  %1298 = vmatpush1.bf16.msra.mxu0 %v1264
  %1299 = vmatprep.subr.bf16.mxu0 0
  %1300 = vmatpush1.bf16.msra.mxu0 %v1263
  %1301 = vmatprep.subr.bf16.mxu0 0
  %1302 = vmatpush1.bf16.msra.mxu0 %v1262
  %1303 = vmatprep.subr.bf16.mxu0 0
  %1304 = vmatpush1.bf16.msra.mxu0 %v1261
  %1305 = vmatprep.subr.bf16.mxu0 0
  %1306 = vmatpush2.bf16.msra.mxu0 0
  %1307 = vmatprep.subr.bf16.mxu0 0
  %1308 = vmatpush2.bf16.msra.mxu0 0
  %1309 = vmatprep.subr.bf16.mxu0 0
  %1310 = vmatpush2.bf16.msra.mxu0 0
  %1311 = vmatprep.subr.bf16.mxu0 0
  %1312 = vmatpush2.bf16.msra.mxu0 0
  %1313 = vmatprep.subr.bf16.mxu0 0
  %1314 = vmatpush2.bf16.msra.mxu0 %v1272
  %1315 = vmatprep.subr.bf16.mxu0 0
  %1316 = vmatpush2.bf16.msra.mxu0 %v1271
  %1317 = vmatprep.subr.bf16.mxu0 0
  %1318 = vmatpush2.bf16.msra.mxu0 %v1270
  %1319 = vmatprep.subr.bf16.mxu0 0
  %1320 = vmatpush2.bf16.msra.mxu0 %v1269
  %1321 = vmatprep.mubr.bf16.mxu0 %v1287
  %1322 = vmatmul.mubr.bf16.gmra.mxu0 %v1187
  %v1323 = vpop.f32.mrf.mxu0
  %v1324 = vadd.f32 0.0, %v1323
  %v1325 = vpop.f32.mrf.mxu0
  %v1326 = vpop.f32.mrf.mxu0
  %v1327 = vpop.f32.mrf.mxu0
  %1328 = vdwg.mxu0
  %v1353 = vunpack.c.l.b16 %v1023
  %v1354 = vunpack.c.l.b16 %v1024
  %v1355 = vunpack.c.l.b16 %v1025
  %v1356 = vunpack.c.l.b16 %v1026
  %v1357 = vunpack.c.l.b16 %v1027
  %v1358 = vunpack.c.l.b16 %v1028
  %v1359 = vunpack.c.l.b16 %v1029
  %v1360 = vunpack.c.l.b16 %v1030
  %v1361 = vunpack.c.l.b16 %v1031
  %v1362 = vunpack.c.l.b16 %v1032
  %v1363 = vunpack.c.l.b16 %v1033
  %v1364 = vunpack.c.l.b16 %v1034
  %v1365 = vunpack.c.l.b16 %v1035
  %v1366 = vunpack.c.l.b16 %v1036
  %v1367 = vunpack.c.l.b16 %v1037
  %v1368 = vunpack.c.l.b16 %v1038
  %v1369 = vunpack.c.l.b16 %v1039
  %v1370 = vunpack.c.l.b16 %v1040
  %v1371 = vunpack.c.l.b16 %v1041
  %v1372 = vunpack.c.l.b16 %v1042
  %v1373 = vunpack.c.l.b16 %v1043
  %v1374 = vunpack.c.l.b16 %v1044
  %v1375 = vunpack.c.l.b16 %v1045
  %v1376 = vunpack.c.l.b16 %v1046
  %v1377 = vpack.c.b16 %v1354, %v1353
  %v1378 = vpack.c.b16 %v1356, %v1355
  %v1379 = vpack.c.b16 %v1358, %v1357
  %v1380 = vpack.c.b16 %v1360, %v1359
  %v1381 = vpack.c.b16 %v1362, %v1361
  %v1382 = vpack.c.b16 %v1364, %v1363
  %v1383 = vpack.c.b16 %v1366, %v1365
  %v1384 = vpack.c.b16 %v1368, %v1367
  %v1385 = vpack.c.b16 %v1370, %v1369
  %v1386 = vpack.c.b16 %v1372, %v1371
  %v1387 = vpack.c.b16 %v1374, %v1373
  %v1388 = vpack.c.b16 %v1376, %v1375
  %v1402 = vsel %vm1285, %v1022, 0
  %1404 = vmatprep.subr.bf16.mxu0 0
  %1405 = vmatpush1.bf16.msra.mxu0 %v1384
  %1406 = vmatprep.subr.bf16.mxu0 0
  %1407 = vmatpush1.bf16.msra.mxu0 %v1383
  %1408 = vmatprep.subr.bf16.mxu0 0
  %1409 = vmatpush1.bf16.msra.mxu0 %v1382
  %1410 = vmatprep.subr.bf16.mxu0 0
  %1411 = vmatpush1.bf16.msra.mxu0 %v1381
  %1412 = vmatprep.subr.bf16.mxu0 0
  %1413 = vmatpush1.bf16.msra.mxu0 %v1380
  %1414 = vmatprep.subr.bf16.mxu0 0
  %1415 = vmatpush1.bf16.msra.mxu0 %v1379
  %1416 = vmatprep.subr.bf16.mxu0 0
  %1417 = vmatpush1.bf16.msra.mxu0 %v1378
  %1418 = vmatprep.subr.bf16.mxu0 0
  %1419 = vmatpush1.bf16.msra.mxu0 %v1377
  %1420 = vmatprep.subr.bf16.mxu0 0
  %1421 = vmatpush2.bf16.msra.mxu0 0
  %1422 = vmatprep.subr.bf16.mxu0 0
  %1423 = vmatpush2.bf16.msra.mxu0 0
  %1424 = vmatprep.subr.bf16.mxu0 0
  %1425 = vmatpush2.bf16.msra.mxu0 0
  %1426 = vmatprep.subr.bf16.mxu0 0
  %1427 = vmatpush2.bf16.msra.mxu0 0
  %1428 = vmatprep.subr.bf16.mxu0 0
  %1429 = vmatpush2.bf16.msra.mxu0 %v1388
  %1430 = vmatprep.subr.bf16.mxu0 0
  %1431 = vmatpush2.bf16.msra.mxu0 %v1387
  %1432 = vmatprep.subr.bf16.mxu0 0
  %1433 = vmatpush2.bf16.msra.mxu0 %v1386
  %1434 = vmatprep.subr.bf16.mxu0 0
  %1435 = vmatpush2.bf16.msra.mxu0 %v1385
  %1436 = vmatprep.mubr.bf16.mxu0 %v1402
  %1437 = vmatmul.mubr.bf16.gmra.mxu0 %v1021
  %v1438 = vpop.f32.mrf.mxu0
  %v1439 = vadd.f32 %v1324, %v1438
  %v1440 = vpop.f32.mrf.mxu0
  %v1441 = vpop.f32.mrf.mxu0
  %v1442 = vpop.f32.mrf.mxu0
  %1443 = vdwg.mxu0
  %v1446 = vrot.slane %v357, 4
  %v1447 = vrot.slane %v358, 4
  %v1450 = vsel %vm562, %v1447, 0
  %1452 = vmatprep.subr.bf16.mxu0 %v521
  %1453 = vmatpush1.bf16.msra.mxu0 %v520
  %1454 = vmatprep.subr.bf16.mxu0 %v519
  %1455 = vmatpush1.bf16.msra.mxu0 %v518
  %1456 = vmatprep.subr.bf16.mxu0 %v517
  %1457 = vmatpush1.bf16.msra.mxu0 %v516
  %1458 = vmatprep.subr.bf16.mxu0 %v515
  %1459 = vmatpush1.bf16.msra.mxu0 %v514
  %1460 = vmatprep.subr.bf16.mxu0 %v513
  %1461 = vmatpush1.bf16.msra.mxu0 %v512
  %1462 = vmatprep.subr.bf16.mxu0 %v511
  %1463 = vmatpush1.bf16.msra.mxu0 %v510
  %1464 = vmatprep.subr.bf16.mxu0 %v509
  %1465 = vmatpush1.bf16.msra.mxu0 %v508
  %1466 = vmatprep.subr.bf16.mxu0 %v507
  %1467 = vmatpush1.bf16.msra.mxu0 %v506
  %1468 = vmatprep.subr.bf16.mxu0 0
  %1469 = vmatpush2.bf16.msra.mxu0 0
  %1470 = vmatprep.subr.bf16.mxu0 0
  %1471 = vmatpush2.bf16.msra.mxu0 0
  %1472 = vmatprep.subr.bf16.mxu0 %v533
  %1473 = vmatpush2.bf16.msra.mxu0 %v532
  %1474 = vmatprep.subr.bf16.mxu0 %v531
  %1475 = vmatpush2.bf16.msra.mxu0 %v530
  %1476 = vmatprep.subr.bf16.mxu0 %v529
  %1477 = vmatpush2.bf16.msra.mxu0 %v528
  %1478 = vmatprep.subr.bf16.mxu0 %v527
  %1479 = vmatpush2.bf16.msra.mxu0 %v526
  %1480 = vmatprep.subr.bf16.mxu0 %v525
  %1481 = vmatpush2.bf16.msra.mxu0 %v524
  %1482 = vmatprep.subr.bf16.mxu0 %v523
  %1483 = vmatpush2.bf16.msra.mxu0 %v522
  %1484 = vmatprep.mubr.bf16.mxu0 %v1450
  %1485 = vmatmul.mubr.bf16.gmra.mxu0 %v1446
  %v1486 = vpop.f32.mrf.mxu0
  %v1487 = vadd.f32 0.0, %v1486
  %v1488 = vpop.f32.mrf.mxu0
  %v1489 = vadd.f32 0.0, %v1488
  %v1490 = vpop.f32.mrf.mxu0
  %v1491 = vpop.f32.mrf.mxu0
  %1492 = vdwg.mxu0
  %1493 = vmatprep.subr.bf16.mxu0 %v706
  %1494 = vmatpush1.bf16.msra.mxu0 %v705
  %1495 = vmatprep.subr.bf16.mxu0 %v704
  %1496 = vmatpush1.bf16.msra.mxu0 %v703
  %1497 = vmatprep.subr.bf16.mxu0 %v702
  %1498 = vmatpush1.bf16.msra.mxu0 %v701
  %1499 = vmatprep.subr.bf16.mxu0 %v700
  %1500 = vmatpush1.bf16.msra.mxu0 %v699
  %1501 = vmatprep.subr.bf16.mxu0 %v698
  %1502 = vmatpush1.bf16.msra.mxu0 %v697
  %1503 = vmatprep.subr.bf16.mxu0 %v696
  %1504 = vmatpush1.bf16.msra.mxu0 %v695
  %1505 = vmatprep.subr.bf16.mxu0 %v694
  %1506 = vmatpush1.bf16.msra.mxu0 %v693
  %1507 = vmatprep.subr.bf16.mxu0 %v692
  %1508 = vmatpush1.bf16.msra.mxu0 %v691
  %1509 = vmatprep.subr.bf16.mxu0 0
  %1510 = vmatpush2.bf16.msra.mxu0 0
  %1511 = vmatprep.subr.bf16.mxu0 0
  %1512 = vmatpush2.bf16.msra.mxu0 0
  %1513 = vmatprep.subr.bf16.mxu0 %v718
  %1514 = vmatpush2.bf16.msra.mxu0 %v717
  %1515 = vmatprep.subr.bf16.mxu0 %v716
  %1516 = vmatpush2.bf16.msra.mxu0 %v715
  %1517 = vmatprep.subr.bf16.mxu0 %v714
  %1518 = vmatpush2.bf16.msra.mxu0 %v713
  %1519 = vmatprep.subr.bf16.mxu0 %v712
  %1520 = vmatpush2.bf16.msra.mxu0 %v711
  %1521 = vmatprep.subr.bf16.mxu0 %v710
  %1522 = vmatpush2.bf16.msra.mxu0 %v709
  %1523 = vmatprep.subr.bf16.mxu0 %v708
  %1524 = vmatpush2.bf16.msra.mxu0 %v707
  %1525 = vmatprep.mubr.bf16.mxu0 %v1138
  %1526 = vmatmul.mubr.bf16.gmra.mxu0 %v357
  %v1527 = vpop.f32.mrf.mxu0
  %v1528 = vadd.f32 %v1487, %v1527
  %v1529 = vpop.f32.mrf.mxu0
  %v1530 = vadd.f32 %v1489, %v1529
  %v1531 = vpop.f32.mrf.mxu0
  %v1532 = vpop.f32.mrf.mxu0
  %1533 = vdwg.mxu0
  %v1535 = vsel %vm562, %v360, 0
  %1537 = vmatprep.subr.bf16.mxu0 %v918
  %1538 = vmatpush1.bf16.msra.mxu0 %v917
  %1539 = vmatprep.subr.bf16.mxu0 %v916
  %1540 = vmatpush1.bf16.msra.mxu0 %v915
  %1541 = vmatprep.subr.bf16.mxu0 %v914
  %1542 = vmatpush1.bf16.msra.mxu0 %v913
  %1543 = vmatprep.subr.bf16.mxu0 %v912
  %1544 = vmatpush1.bf16.msra.mxu0 %v911
  %1545 = vmatprep.subr.bf16.mxu0 %v910
  %1546 = vmatpush1.bf16.msra.mxu0 %v909
  %1547 = vmatprep.subr.bf16.mxu0 %v908
  %1548 = vmatpush1.bf16.msra.mxu0 %v907
  %1549 = vmatprep.subr.bf16.mxu0 %v906
  %1550 = vmatpush1.bf16.msra.mxu0 %v905
  %1551 = vmatprep.subr.bf16.mxu0 %v904
  %1552 = vmatpush1.bf16.msra.mxu0 %v903
  %1553 = vmatprep.subr.bf16.mxu0 0
  %1554 = vmatpush2.bf16.msra.mxu0 0
  %1555 = vmatprep.subr.bf16.mxu0 0
  %1556 = vmatpush2.bf16.msra.mxu0 0
  %1557 = vmatprep.subr.bf16.mxu0 %v930
  %1558 = vmatpush2.bf16.msra.mxu0 %v929
  %1559 = vmatprep.subr.bf16.mxu0 %v928
  %1560 = vmatpush2.bf16.msra.mxu0 %v927
  %1561 = vmatprep.subr.bf16.mxu0 %v926
  %1562 = vmatpush2.bf16.msra.mxu0 %v925
  %1563 = vmatprep.subr.bf16.mxu0 %v924
  %1564 = vmatpush2.bf16.msra.mxu0 %v923
  %1565 = vmatprep.subr.bf16.mxu0 %v922
  %1566 = vmatpush2.bf16.msra.mxu0 %v921
  %1567 = vmatprep.subr.bf16.mxu0 %v920
  %1568 = vmatpush2.bf16.msra.mxu0 %v919
  %1569 = vmatprep.mubr.bf16.mxu0 %v1535
  %1570 = vmatmul.mubr.bf16.gmra.mxu0 %v359
  %v1571 = vpop.f32.mrf.mxu0
  %v1572 = vadd.f32 0.0, %v1571
  %v1573 = vpop.f32.mrf.mxu0
  %v1574 = vadd.f32 0.0, %v1573
  %v1575 = vpop.f32.mrf.mxu0
  %v1576 = vpop.f32.mrf.mxu0
  %1577 = vdwg.mxu0
  %v1578 = vadd.f32 %v1528, %v1572
  %v1579 = vadd.f32 %v1530, %v1574
  %v1580 = vadd.f32 %v1578, %v1010
  %v1581 = vadd.f32 %v1579, %v1014
  %v1582 = vmax.f32 %v1580, 0.0
  %v1583 = vmax.f32 %v1581, 0.0
  %v1584 = vpack.c.bf16 %v1582, %v1582
  %v1585 = vpack.c.bf16 %v1583, %v1583
  %v1586 = vld [vmem:[%s6 + $0xc0] sm:$0xf]
  %v1587 = vld [vmem:[%s6 + $0xc4] sm:$0xf]
  %v1588 = vld [vmem:[%s6 + $0xc8] sm:$0xf]
  %v1589 = vld [vmem:[%s6 + $0xcc] sm:$0xf]
  %v1590 = vld [vmem:[%s6 + $0xd0] sm:$0xf]
  %v1591 = vld [vmem:[%s6 + $0xd4] sm:$0xf]
  %v1592 = vld [vmem:[%s6 + $0xd8] sm:$0xf]
  %v1593 = vld [vmem:[%s6 + $0xdc] sm:$0xf]
  %v1594 = vld [vmem:[%s6 + $0xe0] sm:$0xf]
  %v1595 = vld [vmem:[%s6 + $0xe4] sm:$0xf]
  %v1596 = vld [vmem:[%s6 + $0xe8] sm:$0xf]
  %v1597 = vld [vmem:[%s6 + $0xec] sm:$0xf]
  %v1598 = vld [vmem:[%s6 + $0xf0] sm:$0xf]
  %v1599 = vld [vmem:[%s6 + $0xf4] sm:$0xf]
  %v1600 = vld [vmem:[%s6 + $0xf8] sm:$0xf]
  %v1601 = vld [vmem:[%s6 + $0xfc] sm:$0xf]
  %v1602 = vld [vmem:[%s6 + $0x100] sm:$0xf]
  %v1603 = vld [vmem:[%s6 + $0x104] sm:$0xf]
  %v1604 = vld [vmem:[%s6 + $0x108] sm:$0xf]
  %v1605 = vld [vmem:[%s6 + $0x10c] sm:$0xf]
  %v1606 = vld [vmem:[%s6 + $0x110] sm:$0xf]
  %v1607 = vld [vmem:[%s6 + $0x114] sm:$0xf]
  %v1608 = vld [vmem:[%s6 + $0x118] sm:$0xf]
  %v1609 = vld [vmem:[%s6 + $0x11c] sm:$0xf]
  %v1634 = vunpack.c.l.b16 %v1586
  %v1635 = vunpack.c.l.b16 %v1587
  %v1636 = vunpack.c.l.b16 %v1588
  %v1637 = vunpack.c.l.b16 %v1589
  %v1638 = vunpack.c.l.b16 %v1590
  %v1639 = vunpack.c.l.b16 %v1591
  %v1640 = vunpack.c.l.b16 %v1592
  %v1641 = vunpack.c.l.b16 %v1593
  %v1642 = vunpack.c.l.b16 %v1594
  %v1643 = vunpack.c.l.b16 %v1595
  %v1644 = vunpack.c.l.b16 %v1596
  %v1645 = vunpack.c.l.b16 %v1597
  %v1646 = vunpack.c.l.b16 %v1598
  %v1647 = vunpack.c.l.b16 %v1599
  %v1648 = vunpack.c.l.b16 %v1600
  %v1649 = vunpack.c.l.b16 %v1601
  %v1650 = vunpack.c.l.b16 %v1602
  %v1651 = vunpack.c.l.b16 %v1603
  %v1652 = vunpack.c.l.b16 %v1604
  %v1653 = vunpack.c.l.b16 %v1605
  %v1654 = vunpack.c.l.b16 %v1606
  %v1655 = vunpack.c.l.b16 %v1607
  %v1656 = vunpack.c.l.b16 %v1608
  %v1657 = vunpack.c.l.b16 %v1609
  %v1658 = vpack.c.b16 %v1635, %v1634
  %v1659 = vpack.c.b16 %v1637, %v1636
  %v1660 = vpack.c.b16 %v1639, %v1638
  %v1661 = vpack.c.b16 %v1641, %v1640
  %v1662 = vpack.c.b16 %v1643, %v1642
  %v1663 = vpack.c.b16 %v1645, %v1644
  %v1664 = vpack.c.b16 %v1647, %v1646
  %v1665 = vpack.c.b16 %v1649, %v1648
  %v1666 = vpack.c.b16 %v1651, %v1650
  %v1667 = vpack.c.b16 %v1653, %v1652
  %v1668 = vpack.c.b16 %v1655, %v1654
  %v1669 = vpack.c.b16 %v1657, %v1656
  %v1683 = vsel %vm1285, %v1585, 0
  %1685 = vmatprep.subr.bf16.mxu0 0
  %1686 = vmatpush1.bf16.msra.mxu0 %v1665
  %1687 = vmatprep.subr.bf16.mxu0 0
  %1688 = vmatpush1.bf16.msra.mxu0 %v1664
  %1689 = vmatprep.subr.bf16.mxu0 0
  %1690 = vmatpush1.bf16.msra.mxu0 %v1663
  %1691 = vmatprep.subr.bf16.mxu0 0
  %1692 = vmatpush1.bf16.msra.mxu0 %v1662
  %1693 = vmatprep.subr.bf16.mxu0 0
  %1694 = vmatpush1.bf16.msra.mxu0 %v1661
  %1695 = vmatprep.subr.bf16.mxu0 0
  %1696 = vmatpush1.bf16.msra.mxu0 %v1660
  %1697 = vmatprep.subr.bf16.mxu0 0
  %1698 = vmatpush1.bf16.msra.mxu0 %v1659
  %1699 = vmatprep.subr.bf16.mxu0 0
  %1700 = vmatpush1.bf16.msra.mxu0 %v1658
  %1701 = vmatprep.subr.bf16.mxu0 0
  %1702 = vmatpush2.bf16.msra.mxu0 0
  %1703 = vmatprep.subr.bf16.mxu0 0
  %1704 = vmatpush2.bf16.msra.mxu0 0
  %1705 = vmatprep.subr.bf16.mxu0 0
  %1706 = vmatpush2.bf16.msra.mxu0 0
  %1707 = vmatprep.subr.bf16.mxu0 0
  %1708 = vmatpush2.bf16.msra.mxu0 0
  %1709 = vmatprep.subr.bf16.mxu0 0
  %1710 = vmatpush2.bf16.msra.mxu0 %v1669
  %1711 = vmatprep.subr.bf16.mxu0 0
  %1712 = vmatpush2.bf16.msra.mxu0 %v1668
  %1713 = vmatprep.subr.bf16.mxu0 0
  %1714 = vmatpush2.bf16.msra.mxu0 %v1667
  %1715 = vmatprep.subr.bf16.mxu0 0
  %1716 = vmatpush2.bf16.msra.mxu0 %v1666
  %1717 = vmatprep.mubr.bf16.mxu0 %v1683
  %1718 = vmatmul.mubr.bf16.gmra.mxu0 %v1584
  %v1719 = vpop.f32.mrf.mxu0
  %v1720 = vadd.f32 0.0, %v1719
  %v1721 = vpop.f32.mrf.mxu0
  %v1722 = vpop.f32.mrf.mxu0
  %v1723 = vpop.f32.mrf.mxu0
  %1724 = vdwg.mxu0
  %v1725 = vadd.f32 %v1439, %v1720
  %v1726 = vld [vmem:[%s7] sm:$0x1]
  %v1728 = vlaneseq
  %v1729 = vshrl.u32 %v1728, 7
  %v1730 = vsub.s32 0, %v1729
  %v1731 = vrot.slane %v1726, %v1730
  %v1733 = vadd.f32 %v1725, %v1731
  %v1734 = vmax.f32 %v1733, 0.0
  %v1735 = vpack.c.bf16 %v1734, %v1734
  %v1736 = vld [vmem:[%s8] sm:$0xff]
  %v1737 = vld [vmem:[%s8 + $0x8] sm:$0xf]
  %v1738 = vld [vmem:[%s8 + $0xc] sm:$0xff]
  %v1739 = vld [vmem:[%s8 + $0x14] sm:$0xf]
  %v1740 = vld [vmem:[%s8 + $0x18] sm:$0xff]
  %v1741 = vld [vmem:[%s8 + $0x20] sm:$0xf]
  %v1742 = vld [vmem:[%s8 + $0x24] sm:$0xff]
  %v1743 = vld [vmem:[%s8 + $0x2c] sm:$0xf]
  %v1744 = vld [vmem:[%s8 + $0x30] sm:$0xff]
  %v1745 = vld [vmem:[%s8 + $0x38] sm:$0xf]
  %v1746 = vld [vmem:[%s8 + $0x3c] sm:$0xff]
  %v1747 = vld [vmem:[%s8 + $0x44] sm:$0xf]
  %v1748 = vld [vmem:[%s8 + $0x48] sm:$0xff]
  %v1749 = vld [vmem:[%s8 + $0x50] sm:$0xf]
  %v1750 = vld [vmem:[%s8 + $0x54] sm:$0xff]
  %v1751 = vld [vmem:[%s8 + $0x5c] sm:$0xf]
  %v1752 = vld [vmem:[%s1] sm:$0xf]
  %v1753 = vld [vmem:[%s9] sm:$0xff]
  %v1754 = vld [vmem:[%s9 + $0x8] sm:$0xf]
  %v1757 = vunpack.c.l.b16 %v1753
  %v1758 = vunpack.c.h.b16 %v1753
  %v1759 = vunpack.c.l.b16 %v1754
  %v1760 = vpack.c.b16 %v1757, %v1757
  %v1761 = vpack.c.b16 %v1758, %v1758
  %v1762 = vpack.c.b16 %v1759, %v1759
  %vm1763 = vcmask 64512
  %v1765 = vsel %vm1763, %v1752, 0
  %vm1767 = vcmask 1043456
  %v1769 = vsel %vm1767, %v1760, 0
  %v1772 = vsel %vm1767, %v1761, 0
  %v1775 = vsel %vm1767, %v1762, 0
  %1777 = vmatprep.subr.bf16.mxu0 0
  %1778 = vmatpush1.bf16.msra.mxu0 0
  %1779 = vmatprep.subr.bf16.mxu0 0
  %1780 = vmatpush1.bf16.msra.mxu0 0
  %1781 = vmatprep.subr.bf16.mxu0 0
  %1782 = vmatpush1.bf16.msra.mxu0 0
  %1783 = vmatprep.subr.bf16.mxu0 0
  %1784 = vmatpush1.bf16.msra.mxu0 0
  %1785 = vmatprep.subr.bf16.mxu0 0
  %1786 = vmatpush1.bf16.msra.mxu0 0
  %1787 = vmatprep.subr.bf16.mxu0 0
  %1788 = vmatpush1.bf16.msra.mxu0 0
  %1789 = vmatprep.subr.bf16.mxu0 0
  %1790 = vmatpush1.bf16.msra.mxu0 0
  %1791 = vmatprep.subr.bf16.mxu0 %v1772
  %1792 = vmatpush1.bf16.msra.mxu0 %v1769
  %1793 = vmatprep.subr.bf16.mxu0 0
  %1794 = vmatpush2.bf16.msra.mxu0 0
  %1795 = vmatprep.subr.bf16.mxu0 0
  %1796 = vmatpush2.bf16.msra.mxu0 0
  %1797 = vmatprep.subr.bf16.mxu0 0
  %1798 = vmatpush2.bf16.msra.mxu0 0
  %1799 = vmatprep.subr.bf16.mxu0 0
  %1800 = vmatpush2.bf16.msra.mxu0 0
  %1801 = vmatprep.subr.bf16.mxu0 0
  %1802 = vmatpush2.bf16.msra.mxu0 0
  %1803 = vmatprep.subr.bf16.mxu0 0
  %1804 = vmatpush2.bf16.msra.mxu0 0
  %1805 = vmatprep.subr.bf16.mxu0 0
  %1806 = vmatpush2.bf16.msra.mxu0 0
  %1807 = vmatprep.subr.bf16.mxu0 0
  %1808 = vmatpush2.bf16.msra.mxu0 0
  %1809 = vmatprep.mubr.bf16.mxu0 0
  %1810 = vmatmul.mubr.bf16.gmra.mxu0 %v1765
  %v1811 = vpop.f32.mrf.mxu0
  %v1812 = vadd.f32 0.0, %v1811
  %v1813 = vpop.f32.mrf.mxu0
  %v1814 = vadd.f32 0.0, %v1813
  %v1815 = vpop.f32.mrf.mxu0
  %v1816 = vpop.f32.mrf.mxu0
  %1817 = vdwg.mxu0
  %1818 = vmatprep.subr.bf16.mxu0 0
  %1819 = vmatpush1.bf16.msra.mxu0 0
  %1820 = vmatprep.subr.bf16.mxu0 0
  %1821 = vmatpush1.bf16.msra.mxu0 0
  %1822 = vmatprep.subr.bf16.mxu0 0
  %1823 = vmatpush1.bf16.msra.mxu0 0
  %1824 = vmatprep.subr.bf16.mxu0 0
  %1825 = vmatpush1.bf16.msra.mxu0 0
  %1826 = vmatprep.subr.bf16.mxu0 0
  %1827 = vmatpush1.bf16.msra.mxu0 0
  %1828 = vmatprep.subr.bf16.mxu0 0
  %1829 = vmatpush1.bf16.msra.mxu0 0
  %1830 = vmatprep.subr.bf16.mxu0 0
  %1831 = vmatpush1.bf16.msra.mxu0 0
  %1832 = vmatprep.subr.bf16.mxu0 0
  %1833 = vmatpush1.bf16.msra.mxu0 %v1775
  %1834 = vmatprep.subr.bf16.mxu0 0
  %1835 = vmatpush2.bf16.msra.mxu0 0
  %1836 = vmatprep.subr.bf16.mxu0 0
  %1837 = vmatpush2.bf16.msra.mxu0 0
  %1838 = vmatprep.subr.bf16.mxu0 0
  %1839 = vmatpush2.bf16.msra.mxu0 0
  %1840 = vmatprep.subr.bf16.mxu0 0
  %1841 = vmatpush2.bf16.msra.mxu0 0
  %1842 = vmatprep.subr.bf16.mxu0 0
  %1843 = vmatpush2.bf16.msra.mxu0 0
  %1844 = vmatprep.subr.bf16.mxu0 0
  %1845 = vmatpush2.bf16.msra.mxu0 0
  %1846 = vmatprep.subr.bf16.mxu0 0
  %1847 = vmatpush2.bf16.msra.mxu0 0
  %1848 = vmatprep.subr.bf16.mxu0 0
  %1849 = vmatpush2.bf16.msra.mxu0 0
  %1850 = vmatprep.mubr.bf16.mxu0 0
  %1851 = vmatmul.mubr.bf16.gmra.mxu0 %v1765
  %v1852 = vpop.f32.mrf.mxu0
  %v1853 = vadd.f32 0.0, %v1852
  %v1854 = vpop.f32.mrf.mxu0
  %v1855 = vpop.f32.mrf.mxu0
  %v1856 = vpop.f32.mrf.mxu0
  %1857 = vdwg.mxu0
  %v1874 = vunpack.c.l.b16 %v1736
  %v1875 = vunpack.c.h.b16 %v1736
  %v1876 = vunpack.c.l.b16 %v1737
  %v1877 = vunpack.c.l.b16 %v1738
  %v1878 = vunpack.c.h.b16 %v1738
  %v1879 = vunpack.c.l.b16 %v1739
  %v1880 = vunpack.c.l.b16 %v1740
  %v1881 = vunpack.c.h.b16 %v1740
  %v1882 = vunpack.c.l.b16 %v1741
  %v1883 = vunpack.c.l.b16 %v1742
  %v1884 = vunpack.c.h.b16 %v1742
  %v1885 = vunpack.c.l.b16 %v1743
  %v1886 = vunpack.c.l.b16 %v1744
  %v1887 = vunpack.c.h.b16 %v1744
  %v1888 = vunpack.c.l.b16 %v1745
  %v1889 = vunpack.c.l.b16 %v1746
  %v1890 = vunpack.c.h.b16 %v1746
  %v1891 = vunpack.c.l.b16 %v1747
  %v1892 = vunpack.c.l.b16 %v1748
  %v1893 = vunpack.c.h.b16 %v1748
  %v1894 = vunpack.c.l.b16 %v1749
  %v1895 = vunpack.c.l.b16 %v1750
  %v1896 = vunpack.c.h.b16 %v1750
  %v1897 = vunpack.c.l.b16 %v1751
  %v1898 = vpack.c.b16 %v1877, %v1874
  %v1899 = vpack.c.b16 %v1878, %v1875
  %v1900 = vpack.c.b16 %v1879, %v1876
  %v1901 = vpack.c.b16 %v1883, %v1880
  %v1902 = vpack.c.b16 %v1884, %v1881
  %v1903 = vpack.c.b16 %v1885, %v1882
  %v1904 = vpack.c.b16 %v1889, %v1886
  %v1905 = vpack.c.b16 %v1890, %v1887
  %v1906 = vpack.c.b16 %v1891, %v1888
  %v1907 = vpack.c.b16 %v1895, %v1892
  %v1908 = vpack.c.b16 %v1896, %v1893
  %v1909 = vpack.c.b16 %v1897, %v1894
  %v1923 = vsel %vm1285, %v1735, 0
  %1925 = vmatprep.subr.bf16.mxu0 0
  %1926 = vmatpush1.bf16.msra.mxu0 0
  %1927 = vmatprep.subr.bf16.mxu0 0
  %1928 = vmatpush1.bf16.msra.mxu0 0
  %1929 = vmatprep.subr.bf16.mxu0 0
  %1930 = vmatpush1.bf16.msra.mxu0 0
  %1931 = vmatprep.subr.bf16.mxu0 0
  %1932 = vmatpush1.bf16.msra.mxu0 0
  %1933 = vmatprep.subr.bf16.mxu0 %v1908
  %1934 = vmatpush1.bf16.msra.mxu0 %v1907
  %1935 = vmatprep.subr.bf16.mxu0 %v1905
  %1936 = vmatpush1.bf16.msra.mxu0 %v1904
  %1937 = vmatprep.subr.bf16.mxu0 %v1902
  %1938 = vmatpush1.bf16.msra.mxu0 %v1901
  %1939 = vmatprep.subr.bf16.mxu0 %v1899
  %1940 = vmatpush1.bf16.msra.mxu0 %v1898
  %1941 = vmatprep.subr.bf16.mxu0 0
  %1942 = vmatpush2.bf16.msra.mxu0 0
  %1943 = vmatprep.subr.bf16.mxu0 0
  %1944 = vmatpush2.bf16.msra.mxu0 0
  %1945 = vmatprep.subr.bf16.mxu0 0
  %1946 = vmatpush2.bf16.msra.mxu0 0
  %1947 = vmatprep.subr.bf16.mxu0 0
  %1948 = vmatpush2.bf16.msra.mxu0 0
  %1949 = vmatprep.subr.bf16.mxu0 0
  %1950 = vmatpush2.bf16.msra.mxu0 0
  %1951 = vmatprep.subr.bf16.mxu0 0
  %1952 = vmatpush2.bf16.msra.mxu0 0
  %1953 = vmatprep.subr.bf16.mxu0 0
  %1954 = vmatpush2.bf16.msra.mxu0 0
  %1955 = vmatprep.subr.bf16.mxu0 0
  %1956 = vmatpush2.bf16.msra.mxu0 0
  %1957 = vmatprep.mubr.bf16.mxu0 0
  %1958 = vmatmul.mubr.bf16.gmra.mxu0 %v1923
  %v1959 = vpop.f32.mrf.mxu0
  %v1960 = vadd.f32 %v1812, %v1959
  %v1961 = vpop.f32.mrf.mxu0
  %v1962 = vadd.f32 %v1814, %v1961
  %v1963 = vpop.f32.mrf.mxu0
  %v1964 = vpop.f32.mrf.mxu0
  %1965 = vdwg.mxu0
  %1966 = vmatprep.subr.bf16.mxu0 0
  %1967 = vmatpush1.bf16.msra.mxu0 0
  %1968 = vmatprep.subr.bf16.mxu0 0
  %1969 = vmatpush1.bf16.msra.mxu0 0
  %1970 = vmatprep.subr.bf16.mxu0 0
  %1971 = vmatpush1.bf16.msra.mxu0 0
  %1972 = vmatprep.subr.bf16.mxu0 0
  %1973 = vmatpush1.bf16.msra.mxu0 0
  %1974 = vmatprep.subr.bf16.mxu0 0
  %1975 = vmatpush1.bf16.msra.mxu0 %v1909
  %1976 = vmatprep.subr.bf16.mxu0 0
  %1977 = vmatpush1.bf16.msra.mxu0 %v1906
  %1978 = vmatprep.subr.bf16.mxu0 0
  %1979 = vmatpush1.bf16.msra.mxu0 %v1903
  %1980 = vmatprep.subr.bf16.mxu0 0
  %1981 = vmatpush1.bf16.msra.mxu0 %v1900
  %1982 = vmatprep.subr.bf16.mxu0 0
  %1983 = vmatpush2.bf16.msra.mxu0 0
  %1984 = vmatprep.subr.bf16.mxu0 0
  %1985 = vmatpush2.bf16.msra.mxu0 0
  %1986 = vmatprep.subr.bf16.mxu0 0
  %1987 = vmatpush2.bf16.msra.mxu0 0
  %1988 = vmatprep.subr.bf16.mxu0 0
  %1989 = vmatpush2.bf16.msra.mxu0 0
  %1990 = vmatprep.subr.bf16.mxu0 0
  %1991 = vmatpush2.bf16.msra.mxu0 0
  %1992 = vmatprep.subr.bf16.mxu0 0
  %1993 = vmatpush2.bf16.msra.mxu0 0
  %1994 = vmatprep.subr.bf16.mxu0 0
  %1995 = vmatpush2.bf16.msra.mxu0 0
  %1996 = vmatprep.subr.bf16.mxu0 0
  %1997 = vmatpush2.bf16.msra.mxu0 0
  %1998 = vmatprep.mubr.bf16.mxu0 0
  %1999 = vmatmul.mubr.bf16.gmra.mxu0 %v1923
  %v2000 = vpop.f32.mrf.mxu0
  %v2001 = vadd.f32 %v1853, %v2000
  %v2002 = vpop.f32.mrf.mxu0
  %v2003 = vpop.f32.mrf.mxu0
  %v2004 = vpop.f32.mrf.mxu0
  %2005 = vdwg.mxu0
  %v2006 = vld [vmem:[%s10] sm:$0x7]
  %v2008 = vlaneseq
  %v2009 = vshrl.u32 %v2008, 7
  %v2010 = vsub.s32 0, %v2009
  %v2011 = vrot.slane %v2006, %v2010
  %v2012 = vlaneseq
  %v2013 = vshrl.u32 %v2012, 7
  %v2014 = vsub.s32 1, %v2013
  %v2015 = vrot.slane %v2006, %v2014
  %v2016 = vlaneseq
  %v2017 = vshrl.u32 %v2016, 7
  %v2018 = vsub.s32 2, %v2017
  %v2019 = vrot.slane %v2006, %v2018
  %v2023 = vadd.f32 %v1960, %v2011
  %v2024 = vadd.f32 %v1962, %v2015
  %v2025 = vadd.f32 %v2001, %v2019
  %2026 = vst [vmem:[#allocation2] sm:$0xff] %v2023
  %2027 = vst [vmem:[#allocation2 + $0x8] sm:$0xff] %v2024
  %2028 = vst [vmem:[#allocation2 + $0x10] sm:$0xff] %v2025
  %v2029 = vlaneseq
  %v2030 = vshrl.u32 %v2029, 7
  %s2031 = smul.u32 0, 3
  %s2032 = smul.addr %s2031, 8
  %s2033 = scalar_lea.vmem [#allocation2], %s2032
  %v2034 = vld [vmem:[%s2033] sm:$0xff]
  %v2035 = vld [vmem:[%s2033 + $0x8] sm:$0xff]
  %v2036 = vld [vmem:[%s2033 + $0x10] sm:$0xff]
  %v2037 = vld [vmem:[%s11] sm:$0xff]
  %v2038 = vld [vmem:[%s11 + $0x8] sm:$0xff]
  %v2039 = vld [vmem:[%s11 + $0x10] sm:$0xff]
  %v2040 = vld [vmem:[%s11 + $0x18] sm:$0xff]
  %v2041 = vld [vmem:[%s11 + $0x20] sm:$0xff]
  %v2042 = vld [vmem:[%s11 + $0x28] sm:$0xff]
  %v2043 = vld [vmem:[%s11 + $0x30] sm:$0xff]
  %v2044 = vld [vmem:[%s11 + $0x38] sm:$0xff]
  %v2045 = vld [vmem:[%s11 + $0x40] sm:$0xff]
  %v2046 = vld [vmem:[%s11 + $0x48] sm:$0xff]
  %v2047 = vld [vmem:[%s11 + $0x50] sm:$0xff]
  %v2048 = vld [vmem:[%s11 + $0x58] sm:$0xff]
  %v2049 = vld [vmem:[%s11 + $0x60] sm:$0xff]
  %v2050 = vld [vmem:[%s11 + $0x68] sm:$0xff]
  %v2051 = vld [vmem:[%s11 + $0x70] sm:$0xff]
  %v2052 = vld [vmem:[%s11 + $0x78] sm:$0xff]
  %v2053 = vld [vmem:[%s11 + $0x80] sm:$0xff]
  %v2054 = vld [vmem:[%s11 + $0x88] sm:$0xff]
  %v2055 = vld [vmem:[%s11 + $0x90] sm:$0xff]
  %v2056 = vld [vmem:[%s11 + $0x98] sm:$0xff]
  %v2057 = vld [vmem:[%s11 + $0xa0] sm:$0xff]
  %v2058 = vld [vmem:[%s11 + $0xa8] sm:$0xff]
  %v2059 = vld [vmem:[%s11 + $0xb0] sm:$0xff]
  %v2060 = vld [vmem:[%s11 + $0xb8] sm:$0xff]
  %v2061 = vld [vmem:[%s12] sm:$0x7]
  %v2063 = vlaneseq
  %v2064 = vshrl.u32 %v2063, 7
  %v2065 = vsub.s32 0, %v2064
  %v2066 = vrot.slane %v2061, %v2065
  %v2067 = vlaneseq
  %v2068 = vshrl.u32 %v2067, 7
  %v2069 = vsub.s32 1, %v2068
  %v2070 = vrot.slane %v2061, %v2069
  %v2071 = vlaneseq
  %v2072 = vshrl.u32 %v2071, 7
  %v2073 = vsub.s32 2, %v2072
  %v2074 = vrot.slane %v2061, %v2073
  %v2079 = vsel %vm1285, 0.0, 0
  %2081 = vmatprep.subr.mxu0 0.0
  %2082 = vmatpush1.msra.mxu0 0.0
  %2083 = vmatprep.subr.mxu0 0.0
  %2084 = vmatpush1.msra.mxu0 0.0
  %2085 = vmatprep.subr.mxu0 0.0
  %2086 = vmatpush1.msra.mxu0 0.0
  %2087 = vmatprep.subr.mxu0 0.0
  %2088 = vmatpush1.msra.mxu0 0.0
  %2089 = vmatprep.subr.mxu0 0.0
  %2090 = vmatpush1.msra.mxu0 0.0
  %2091 = vmatprep.subr.mxu0 0.0
  %2092 = vmatpush1.msra.mxu0 0.0
  %2093 = vmatprep.subr.mxu0 0.0
  %2094 = vmatpush1.msra.mxu0 0.0
  %2095 = vmatprep.subr.mxu0 0.0
  %2096 = vmatpush1.msra.mxu0 0.0
  %2097 = vmatprep.subr.mxu0 %v2059
  %2098 = vmatpush1.msra.mxu0 %v2058
  %2099 = vmatprep.subr.mxu0 %v2056
  %2100 = vmatpush1.msra.mxu0 %v2055
  %2101 = vmatprep.subr.mxu0 %v2053
  %2102 = vmatpush1.msra.mxu0 %v2052
  %2103 = vmatprep.subr.mxu0 %v2050
  %2104 = vmatpush1.msra.mxu0 %v2049
  %2105 = vmatprep.subr.mxu0 %v2047
  %2106 = vmatpush1.msra.mxu0 %v2046
  %2107 = vmatprep.subr.mxu0 %v2044
  %2108 = vmatpush1.msra.mxu0 %v2043
  %2109 = vmatprep.subr.mxu0 %v2041
  %2110 = vmatpush1.msra.mxu0 %v2040
  %2111 = vmatprep.subr.mxu0 %v2038
  %2112 = vmatpush1.msra.mxu0 %v2037
  %2113 = vmatprep.subr.mxu0 0.0
  %2114 = vmatpush2.msra.mxu0 0.0
  %2115 = vmatprep.subr.mxu0 0.0
  %2116 = vmatpush2.msra.mxu0 0.0
  %2117 = vmatprep.subr.mxu0 0.0
  %2118 = vmatpush2.msra.mxu0 0.0
  %2119 = vmatprep.subr.mxu0 0.0
  %2120 = vmatpush2.msra.mxu0 0.0
  %2121 = vmatprep.subr.mxu0 0.0
  %2122 = vmatpush2.msra.mxu0 0.0
  %2123 = vmatprep.subr.mxu0 0.0
  %2124 = vmatpush2.msra.mxu0 0.0
  %2125 = vmatprep.subr.mxu0 0.0
  %2126 = vmatpush2.msra.mxu0 0.0
  %2127 = vmatprep.subr.mxu0 0.0
  %2128 = vmatpush2.msra.mxu0 0.0
  %2129 = vmatprep.subr.mxu0 0.0
  %2130 = vmatpush2.msra.mxu0 0.0
  %2131 = vmatprep.subr.mxu0 0.0
  %2132 = vmatpush2.msra.mxu0 0.0
  %2133 = vmatprep.subr.mxu0 0.0
  %2134 = vmatpush2.msra.mxu0 0.0
  %2135 = vmatprep.subr.mxu0 0.0
  %2136 = vmatpush2.msra.mxu0 0.0
  %2137 = vmatprep.subr.mxu0 0.0
  %2138 = vmatpush2.msra.mxu0 0.0
  %2139 = vmatprep.subr.mxu0 0.0
  %2140 = vmatpush2.msra.mxu0 0.0
  %2141 = vmatprep.subr.mxu0 0.0
  %2142 = vmatpush2.msra.mxu0 0.0
  %2143 = vmatprep.subr.mxu0 0.0
  %2144 = vmatpush2.msra.mxu0 0.0
  %2145 = vmatprep.mubr.f32.mxu0 0.0
  %2146 = vmatmul.mubr.f32.gmra.mxu0 %v2079
  %v2147 = vpop.f32.mrf.mxu0
  %v2148 = vadd.f32 %v2066, %v2147
  %v2149 = vpop.f32.mrf.mxu0
  %v2150 = vadd.f32 %v2070, %v2149
  %2151 = vdwg.mxu0
  %2152 = vmatprep.subr.mxu0 0.0
  %2153 = vmatpush1.msra.mxu0 0.0
  %2154 = vmatprep.subr.mxu0 0.0
  %2155 = vmatpush1.msra.mxu0 0.0
  %2156 = vmatprep.subr.mxu0 0.0
  %2157 = vmatpush1.msra.mxu0 0.0
  %2158 = vmatprep.subr.mxu0 0.0
  %2159 = vmatpush1.msra.mxu0 0.0
  %2160 = vmatprep.subr.mxu0 0.0
  %2161 = vmatpush1.msra.mxu0 0.0
  %2162 = vmatprep.subr.mxu0 0.0
  %2163 = vmatpush1.msra.mxu0 0.0
  %2164 = vmatprep.subr.mxu0 0.0
  %2165 = vmatpush1.msra.mxu0 0.0
  %2166 = vmatprep.subr.mxu0 0.0
  %2167 = vmatpush1.msra.mxu0 0.0
  %2168 = vmatprep.subr.mxu0 0.0
  %2169 = vmatpush1.msra.mxu0 %v2060
  %2170 = vmatprep.subr.mxu0 0.0
  %2171 = vmatpush1.msra.mxu0 %v2057
  %2172 = vmatprep.subr.mxu0 0.0
  %2173 = vmatpush1.msra.mxu0 %v2054
  %2174 = vmatprep.subr.mxu0 0.0
  %2175 = vmatpush1.msra.mxu0 %v2051
  %2176 = vmatprep.subr.mxu0 0.0
  %2177 = vmatpush1.msra.mxu0 %v2048
  %2178 = vmatprep.subr.mxu0 0.0
  %2179 = vmatpush1.msra.mxu0 %v2045
  %2180 = vmatprep.subr.mxu0 0.0
  %2181 = vmatpush1.msra.mxu0 %v2042
  %2182 = vmatprep.subr.mxu0 0.0
  %2183 = vmatpush1.msra.mxu0 %v2039
  %2184 = vmatprep.subr.mxu0 0.0
  %2185 = vmatpush2.msra.mxu0 0.0
  %2186 = vmatprep.subr.mxu0 0.0
  %2187 = vmatpush2.msra.mxu0 0.0
  %2188 = vmatprep.subr.mxu0 0.0
  %2189 = vmatpush2.msra.mxu0 0.0
  %2190 = vmatprep.subr.mxu0 0.0
  %2191 = vmatpush2.msra.mxu0 0.0
  %2192 = vmatprep.subr.mxu0 0.0
  %2193 = vmatpush2.msra.mxu0 0.0
  %2194 = vmatprep.subr.mxu0 0.0
  %2195 = vmatpush2.msra.mxu0 0.0
  %2196 = vmatprep.subr.mxu0 0.0
  %2197 = vmatpush2.msra.mxu0 0.0
  %2198 = vmatprep.subr.mxu0 0.0
  %2199 = vmatpush2.msra.mxu0 0.0
  %2200 = vmatprep.subr.mxu0 0.0
  %2201 = vmatpush2.msra.mxu0 0.0
  %2202 = vmatprep.subr.mxu0 0.0
  %2203 = vmatpush2.msra.mxu0 0.0
  %2204 = vmatprep.subr.mxu0 0.0
  %2205 = vmatpush2.msra.mxu0 0.0
  %2206 = vmatprep.subr.mxu0 0.0
  %2207 = vmatpush2.msra.mxu0 0.0
  %2208 = vmatprep.subr.mxu0 0.0
  %2209 = vmatpush2.msra.mxu0 0.0
  %2210 = vmatprep.subr.mxu0 0.0
  %2211 = vmatpush2.msra.mxu0 0.0
  %2212 = vmatprep.subr.mxu0 0.0
  %2213 = vmatpush2.msra.mxu0 0.0
  %2214 = vmatprep.subr.mxu0 0.0
  %2215 = vmatpush2.msra.mxu0 0.0
  %2216 = vmatprep.mubr.f32.mxu0 0.0
  %2217 = vmatmul.mubr.f32.gmra.mxu0 %v2079
  %v2218 = vpop.f32.mrf.mxu0
  %v2219 = vadd.f32 %v2074, %v2218
  %v2220 = vpop.f32.mrf.mxu0
  %2221 = vdwg.mxu0
  %v2222 = vadd.f32 %v2034, %v2148
  %v2223 = vxor.u32 %v2222, 2147483648
  %v2224 = vmul.f32 %v2223, 1.442695
  %v2225 = vpow.pop %v2224
  %v2226 = vadd.f32 %v2225, 1.0
  %v2227 = vrcp.pop %v2226
  %v2228 = vmul.f32 1.0, %v2227
  %v2229 = vadd.f32 %v2035, %v2150
  %v2230 = vxor.u32 %v2229, 2147483648
  %v2231 = vmul.f32 %v2230, 1.442695
  %v2232 = vpow.pop %v2231
  %v2233 = vadd.f32 %v2232, 1.0
  %v2234 = vrcp.pop %v2233
  %v2235 = vmul.f32 1.0, %v2234
  %v2236 = vmul.f32 %v2228, %v2219
  %v2237 = vadd.f32 %v2036, %v2236
  %v2238 = vtanh.pop %v2237
  %v2239 = vsub.f32 1.0, %v2235
  %v2240 = vmul.f32 %v2239, %v2238
  %v2241 = vmul.f32 %v2235, 0.0
  %v2242 = vadd.f32 %v2240, %v2241
  %vm2243 = vcmp.eq.s32.totalorder %v2030, 0
  %v2244 = vsel %vm2243, 1, 0
  %vm2245 = vcmp.eq.s32.totalorder %v2244, 1
  %v2246 = vlaneseq
  %v2247 = vshrl.u32 %v2246, 7
  %v2248 = vsub.s32 0, %v2247
  %v2249 = vrot.slane %v2242, %v2248
  %v2250 = vsel %vm2245, %v2249, 0.0
  %v2251 = vadd.f32 %v2250, 0.0
  %v2253 = vsel %vm1285, %v2242, 0
  %2255 = vmatprep.subr.mxu0 0.0
  %2256 = vmatpush1.msra.mxu0 0.0
  %2257 = vmatprep.subr.mxu0 0.0
  %2258 = vmatpush1.msra.mxu0 0.0
  %2259 = vmatprep.subr.mxu0 0.0
  %2260 = vmatpush1.msra.mxu0 0.0
  %2261 = vmatprep.subr.mxu0 0.0
  %2262 = vmatpush1.msra.mxu0 0.0
  %2263 = vmatprep.subr.mxu0 0.0
  %2264 = vmatpush1.msra.mxu0 0.0
  %2265 = vmatprep.subr.mxu0 0.0
  %2266 = vmatpush1.msra.mxu0 0.0
  %2267 = vmatprep.subr.mxu0 0.0
  %2268 = vmatpush1.msra.mxu0 0.0
  %2269 = vmatprep.subr.mxu0 0.0
  %2270 = vmatpush1.msra.mxu0 0.0
  %2271 = vmatprep.subr.mxu0 %v2059
  %2272 = vmatpush1.msra.mxu0 %v2058
  %2273 = vmatprep.subr.mxu0 %v2056
  %2274 = vmatpush1.msra.mxu0 %v2055
  %2275 = vmatprep.subr.mxu0 %v2053
  %2276 = vmatpush1.msra.mxu0 %v2052
  %2277 = vmatprep.subr.mxu0 %v2050
  %2278 = vmatpush1.msra.mxu0 %v2049
  %2279 = vmatprep.subr.mxu0 %v2047
  %2280 = vmatpush1.msra.mxu0 %v2046
  %2281 = vmatprep.subr.mxu0 %v2044
  %2282 = vmatpush1.msra.mxu0 %v2043
  %2283 = vmatprep.subr.mxu0 %v2041
  %2284 = vmatpush1.msra.mxu0 %v2040
  %2285 = vmatprep.subr.mxu0 %v2038
  %2286 = vmatpush1.msra.mxu0 %v2037
  %2287 = vmatprep.subr.mxu0 0.0
  %2288 = vmatpush2.msra.mxu0 0.0
  %2289 = vmatprep.subr.mxu0 0.0
  %2290 = vmatpush2.msra.mxu0 0.0
  %2291 = vmatprep.subr.mxu0 0.0
  %2292 = vmatpush2.msra.mxu0 0.0
  %2293 = vmatprep.subr.mxu0 0.0
  %2294 = vmatpush2.msra.mxu0 0.0
  %2295 = vmatprep.subr.mxu0 0.0
  %2296 = vmatpush2.msra.mxu0 0.0
  %2297 = vmatprep.subr.mxu0 0.0
  %2298 = vmatpush2.msra.mxu0 0.0
  %2299 = vmatprep.subr.mxu0 0.0
  %2300 = vmatpush2.msra.mxu0 0.0
  %2301 = vmatprep.subr.mxu0 0.0
  %2302 = vmatpush2.msra.mxu0 0.0
  %2303 = vmatprep.subr.mxu0 0.0
  %2304 = vmatpush2.msra.mxu0 0.0
  %2305 = vmatprep.subr.mxu0 0.0
  %2306 = vmatpush2.msra.mxu0 0.0
  %2307 = vmatprep.subr.mxu0 0.0
  %2308 = vmatpush2.msra.mxu0 0.0
  %2309 = vmatprep.subr.mxu0 0.0
  %2310 = vmatpush2.msra.mxu0 0.0
  %2311 = vmatprep.subr.mxu0 0.0
  %2312 = vmatpush2.msra.mxu0 0.0
  %2313 = vmatprep.subr.mxu0 0.0
  %2314 = vmatpush2.msra.mxu0 0.0
  %2315 = vmatprep.subr.mxu0 0.0
  %2316 = vmatpush2.msra.mxu0 0.0
  %2317 = vmatprep.subr.mxu0 0.0
  %2318 = vmatpush2.msra.mxu0 0.0
  %2319 = vmatprep.mubr.f32.mxu0 0.0
  %2320 = vmatmul.mubr.f32.gmra.mxu0 %v2253
  %v2321 = vpop.f32.mrf.mxu0
  %v2322 = vadd.f32 %v2066, %v2321
  %v2323 = vpop.f32.mrf.mxu0
  %v2324 = vadd.f32 %v2070, %v2323
  %2325 = vdwg.mxu0
  %2326 = vmatprep.subr.mxu0 0.0
  %2327 = vmatpush1.msra.mxu0 0.0
  %2328 = vmatprep.subr.mxu0 0.0
  %2329 = vmatpush1.msra.mxu0 0.0
  %2330 = vmatprep.subr.mxu0 0.0
  %2331 = vmatpush1.msra.mxu0 0.0
  %2332 = vmatprep.subr.mxu0 0.0
  %2333 = vmatpush1.msra.mxu0 0.0
  %2334 = vmatprep.subr.mxu0 0.0
  %2335 = vmatpush1.msra.mxu0 0.0
  %2336 = vmatprep.subr.mxu0 0.0
  %2337 = vmatpush1.msra.mxu0 0.0
  %2338 = vmatprep.subr.mxu0 0.0
  %2339 = vmatpush1.msra.mxu0 0.0
  %2340 = vmatprep.subr.mxu0 0.0
  %2341 = vmatpush1.msra.mxu0 0.0
  %2342 = vmatprep.subr.mxu0 0.0
  %2343 = vmatpush1.msra.mxu0 %v2060
  %2344 = vmatprep.subr.mxu0 0.0
  %2345 = vmatpush1.msra.mxu0 %v2057
  %2346 = vmatprep.subr.mxu0 0.0
  %2347 = vmatpush1.msra.mxu0 %v2054
  %2348 = vmatprep.subr.mxu0 0.0
  %2349 = vmatpush1.msra.mxu0 %v2051
  %2350 = vmatprep.subr.mxu0 0.0
  %2351 = vmatpush1.msra.mxu0 %v2048
  %2352 = vmatprep.subr.mxu0 0.0
  %2353 = vmatpush1.msra.mxu0 %v2045
  %2354 = vmatprep.subr.mxu0 0.0
  %2355 = vmatpush1.msra.mxu0 %v2042
  %2356 = vmatprep.subr.mxu0 0.0
  %2357 = vmatpush1.msra.mxu0 %v2039
  %2358 = vmatprep.subr.mxu0 0.0
  %2359 = vmatpush2.msra.mxu0 0.0
  %2360 = vmatprep.subr.mxu0 0.0
  %2361 = vmatpush2.msra.mxu0 0.0
  %2362 = vmatprep.subr.mxu0 0.0
  %2363 = vmatpush2.msra.mxu0 0.0
  %2364 = vmatprep.subr.mxu0 0.0
  %2365 = vmatpush2.msra.mxu0 0.0
  %2366 = vmatprep.subr.mxu0 0.0
  %2367 = vmatpush2.msra.mxu0 0.0
  %2368 = vmatprep.subr.mxu0 0.0
  %2369 = vmatpush2.msra.mxu0 0.0
  %2370 = vmatprep.subr.mxu0 0.0
  %2371 = vmatpush2.msra.mxu0 0.0
  %2372 = vmatprep.subr.mxu0 0.0
  %2373 = vmatpush2.msra.mxu0 0.0
  %2374 = vmatprep.subr.mxu0 0.0
  %2375 = vmatpush2.msra.mxu0 0.0
  %2376 = vmatprep.subr.mxu0 0.0
  %2377 = vmatpush2.msra.mxu0 0.0
  %2378 = vmatprep.subr.mxu0 0.0
  %2379 = vmatpush2.msra.mxu0 0.0
  %2380 = vmatprep.subr.mxu0 0.0
  %2381 = vmatpush2.msra.mxu0 0.0
  %2382 = vmatprep.subr.mxu0 0.0
  %2383 = vmatpush2.msra.mxu0 0.0
  %2384 = vmatprep.subr.mxu0 0.0
  %2385 = vmatpush2.msra.mxu0 0.0
  %2386 = vmatprep.subr.mxu0 0.0
  %2387 = vmatpush2.msra.mxu0 0.0
  %2388 = vmatprep.subr.mxu0 0.0
  %2389 = vmatpush2.msra.mxu0 0.0
  %2390 = vmatprep.mubr.f32.mxu0 0.0
  %2391 = vmatmul.mubr.f32.gmra.mxu0 %v2253
  %v2392 = vpop.f32.mrf.mxu0
  %v2393 = vadd.f32 %v2074, %v2392
  %v2394 = vpop.f32.mrf.mxu0
  %2395 = vdwg.mxu0
  %v2397 = vrot.slane %v2322, 7
  %v2399 = vadd.f32 %v2034, %v2397
  %v2400 = vxor.u32 %v2399, 2147483648
  %v2401 = vmul.f32 %v2400, 1.442695
  %v2402 = vpow.pop %v2401
  %v2403 = vadd.f32 %v2402, 1.0
  %v2404 = vrcp.pop %v2403
  %v2405 = vmul.f32 1.0, %v2404
  %v2407 = vrot.slane %v2324, 7
  %v2409 = vadd.f32 %v2035, %v2407
  %v2410 = vxor.u32 %v2409, 2147483648
  %v2411 = vmul.f32 %v2410, 1.442695
  %v2412 = vpow.pop %v2411
  %v2413 = vadd.f32 %v2412, 1.0
  %v2414 = vrcp.pop %v2413
  %v2415 = vmul.f32 1.0, %v2414
  %v2417 = vrot.slane %v2393, 7
  %v2419 = vmul.f32 %v2405, %v2417
  %v2420 = vadd.f32 %v2036, %v2419
  %v2421 = vtanh.pop %v2420
  %v2422 = vsub.f32 1.0, %v2415
  %v2423 = vmul.f32 %v2422, %v2421
  %v2424 = vrot.slane %v2242, 7
  %v2426 = vmul.f32 %v2415, %v2424
  %v2427 = vadd.f32 %v2423, %v2426
  %vm2428 = vcmp.eq.s32.totalorder %v2030, 1
  %v2429 = vsel %vm2428, 1, 0
  %vm2430 = vcmp.eq.s32.totalorder %v2429, 1
  %v2431 = vlaneseq
  %v2432 = vshrl.u32 %v2431, 7
  %v2433 = vsub.s32 1, %v2432
  %v2434 = vrot.slane %v2427, %v2433
  %v2435 = vsel %vm2430, %v2434, 0.0
  %v2436 = vadd.f32 %v2251, %v2435
  %v2438 = vrot.slane %v2427, 1
  %v2439 = vsel %vm1285, %v2438, 0
  %2441 = vmatprep.subr.mxu0 0.0
  %2442 = vmatpush1.msra.mxu0 0.0
  %2443 = vmatprep.subr.mxu0 0.0
  %2444 = vmatpush1.msra.mxu0 0.0
  %2445 = vmatprep.subr.mxu0 0.0
  %2446 = vmatpush1.msra.mxu0 0.0
  %2447 = vmatprep.subr.mxu0 0.0
  %2448 = vmatpush1.msra.mxu0 0.0
  %2449 = vmatprep.subr.mxu0 0.0
  %2450 = vmatpush1.msra.mxu0 0.0
  %2451 = vmatprep.subr.mxu0 0.0
  %2452 = vmatpush1.msra.mxu0 0.0
  %2453 = vmatprep.subr.mxu0 0.0
  %2454 = vmatpush1.msra.mxu0 0.0
  %2455 = vmatprep.subr.mxu0 0.0
  %2456 = vmatpush1.msra.mxu0 0.0
  %2457 = vmatprep.subr.mxu0 %v2059
  %2458 = vmatpush1.msra.mxu0 %v2058
  %2459 = vmatprep.subr.mxu0 %v2056
  %2460 = vmatpush1.msra.mxu0 %v2055
  %2461 = vmatprep.subr.mxu0 %v2053
  %2462 = vmatpush1.msra.mxu0 %v2052
  %2463 = vmatprep.subr.mxu0 %v2050
  %2464 = vmatpush1.msra.mxu0 %v2049
  %2465 = vmatprep.subr.mxu0 %v2047
  %2466 = vmatpush1.msra.mxu0 %v2046
  %2467 = vmatprep.subr.mxu0 %v2044
  %2468 = vmatpush1.msra.mxu0 %v2043
  %2469 = vmatprep.subr.mxu0 %v2041
  %2470 = vmatpush1.msra.mxu0 %v2040
  %2471 = vmatprep.subr.mxu0 %v2038
  %2472 = vmatpush1.msra.mxu0 %v2037
  %2473 = vmatprep.subr.mxu0 0.0
  %2474 = vmatpush2.msra.mxu0 0.0
  %2475 = vmatprep.subr.mxu0 0.0
  %2476 = vmatpush2.msra.mxu0 0.0
  %2477 = vmatprep.subr.mxu0 0.0
  %2478 = vmatpush2.msra.mxu0 0.0
  %2479 = vmatprep.subr.mxu0 0.0
  %2480 = vmatpush2.msra.mxu0 0.0
  %2481 = vmatprep.subr.mxu0 0.0
  %2482 = vmatpush2.msra.mxu0 0.0
  %2483 = vmatprep.subr.mxu0 0.0
  %2484 = vmatpush2.msra.mxu0 0.0
  %2485 = vmatprep.subr.mxu0 0.0
  %2486 = vmatpush2.msra.mxu0 0.0
  %2487 = vmatprep.subr.mxu0 0.0
  %2488 = vmatpush2.msra.mxu0 0.0
  %2489 = vmatprep.subr.mxu0 0.0
  %2490 = vmatpush2.msra.mxu0 0.0
  %2491 = vmatprep.subr.mxu0 0.0
  %2492 = vmatpush2.msra.mxu0 0.0
  %2493 = vmatprep.subr.mxu0 0.0
  %2494 = vmatpush2.msra.mxu0 0.0
  %2495 = vmatprep.subr.mxu0 0.0
  %2496 = vmatpush2.msra.mxu0 0.0
  %2497 = vmatprep.subr.mxu0 0.0
  %2498 = vmatpush2.msra.mxu0 0.0
  %2499 = vmatprep.subr.mxu0 0.0
  %2500 = vmatpush2.msra.mxu0 0.0
  %2501 = vmatprep.subr.mxu0 0.0
  %2502 = vmatpush2.msra.mxu0 0.0
  %2503 = vmatprep.subr.mxu0 0.0
  %2504 = vmatpush2.msra.mxu0 0.0
  %2505 = vmatprep.mubr.f32.mxu0 0.0
  %2506 = vmatmul.mubr.f32.gmra.mxu0 %v2439
  %v2507 = vpop.f32.mrf.mxu0
  %v2508 = vadd.f32 %v2066, %v2507
  %v2509 = vpop.f32.mrf.mxu0
  %v2510 = vadd.f32 %v2070, %v2509
  %2511 = vdwg.mxu0
  %2512 = vmatprep.subr.mxu0 0.0
  %2513 = vmatpush1.msra.mxu0 0.0
  %2514 = vmatprep.subr.mxu0 0.0
  %2515 = vmatpush1.msra.mxu0 0.0
  %2516 = vmatprep.subr.mxu0 0.0
  %2517 = vmatpush1.msra.mxu0 0.0
  %2518 = vmatprep.subr.mxu0 0.0
  %2519 = vmatpush1.msra.mxu0 0.0
  %2520 = vmatprep.subr.mxu0 0.0
  %2521 = vmatpush1.msra.mxu0 0.0
  %2522 = vmatprep.subr.mxu0 0.0
  %2523 = vmatpush1.msra.mxu0 0.0
  %2524 = vmatprep.subr.mxu0 0.0
  %2525 = vmatpush1.msra.mxu0 0.0
  %2526 = vmatprep.subr.mxu0 0.0
  %2527 = vmatpush1.msra.mxu0 0.0
  %2528 = vmatprep.subr.mxu0 0.0
  %2529 = vmatpush1.msra.mxu0 %v2060
  %2530 = vmatprep.subr.mxu0 0.0
  %2531 = vmatpush1.msra.mxu0 %v2057
  %2532 = vmatprep.subr.mxu0 0.0
  %2533 = vmatpush1.msra.mxu0 %v2054
  %2534 = vmatprep.subr.mxu0 0.0
  %2535 = vmatpush1.msra.mxu0 %v2051
  %2536 = vmatprep.subr.mxu0 0.0
  %2537 = vmatpush1.msra.mxu0 %v2048
  %2538 = vmatprep.subr.mxu0 0.0
  %2539 = vmatpush1.msra.mxu0 %v2045
  %2540 = vmatprep.subr.mxu0 0.0
  %2541 = vmatpush1.msra.mxu0 %v2042
  %2542 = vmatprep.subr.mxu0 0.0
  %2543 = vmatpush1.msra.mxu0 %v2039
  %2544 = vmatprep.subr.mxu0 0.0
  %2545 = vmatpush2.msra.mxu0 0.0
  %2546 = vmatprep.subr.mxu0 0.0
  %2547 = vmatpush2.msra.mxu0 0.0
  %2548 = vmatprep.subr.mxu0 0.0
  %2549 = vmatpush2.msra.mxu0 0.0
  %2550 = vmatprep.subr.mxu0 0.0
  %2551 = vmatpush2.msra.mxu0 0.0
  %2552 = vmatprep.subr.mxu0 0.0
  %2553 = vmatpush2.msra.mxu0 0.0
  %2554 = vmatprep.subr.mxu0 0.0
  %2555 = vmatpush2.msra.mxu0 0.0
  %2556 = vmatprep.subr.mxu0 0.0
  %2557 = vmatpush2.msra.mxu0 0.0
  %2558 = vmatprep.subr.mxu0 0.0
  %2559 = vmatpush2.msra.mxu0 0.0
  %2560 = vmatprep.subr.mxu0 0.0
  %2561 = vmatpush2.msra.mxu0 0.0
  %2562 = vmatprep.subr.mxu0 0.0
  %2563 = vmatpush2.msra.mxu0 0.0
  %2564 = vmatprep.subr.mxu0 0.0
  %2565 = vmatpush2.msra.mxu0 0.0
  %2566 = vmatprep.subr.mxu0 0.0
  %2567 = vmatpush2.msra.mxu0 0.0
  %2568 = vmatprep.subr.mxu0 0.0
  %2569 = vmatpush2.msra.mxu0 0.0
  %2570 = vmatprep.subr.mxu0 0.0
  %2571 = vmatpush2.msra.mxu0 0.0
  %2572 = vmatprep.subr.mxu0 0.0
  %2573 = vmatpush2.msra.mxu0 0.0
  %2574 = vmatprep.subr.mxu0 0.0
  %2575 = vmatpush2.msra.mxu0 0.0
  %2576 = vmatprep.mubr.f32.mxu0 0.0
  %2577 = vmatmul.mubr.f32.gmra.mxu0 %v2439
  %v2578 = vpop.f32.mrf.mxu0
  %v2579 = vadd.f32 %v2074, %v2578
  %v2580 = vpop.f32.mrf.mxu0
  %2581 = vdwg.mxu0
  %v2583 = vrot.slane %v2508, 6
  %v2585 = vadd.f32 %v2034, %v2583
  %v2586 = vxor.u32 %v2585, 2147483648
  %v2587 = vmul.f32 %v2586, 1.442695
  %v2588 = vpow.pop %v2587
  %v2589 = vadd.f32 %v2588, 1.0
  %v2590 = vrcp.pop %v2589
  %v2591 = vmul.f32 1.0, %v2590
  %v2593 = vrot.slane %v2510, 6
  %v2595 = vadd.f32 %v2035, %v2593
  %v2596 = vxor.u32 %v2595, 2147483648
  %v2597 = vmul.f32 %v2596, 1.442695
  %v2598 = vpow.pop %v2597
  %v2599 = vadd.f32 %v2598, 1.0
  %v2600 = vrcp.pop %v2599
  %v2601 = vmul.f32 1.0, %v2600
  %v2603 = vrot.slane %v2579, 6
  %v2605 = vmul.f32 %v2591, %v2603
  %v2606 = vadd.f32 %v2036, %v2605
  %v2607 = vtanh.pop %v2606
  %v2608 = vsub.f32 1.0, %v2601
  %v2609 = vmul.f32 %v2608, %v2607
  %v2610 = vrot.slane %v2427, 7
  %v2612 = vmul.f32 %v2601, %v2610
  %v2613 = vadd.f32 %v2609, %v2612
  %vm2614 = vcmp.eq.s32.totalorder %v2030, 2
  %v2615 = vsel %vm2614, 1, 0
  %vm2616 = vcmp.eq.s32.totalorder %v2615, 1
  %v2617 = vlaneseq
  %v2618 = vshrl.u32 %v2617, 7
  %v2619 = vsub.s32 2, %v2618
  %v2620 = vrot.slane %v2613, %v2619
  %v2621 = vsel %vm2616, %v2620, 0.0
  %v2622 = vadd.f32 %v2436, %v2621
  %v2624 = vrot.slane %v2613, 2
  %v2625 = vsel %vm1285, %v2624, 0
  %2627 = vmatprep.subr.mxu0 0.0
  %2628 = vmatpush1.msra.mxu0 0.0
  %2629 = vmatprep.subr.mxu0 0.0
  %2630 = vmatpush1.msra.mxu0 0.0
  %2631 = vmatprep.subr.mxu0 0.0
  %2632 = vmatpush1.msra.mxu0 0.0
  %2633 = vmatprep.subr.mxu0 0.0
  %2634 = vmatpush1.msra.mxu0 0.0
  %2635 = vmatprep.subr.mxu0 0.0
  %2636 = vmatpush1.msra.mxu0 0.0
  %2637 = vmatprep.subr.mxu0 0.0
  %2638 = vmatpush1.msra.mxu0 0.0
  %2639 = vmatprep.subr.mxu0 0.0
  %2640 = vmatpush1.msra.mxu0 0.0
  %2641 = vmatprep.subr.mxu0 0.0
  %2642 = vmatpush1.msra.mxu0 0.0
  %2643 = vmatprep.subr.mxu0 %v2059
  %2644 = vmatpush1.msra.mxu0 %v2058
  %2645 = vmatprep.subr.mxu0 %v2056
  %2646 = vmatpush1.msra.mxu0 %v2055
  %2647 = vmatprep.subr.mxu0 %v2053
  %2648 = vmatpush1.msra.mxu0 %v2052
  %2649 = vmatprep.subr.mxu0 %v2050
  %2650 = vmatpush1.msra.mxu0 %v2049
  %2651 = vmatprep.subr.mxu0 %v2047
  %2652 = vmatpush1.msra.mxu0 %v2046
  %2653 = vmatprep.subr.mxu0 %v2044
  %2654 = vmatpush1.msra.mxu0 %v2043
  %2655 = vmatprep.subr.mxu0 %v2041
  %2656 = vmatpush1.msra.mxu0 %v2040
  %2657 = vmatprep.subr.mxu0 %v2038
  %2658 = vmatpush1.msra.mxu0 %v2037
  %2659 = vmatprep.subr.mxu0 0.0
  %2660 = vmatpush2.msra.mxu0 0.0
  %2661 = vmatprep.subr.mxu0 0.0
  %2662 = vmatpush2.msra.mxu0 0.0
  %2663 = vmatprep.subr.mxu0 0.0
  %2664 = vmatpush2.msra.mxu0 0.0
  %2665 = vmatprep.subr.mxu0 0.0
  %2666 = vmatpush2.msra.mxu0 0.0
  %2667 = vmatprep.subr.mxu0 0.0
  %2668 = vmatpush2.msra.mxu0 0.0
  %2669 = vmatprep.subr.mxu0 0.0
  %2670 = vmatpush2.msra.mxu0 0.0
  %2671 = vmatprep.subr.mxu0 0.0
  %2672 = vmatpush2.msra.mxu0 0.0
  %2673 = vmatprep.subr.mxu0 0.0
  %2674 = vmatpush2.msra.mxu0 0.0
  %2675 = vmatprep.subr.mxu0 0.0
  %2676 = vmatpush2.msra.mxu0 0.0
  %2677 = vmatprep.subr.mxu0 0.0
  %2678 = vmatpush2.msra.mxu0 0.0
  %2679 = vmatprep.subr.mxu0 0.0
  %2680 = vmatpush2.msra.mxu0 0.0
  %2681 = vmatprep.subr.mxu0 0.0
  %2682 = vmatpush2.msra.mxu0 0.0
  %2683 = vmatprep.subr.mxu0 0.0
  %2684 = vmatpush2.msra.mxu0 0.0
  %2685 = vmatprep.subr.mxu0 0.0
  %2686 = vmatpush2.msra.mxu0 0.0
  %2687 = vmatprep.subr.mxu0 0.0
  %2688 = vmatpush2.msra.mxu0 0.0
  %2689 = vmatprep.subr.mxu0 0.0
  %2690 = vmatpush2.msra.mxu0 0.0
  %2691 = vmatprep.mubr.f32.mxu0 0.0
  %2692 = vmatmul.mubr.f32.gmra.mxu0 %v2625
  %v2693 = vpop.f32.mrf.mxu0
  %v2694 = vadd.f32 %v2066, %v2693
  %v2695 = vpop.f32.mrf.mxu0
  %v2696 = vadd.f32 %v2070, %v2695
  %2697 = vdwg.mxu0
  %2698 = vmatprep.subr.mxu0 0.0
  %2699 = vmatpush1.msra.mxu0 0.0
  %2700 = vmatprep.subr.mxu0 0.0
  %2701 = vmatpush1.msra.mxu0 0.0
  %2702 = vmatprep.subr.mxu0 0.0
  %2703 = vmatpush1.msra.mxu0 0.0
  %2704 = vmatprep.subr.mxu0 0.0
  %2705 = vmatpush1.msra.mxu0 0.0
  %2706 = vmatprep.subr.mxu0 0.0
  %2707 = vmatpush1.msra.mxu0 0.0
  %2708 = vmatprep.subr.mxu0 0.0
  %2709 = vmatpush1.msra.mxu0 0.0
  %2710 = vmatprep.subr.mxu0 0.0
  %2711 = vmatpush1.msra.mxu0 0.0
  %2712 = vmatprep.subr.mxu0 0.0
  %2713 = vmatpush1.msra.mxu0 0.0
  %2714 = vmatprep.subr.mxu0 0.0
  %2715 = vmatpush1.msra.mxu0 %v2060
  %2716 = vmatprep.subr.mxu0 0.0
  %2717 = vmatpush1.msra.mxu0 %v2057
  %2718 = vmatprep.subr.mxu0 0.0
  %2719 = vmatpush1.msra.mxu0 %v2054
  %2720 = vmatprep.subr.mxu0 0.0
  %2721 = vmatpush1.msra.mxu0 %v2051
  %2722 = vmatprep.subr.mxu0 0.0
  %2723 = vmatpush1.msra.mxu0 %v2048
  %2724 = vmatprep.subr.mxu0 0.0
  %2725 = vmatpush1.msra.mxu0 %v2045
  %2726 = vmatprep.subr.mxu0 0.0
  %2727 = vmatpush1.msra.mxu0 %v2042
  %2728 = vmatprep.subr.mxu0 0.0
  %2729 = vmatpush1.msra.mxu0 %v2039
  %2730 = vmatprep.subr.mxu0 0.0
  %2731 = vmatpush2.msra.mxu0 0.0
  %2732 = vmatprep.subr.mxu0 0.0
  %2733 = vmatpush2.msra.mxu0 0.0
  %2734 = vmatprep.subr.mxu0 0.0
  %2735 = vmatpush2.msra.mxu0 0.0
  %2736 = vmatprep.subr.mxu0 0.0
  %2737 = vmatpush2.msra.mxu0 0.0
  %2738 = vmatprep.subr.mxu0 0.0
  %2739 = vmatpush2.msra.mxu0 0.0
  %2740 = vmatprep.subr.mxu0 0.0
  %2741 = vmatpush2.msra.mxu0 0.0
  %2742 = vmatprep.subr.mxu0 0.0
  %2743 = vmatpush2.msra.mxu0 0.0
  %2744 = vmatprep.subr.mxu0 0.0
  %2745 = vmatpush2.msra.mxu0 0.0
  %2746 = vmatprep.subr.mxu0 0.0
  %2747 = vmatpush2.msra.mxu0 0.0
  %2748 = vmatprep.subr.mxu0 0.0
  %2749 = vmatpush2.msra.mxu0 0.0
  %2750 = vmatprep.subr.mxu0 0.0
  %2751 = vmatpush2.msra.mxu0 0.0
  %2752 = vmatprep.subr.mxu0 0.0
  %2753 = vmatpush2.msra.mxu0 0.0
  %2754 = vmatprep.subr.mxu0 0.0
  %2755 = vmatpush2.msra.mxu0 0.0
  %2756 = vmatprep.subr.mxu0 0.0
  %2757 = vmatpush2.msra.mxu0 0.0
  %2758 = vmatprep.subr.mxu0 0.0
  %2759 = vmatpush2.msra.mxu0 0.0
  %2760 = vmatprep.subr.mxu0 0.0
  %2761 = vmatpush2.msra.mxu0 0.0
  %2762 = vmatprep.mubr.f32.mxu0 0.0
  %2763 = vmatmul.mubr.f32.gmra.mxu0 %v2625
  %v2764 = vpop.f32.mrf.mxu0
  %v2765 = vadd.f32 %v2074, %v2764
  %v2766 = vpop.f32.mrf.mxu0
  %2767 = vdwg.mxu0
  %v2769 = vrot.slane %v2694, 5
  %v2771 = vadd.f32 %v2034, %v2769
  %v2772 = vxor.u32 %v2771, 2147483648
  %v2773 = vmul.f32 %v2772, 1.442695
  %v2774 = vpow.pop %v2773
  %v2775 = vadd.f32 %v2774, 1.0
  %v2776 = vrcp.pop %v2775
  %v2777 = vmul.f32 1.0, %v2776
  %v2779 = vrot.slane %v2696, 5
  %v2781 = vadd.f32 %v2035, %v2779
  %v2782 = vxor.u32 %v2781, 2147483648
  %v2783 = vmul.f32 %v2782, 1.442695
  %v2784 = vpow.pop %v2783
  %v2785 = vadd.f32 %v2784, 1.0
  %v2786 = vrcp.pop %v2785
  %v2787 = vmul.f32 1.0, %v2786
  %v2789 = vrot.slane %v2765, 5
  %v2791 = vmul.f32 %v2777, %v2789
  %v2792 = vadd.f32 %v2036, %v2791
  %v2793 = vtanh.pop %v2792
  %v2794 = vsub.f32 1.0, %v2787
  %v2795 = vmul.f32 %v2794, %v2793
  %v2796 = vrot.slane %v2613, 7
  %v2798 = vmul.f32 %v2787, %v2796
  %v2799 = vadd.f32 %v2795, %v2798
  %vm2800 = vcmp.eq.s32.totalorder %v2030, 3
  %v2801 = vsel %vm2800, 1, 0
  %vm2802 = vcmp.eq.s32.totalorder %v2801, 1
  %v2803 = vlaneseq
  %v2804 = vshrl.u32 %v2803, 7
  %v2805 = vsub.s32 3, %v2804
  %v2806 = vrot.slane %v2799, %v2805
  %v2807 = vsel %vm2802, %v2806, 0.0
  %v2808 = vadd.f32 %v2622, %v2807
  %v2810 = vrot.slane %v2799, 3
  %v2811 = vsel %vm1285, %v2810, 0
  %2813 = vmatprep.subr.mxu0 0.0
  %2814 = vmatpush1.msra.mxu0 0.0
  %2815 = vmatprep.subr.mxu0 0.0
  %2816 = vmatpush1.msra.mxu0 0.0
  %2817 = vmatprep.subr.mxu0 0.0
  %2818 = vmatpush1.msra.mxu0 0.0
  %2819 = vmatprep.subr.mxu0 0.0
  %2820 = vmatpush1.msra.mxu0 0.0
  %2821 = vmatprep.subr.mxu0 0.0
  %2822 = vmatpush1.msra.mxu0 0.0
  %2823 = vmatprep.subr.mxu0 0.0
  %2824 = vmatpush1.msra.mxu0 0.0
  %2825 = vmatprep.subr.mxu0 0.0
  %2826 = vmatpush1.msra.mxu0 0.0
  %2827 = vmatprep.subr.mxu0 0.0
  %2828 = vmatpush1.msra.mxu0 0.0
  %2829 = vmatprep.subr.mxu0 %v2059
  %2830 = vmatpush1.msra.mxu0 %v2058
  %2831 = vmatprep.subr.mxu0 %v2056
  %2832 = vmatpush1.msra.mxu0 %v2055
  %2833 = vmatprep.subr.mxu0 %v2053
  %2834 = vmatpush1.msra.mxu0 %v2052
  %2835 = vmatprep.subr.mxu0 %v2050
  %2836 = vmatpush1.msra.mxu0 %v2049
  %2837 = vmatprep.subr.mxu0 %v2047
  %2838 = vmatpush1.msra.mxu0 %v2046
  %2839 = vmatprep.subr.mxu0 %v2044
  %2840 = vmatpush1.msra.mxu0 %v2043
  %2841 = vmatprep.subr.mxu0 %v2041
  %2842 = vmatpush1.msra.mxu0 %v2040
  %2843 = vmatprep.subr.mxu0 %v2038
  %2844 = vmatpush1.msra.mxu0 %v2037
  %2845 = vmatprep.subr.mxu0 0.0
  %2846 = vmatpush2.msra.mxu0 0.0
  %2847 = vmatprep.subr.mxu0 0.0
  %2848 = vmatpush2.msra.mxu0 0.0
  %2849 = vmatprep.subr.mxu0 0.0
  %2850 = vmatpush2.msra.mxu0 0.0
  %2851 = vmatprep.subr.mxu0 0.0
  %2852 = vmatpush2.msra.mxu0 0.0
  %2853 = vmatprep.subr.mxu0 0.0
  %2854 = vmatpush2.msra.mxu0 0.0
  %2855 = vmatprep.subr.mxu0 0.0
  %2856 = vmatpush2.msra.mxu0 0.0
  %2857 = vmatprep.subr.mxu0 0.0
  %2858 = vmatpush2.msra.mxu0 0.0
  %2859 = vmatprep.subr.mxu0 0.0
  %2860 = vmatpush2.msra.mxu0 0.0
  %2861 = vmatprep.subr.mxu0 0.0
  %2862 = vmatpush2.msra.mxu0 0.0
  %2863 = vmatprep.subr.mxu0 0.0
  %2864 = vmatpush2.msra.mxu0 0.0
  %2865 = vmatprep.subr.mxu0 0.0
  %2866 = vmatpush2.msra.mxu0 0.0
  %2867 = vmatprep.subr.mxu0 0.0
  %2868 = vmatpush2.msra.mxu0 0.0
  %2869 = vmatprep.subr.mxu0 0.0
  %2870 = vmatpush2.msra.mxu0 0.0
  %2871 = vmatprep.subr.mxu0 0.0
  %2872 = vmatpush2.msra.mxu0 0.0
  %2873 = vmatprep.subr.mxu0 0.0
  %2874 = vmatpush2.msra.mxu0 0.0
  %2875 = vmatprep.subr.mxu0 0.0
  %2876 = vmatpush2.msra.mxu0 0.0
  %2877 = vmatprep.mubr.f32.mxu0 0.0
  %2878 = vmatmul.mubr.f32.gmra.mxu0 %v2811
  %v2879 = vpop.f32.mrf.mxu0
  %v2880 = vadd.f32 %v2066, %v2879
  %v2881 = vpop.f32.mrf.mxu0
  %v2882 = vadd.f32 %v2070, %v2881
  %2883 = vdwg.mxu0
  %2884 = vmatprep.subr.mxu0 0.0
  %2885 = vmatpush1.msra.mxu0 0.0
  %2886 = vmatprep.subr.mxu0 0.0
  %2887 = vmatpush1.msra.mxu0 0.0
  %2888 = vmatprep.subr.mxu0 0.0
  %2889 = vmatpush1.msra.mxu0 0.0
  %2890 = vmatprep.subr.mxu0 0.0
  %2891 = vmatpush1.msra.mxu0 0.0
  %2892 = vmatprep.subr.mxu0 0.0
  %2893 = vmatpush1.msra.mxu0 0.0
  %2894 = vmatprep.subr.mxu0 0.0
  %2895 = vmatpush1.msra.mxu0 0.0
  %2896 = vmatprep.subr.mxu0 0.0
  %2897 = vmatpush1.msra.mxu0 0.0
  %2898 = vmatprep.subr.mxu0 0.0
  %2899 = vmatpush1.msra.mxu0 0.0
  %2900 = vmatprep.subr.mxu0 0.0
  %2901 = vmatpush1.msra.mxu0 %v2060
  %2902 = vmatprep.subr.mxu0 0.0
  %2903 = vmatpush1.msra.mxu0 %v2057
  %2904 = vmatprep.subr.mxu0 0.0
  %2905 = vmatpush1.msra.mxu0 %v2054
  %2906 = vmatprep.subr.mxu0 0.0
  %2907 = vmatpush1.msra.mxu0 %v2051
  %2908 = vmatprep.subr.mxu0 0.0
  %2909 = vmatpush1.msra.mxu0 %v2048
  %2910 = vmatprep.subr.mxu0 0.0
  %2911 = vmatpush1.msra.mxu0 %v2045
  %2912 = vmatprep.subr.mxu0 0.0
  %2913 = vmatpush1.msra.mxu0 %v2042
  %2914 = vmatprep.subr.mxu0 0.0
  %2915 = vmatpush1.msra.mxu0 %v2039
  %2916 = vmatprep.subr.mxu0 0.0
  %2917 = vmatpush2.msra.mxu0 0.0
  %2918 = vmatprep.subr.mxu0 0.0
  %2919 = vmatpush2.msra.mxu0 0.0
  %2920 = vmatprep.subr.mxu0 0.0
  %2921 = vmatpush2.msra.mxu0 0.0
  %2922 = vmatprep.subr.mxu0 0.0
  %2923 = vmatpush2.msra.mxu0 0.0
  %2924 = vmatprep.subr.mxu0 0.0
  %2925 = vmatpush2.msra.mxu0 0.0
  %2926 = vmatprep.subr.mxu0 0.0
  %2927 = vmatpush2.msra.mxu0 0.0
  %2928 = vmatprep.subr.mxu0 0.0
  %2929 = vmatpush2.msra.mxu0 0.0
  %2930 = vmatprep.subr.mxu0 0.0
  %2931 = vmatpush2.msra.mxu0 0.0
  %2932 = vmatprep.subr.mxu0 0.0
  %2933 = vmatpush2.msra.mxu0 0.0
  %2934 = vmatprep.subr.mxu0 0.0
  %2935 = vmatpush2.msra.mxu0 0.0
  %2936 = vmatprep.subr.mxu0 0.0
  %2937 = vmatpush2.msra.mxu0 0.0
  %2938 = vmatprep.subr.mxu0 0.0
  %2939 = vmatpush2.msra.mxu0 0.0
  %2940 = vmatprep.subr.mxu0 0.0
  %2941 = vmatpush2.msra.mxu0 0.0
  %2942 = vmatprep.subr.mxu0 0.0
  %2943 = vmatpush2.msra.mxu0 0.0
  %2944 = vmatprep.subr.mxu0 0.0
  %2945 = vmatpush2.msra.mxu0 0.0
  %2946 = vmatprep.subr.mxu0 0.0
  %2947 = vmatpush2.msra.mxu0 0.0
  %2948 = vmatprep.mubr.f32.mxu0 0.0
  %2949 = vmatmul.mubr.f32.gmra.mxu0 %v2811
  %v2950 = vpop.f32.mrf.mxu0
  %v2951 = vadd.f32 %v2074, %v2950
  %v2952 = vpop.f32.mrf.mxu0
  %2953 = vdwg.mxu0
  %v2955 = vrot.slane %v2880, 4
  %v2957 = vadd.f32 %v2034, %v2955
  %v2958 = vxor.u32 %v2957, 2147483648
  %v2959 = vmul.f32 %v2958, 1.442695
  %v2960 = vpow.pop %v2959
  %v2961 = vadd.f32 %v2960, 1.0
  %v2962 = vrcp.pop %v2961
  %v2963 = vmul.f32 1.0, %v2962
  %v2965 = vrot.slane %v2882, 4
  %v2967 = vadd.f32 %v2035, %v2965
  %v2968 = vxor.u32 %v2967, 2147483648
  %v2969 = vmul.f32 %v2968, 1.442695
  %v2970 = vpow.pop %v2969
  %v2971 = vadd.f32 %v2970, 1.0
  %v2972 = vrcp.pop %v2971
  %v2973 = vmul.f32 1.0, %v2972
  %v2975 = vrot.slane %v2951, 4
  %v2977 = vmul.f32 %v2963, %v2975
  %v2978 = vadd.f32 %v2036, %v2977
  %v2979 = vtanh.pop %v2978
  %v2980 = vsub.f32 1.0, %v2973
  %v2981 = vmul.f32 %v2980, %v2979
  %v2982 = vrot.slane %v2799, 7
  %v2984 = vmul.f32 %v2973, %v2982
  %v2985 = vadd.f32 %v2981, %v2984
  %vm2986 = vcmp.eq.s32.totalorder %v2030, 4
  %v2987 = vsel %vm2986, 1, 0
  %vm2988 = vcmp.eq.s32.totalorder %v2987, 1
  %v2989 = vlaneseq
  %v2990 = vshrl.u32 %v2989, 7
  %v2991 = vsub.s32 4, %v2990
  %v2992 = vrot.slane %v2985, %v2991
  %v2993 = vsel %vm2988, %v2992, 0.0
  %v2994 = vadd.f32 %v2808, %v2993
  %v2996 = vrot.slane %v2985, 4
  %v2997 = vsel %vm1285, %v2996, 0
  %2999 = vmatprep.subr.mxu0 0.0
  %3000 = vmatpush1.msra.mxu0 0.0
  %3001 = vmatprep.subr.mxu0 0.0
  %3002 = vmatpush1.msra.mxu0 0.0
  %3003 = vmatprep.subr.mxu0 0.0
  %3004 = vmatpush1.msra.mxu0 0.0
  %3005 = vmatprep.subr.mxu0 0.0
  %3006 = vmatpush1.msra.mxu0 0.0
  %3007 = vmatprep.subr.mxu0 0.0
  %3008 = vmatpush1.msra.mxu0 0.0
  %3009 = vmatprep.subr.mxu0 0.0
  %3010 = vmatpush1.msra.mxu0 0.0
  %3011 = vmatprep.subr.mxu0 0.0
  %3012 = vmatpush1.msra.mxu0 0.0
  %3013 = vmatprep.subr.mxu0 0.0
  %3014 = vmatpush1.msra.mxu0 0.0
  %3015 = vmatprep.subr.mxu0 %v2059
  %3016 = vmatpush1.msra.mxu0 %v2058
  %3017 = vmatprep.subr.mxu0 %v2056
  %3018 = vmatpush1.msra.mxu0 %v2055
  %3019 = vmatprep.subr.mxu0 %v2053
  %3020 = vmatpush1.msra.mxu0 %v2052
  %3021 = vmatprep.subr.mxu0 %v2050
  %3022 = vmatpush1.msra.mxu0 %v2049
  %3023 = vmatprep.subr.mxu0 %v2047
  %3024 = vmatpush1.msra.mxu0 %v2046
  %3025 = vmatprep.subr.mxu0 %v2044
  %3026 = vmatpush1.msra.mxu0 %v2043
  %3027 = vmatprep.subr.mxu0 %v2041
  %3028 = vmatpush1.msra.mxu0 %v2040
  %3029 = vmatprep.subr.mxu0 %v2038
  %3030 = vmatpush1.msra.mxu0 %v2037
  %3031 = vmatprep.subr.mxu0 0.0
  %3032 = vmatpush2.msra.mxu0 0.0
  %3033 = vmatprep.subr.mxu0 0.0
  %3034 = vmatpush2.msra.mxu0 0.0
  %3035 = vmatprep.subr.mxu0 0.0
  %3036 = vmatpush2.msra.mxu0 0.0
  %3037 = vmatprep.subr.mxu0 0.0
  %3038 = vmatpush2.msra.mxu0 0.0
  %3039 = vmatprep.subr.mxu0 0.0
  %3040 = vmatpush2.msra.mxu0 0.0
  %3041 = vmatprep.subr.mxu0 0.0
  %3042 = vmatpush2.msra.mxu0 0.0
  %3043 = vmatprep.subr.mxu0 0.0
  %3044 = vmatpush2.msra.mxu0 0.0
  %3045 = vmatprep.subr.mxu0 0.0
  %3046 = vmatpush2.msra.mxu0 0.0
  %3047 = vmatprep.subr.mxu0 0.0
  %3048 = vmatpush2.msra.mxu0 0.0
  %3049 = vmatprep.subr.mxu0 0.0
  %3050 = vmatpush2.msra.mxu0 0.0
  %3051 = vmatprep.subr.mxu0 0.0
  %3052 = vmatpush2.msra.mxu0 0.0
  %3053 = vmatprep.subr.mxu0 0.0
  %3054 = vmatpush2.msra.mxu0 0.0
  %3055 = vmatprep.subr.mxu0 0.0
  %3056 = vmatpush2.msra.mxu0 0.0
  %3057 = vmatprep.subr.mxu0 0.0
  %3058 = vmatpush2.msra.mxu0 0.0
  %3059 = vmatprep.subr.mxu0 0.0
  %3060 = vmatpush2.msra.mxu0 0.0
  %3061 = vmatprep.subr.mxu0 0.0
  %3062 = vmatpush2.msra.mxu0 0.0
  %3063 = vmatprep.mubr.f32.mxu0 0.0
  %3064 = vmatmul.mubr.f32.gmra.mxu0 %v2997
  %v3065 = vpop.f32.mrf.mxu0
  %v3066 = vadd.f32 %v2066, %v3065
  %v3067 = vpop.f32.mrf.mxu0
  %v3068 = vadd.f32 %v2070, %v3067
  %3069 = vdwg.mxu0
  %3070 = vmatprep.subr.mxu0 0.0
  %3071 = vmatpush1.msra.mxu0 0.0
  %3072 = vmatprep.subr.mxu0 0.0
  %3073 = vmatpush1.msra.mxu0 0.0
  %3074 = vmatprep.subr.mxu0 0.0
  %3075 = vmatpush1.msra.mxu0 0.0
  %3076 = vmatprep.subr.mxu0 0.0
  %3077 = vmatpush1.msra.mxu0 0.0
  %3078 = vmatprep.subr.mxu0 0.0
  %3079 = vmatpush1.msra.mxu0 0.0
  %3080 = vmatprep.subr.mxu0 0.0
  %3081 = vmatpush1.msra.mxu0 0.0
  %3082 = vmatprep.subr.mxu0 0.0
  %3083 = vmatpush1.msra.mxu0 0.0
  %3084 = vmatprep.subr.mxu0 0.0
  %3085 = vmatpush1.msra.mxu0 0.0
  %3086 = vmatprep.subr.mxu0 0.0
  %3087 = vmatpush1.msra.mxu0 %v2060
  %3088 = vmatprep.subr.mxu0 0.0
  %3089 = vmatpush1.msra.mxu0 %v2057
  %3090 = vmatprep.subr.mxu0 0.0
  %3091 = vmatpush1.msra.mxu0 %v2054
  %3092 = vmatprep.subr.mxu0 0.0
  %3093 = vmatpush1.msra.mxu0 %v2051
  %3094 = vmatprep.subr.mxu0 0.0
  %3095 = vmatpush1.msra.mxu0 %v2048
  %3096 = vmatprep.subr.mxu0 0.0
  %3097 = vmatpush1.msra.mxu0 %v2045
  %3098 = vmatprep.subr.mxu0 0.0
  %3099 = vmatpush1.msra.mxu0 %v2042
  %3100 = vmatprep.subr.mxu0 0.0
  %3101 = vmatpush1.msra.mxu0 %v2039
  %3102 = vmatprep.subr.mxu0 0.0
  %3103 = vmatpush2.msra.mxu0 0.0
  %3104 = vmatprep.subr.mxu0 0.0
  %3105 = vmatpush2.msra.mxu0 0.0
  %3106 = vmatprep.subr.mxu0 0.0
  %3107 = vmatpush2.msra.mxu0 0.0
  %3108 = vmatprep.subr.mxu0 0.0
  %3109 = vmatpush2.msra.mxu0 0.0
  %3110 = vmatprep.subr.mxu0 0.0
  %3111 = vmatpush2.msra.mxu0 0.0
  %3112 = vmatprep.subr.mxu0 0.0
  %3113 = vmatpush2.msra.mxu0 0.0
  %3114 = vmatprep.subr.mxu0 0.0
  %3115 = vmatpush2.msra.mxu0 0.0
  %3116 = vmatprep.subr.mxu0 0.0
  %3117 = vmatpush2.msra.mxu0 0.0
  %3118 = vmatprep.subr.mxu0 0.0
  %3119 = vmatpush2.msra.mxu0 0.0
  %3120 = vmatprep.subr.mxu0 0.0
  %3121 = vmatpush2.msra.mxu0 0.0
  %3122 = vmatprep.subr.mxu0 0.0
  %3123 = vmatpush2.msra.mxu0 0.0
  %3124 = vmatprep.subr.mxu0 0.0
  %3125 = vmatpush2.msra.mxu0 0.0
  %3126 = vmatprep.subr.mxu0 0.0
  %3127 = vmatpush2.msra.mxu0 0.0
  %3128 = vmatprep.subr.mxu0 0.0
  %3129 = vmatpush2.msra.mxu0 0.0
  %3130 = vmatprep.subr.mxu0 0.0
  %3131 = vmatpush2.msra.mxu0 0.0
  %3132 = vmatprep.subr.mxu0 0.0
  %3133 = vmatpush2.msra.mxu0 0.0
  %3134 = vmatprep.mubr.f32.mxu0 0.0
  %3135 = vmatmul.mubr.f32.gmra.mxu0 %v2997
  %v3136 = vpop.f32.mrf.mxu0
  %v3137 = vadd.f32 %v2074, %v3136
  %v3138 = vpop.f32.mrf.mxu0
  %3139 = vdwg.mxu0
  %v3141 = vrot.slane %v3066, 3
  %v3143 = vadd.f32 %v2034, %v3141
  %v3144 = vxor.u32 %v3143, 2147483648
  %v3145 = vmul.f32 %v3144, 1.442695
  %v3146 = vpow.pop %v3145
  %v3147 = vadd.f32 %v3146, 1.0
  %v3148 = vrcp.pop %v3147
  %v3149 = vmul.f32 1.0, %v3148
  %v3151 = vrot.slane %v3068, 3
  %v3153 = vadd.f32 %v2035, %v3151
  %v3154 = vxor.u32 %v3153, 2147483648
  %v3155 = vmul.f32 %v3154, 1.442695
  %v3156 = vpow.pop %v3155
  %v3157 = vadd.f32 %v3156, 1.0
  %v3158 = vrcp.pop %v3157
  %v3159 = vmul.f32 1.0, %v3158
  %v3161 = vrot.slane %v3137, 3
  %v3163 = vmul.f32 %v3149, %v3161
  %v3164 = vadd.f32 %v2036, %v3163
  %v3165 = vtanh.pop %v3164
  %v3166 = vsub.f32 1.0, %v3159
  %v3167 = vmul.f32 %v3166, %v3165
  %v3168 = vrot.slane %v2985, 7
  %v3170 = vmul.f32 %v3159, %v3168
  %v3171 = vadd.f32 %v3167, %v3170
  %vm3172 = vcmp.eq.s32.totalorder %v2030, 5
  %v3173 = vsel %vm3172, 1, 0
  %vm3174 = vcmp.eq.s32.totalorder %v3173, 1
  %v3175 = vlaneseq
  %v3176 = vshrl.u32 %v3175, 7
  %v3177 = vsub.s32 5, %v3176
  %v3178 = vrot.slane %v3171, %v3177
  %v3179 = vsel %vm3174, %v3178, 0.0
  %v3180 = vadd.f32 %v2994, %v3179
  %v3182 = vrot.slane %v3171, 5
  %v3183 = vsel %vm1285, %v3182, 0
  %3185 = vmatprep.subr.mxu0 0.0
  %3186 = vmatpush1.msra.mxu0 0.0
  %3187 = vmatprep.subr.mxu0 0.0
  %3188 = vmatpush1.msra.mxu0 0.0
  %3189 = vmatprep.subr.mxu0 0.0
  %3190 = vmatpush1.msra.mxu0 0.0
  %3191 = vmatprep.subr.mxu0 0.0
  %3192 = vmatpush1.msra.mxu0 0.0
  %3193 = vmatprep.subr.mxu0 0.0
  %3194 = vmatpush1.msra.mxu0 0.0
  %3195 = vmatprep.subr.mxu0 0.0
  %3196 = vmatpush1.msra.mxu0 0.0
  %3197 = vmatprep.subr.mxu0 0.0
  %3198 = vmatpush1.msra.mxu0 0.0
  %3199 = vmatprep.subr.mxu0 0.0
  %3200 = vmatpush1.msra.mxu0 0.0
  %3201 = vmatprep.subr.mxu0 %v2059
  %3202 = vmatpush1.msra.mxu0 %v2058
  %3203 = vmatprep.subr.mxu0 %v2056
  %3204 = vmatpush1.msra.mxu0 %v2055
  %3205 = vmatprep.subr.mxu0 %v2053
  %3206 = vmatpush1.msra.mxu0 %v2052
  %3207 = vmatprep.subr.mxu0 %v2050
  %3208 = vmatpush1.msra.mxu0 %v2049
  %3209 = vmatprep.subr.mxu0 %v2047
  %3210 = vmatpush1.msra.mxu0 %v2046
  %3211 = vmatprep.subr.mxu0 %v2044
  %3212 = vmatpush1.msra.mxu0 %v2043
  %3213 = vmatprep.subr.mxu0 %v2041
  %3214 = vmatpush1.msra.mxu0 %v2040
  %3215 = vmatprep.subr.mxu0 %v2038
  %3216 = vmatpush1.msra.mxu0 %v2037
  %3217 = vmatprep.subr.mxu0 0.0
  %3218 = vmatpush2.msra.mxu0 0.0
  %3219 = vmatprep.subr.mxu0 0.0
  %3220 = vmatpush2.msra.mxu0 0.0
  %3221 = vmatprep.subr.mxu0 0.0
  %3222 = vmatpush2.msra.mxu0 0.0
  %3223 = vmatprep.subr.mxu0 0.0
  %3224 = vmatpush2.msra.mxu0 0.0
  %3225 = vmatprep.subr.mxu0 0.0
  %3226 = vmatpush2.msra.mxu0 0.0
  %3227 = vmatprep.subr.mxu0 0.0
  %3228 = vmatpush2.msra.mxu0 0.0
  %3229 = vmatprep.subr.mxu0 0.0
  %3230 = vmatpush2.msra.mxu0 0.0
  %3231 = vmatprep.subr.mxu0 0.0
  %3232 = vmatpush2.msra.mxu0 0.0
  %3233 = vmatprep.subr.mxu0 0.0
  %3234 = vmatpush2.msra.mxu0 0.0
  %3235 = vmatprep.subr.mxu0 0.0
  %3236 = vmatpush2.msra.mxu0 0.0
  %3237 = vmatprep.subr.mxu0 0.0
  %3238 = vmatpush2.msra.mxu0 0.0
  %3239 = vmatprep.subr.mxu0 0.0
  %3240 = vmatpush2.msra.mxu0 0.0
  %3241 = vmatprep.subr.mxu0 0.0
  %3242 = vmatpush2.msra.mxu0 0.0
  %3243 = vmatprep.subr.mxu0 0.0
  %3244 = vmatpush2.msra.mxu0 0.0
  %3245 = vmatprep.subr.mxu0 0.0
  %3246 = vmatpush2.msra.mxu0 0.0
  %3247 = vmatprep.subr.mxu0 0.0
  %3248 = vmatpush2.msra.mxu0 0.0
  %3249 = vmatprep.mubr.f32.mxu0 0.0
  %3250 = vmatmul.mubr.f32.gmra.mxu0 %v3183
  %v3251 = vpop.f32.mrf.mxu0
  %v3252 = vadd.f32 %v2066, %v3251
  %v3253 = vpop.f32.mrf.mxu0
  %v3254 = vadd.f32 %v2070, %v3253
  %3255 = vdwg.mxu0
  %3256 = vmatprep.subr.mxu0 0.0
  %3257 = vmatpush1.msra.mxu0 0.0
  %3258 = vmatprep.subr.mxu0 0.0
  %3259 = vmatpush1.msra.mxu0 0.0
  %3260 = vmatprep.subr.mxu0 0.0
  %3261 = vmatpush1.msra.mxu0 0.0
  %3262 = vmatprep.subr.mxu0 0.0
  %3263 = vmatpush1.msra.mxu0 0.0
  %3264 = vmatprep.subr.mxu0 0.0
  %3265 = vmatpush1.msra.mxu0 0.0
  %3266 = vmatprep.subr.mxu0 0.0
  %3267 = vmatpush1.msra.mxu0 0.0
  %3268 = vmatprep.subr.mxu0 0.0
  %3269 = vmatpush1.msra.mxu0 0.0
  %3270 = vmatprep.subr.mxu0 0.0
  %3271 = vmatpush1.msra.mxu0 0.0
  %3272 = vmatprep.subr.mxu0 0.0
  %3273 = vmatpush1.msra.mxu0 %v2060
  %3274 = vmatprep.subr.mxu0 0.0
  %3275 = vmatpush1.msra.mxu0 %v2057
  %3276 = vmatprep.subr.mxu0 0.0
  %3277 = vmatpush1.msra.mxu0 %v2054
  %3278 = vmatprep.subr.mxu0 0.0
  %3279 = vmatpush1.msra.mxu0 %v2051
  %3280 = vmatprep.subr.mxu0 0.0
  %3281 = vmatpush1.msra.mxu0 %v2048
  %3282 = vmatprep.subr.mxu0 0.0
  %3283 = vmatpush1.msra.mxu0 %v2045
  %3284 = vmatprep.subr.mxu0 0.0
  %3285 = vmatpush1.msra.mxu0 %v2042
  %3286 = vmatprep.subr.mxu0 0.0
  %3287 = vmatpush1.msra.mxu0 %v2039
  %3288 = vmatprep.subr.mxu0 0.0
  %3289 = vmatpush2.msra.mxu0 0.0
  %3290 = vmatprep.subr.mxu0 0.0
  %3291 = vmatpush2.msra.mxu0 0.0
  %3292 = vmatprep.subr.mxu0 0.0
  %3293 = vmatpush2.msra.mxu0 0.0
  %3294 = vmatprep.subr.mxu0 0.0
  %3295 = vmatpush2.msra.mxu0 0.0
  %3296 = vmatprep.subr.mxu0 0.0
  %3297 = vmatpush2.msra.mxu0 0.0
  %3298 = vmatprep.subr.mxu0 0.0
  %3299 = vmatpush2.msra.mxu0 0.0
  %3300 = vmatprep.subr.mxu0 0.0
  %3301 = vmatpush2.msra.mxu0 0.0
  %3302 = vmatprep.subr.mxu0 0.0
  %3303 = vmatpush2.msra.mxu0 0.0
  %3304 = vmatprep.subr.mxu0 0.0
  %3305 = vmatpush2.msra.mxu0 0.0
  %3306 = vmatprep.subr.mxu0 0.0
  %3307 = vmatpush2.msra.mxu0 0.0
  %3308 = vmatprep.subr.mxu0 0.0
  %3309 = vmatpush2.msra.mxu0 0.0
  %3310 = vmatprep.subr.mxu0 0.0
  %3311 = vmatpush2.msra.mxu0 0.0
  %3312 = vmatprep.subr.mxu0 0.0
  %3313 = vmatpush2.msra.mxu0 0.0
  %3314 = vmatprep.subr.mxu0 0.0
  %3315 = vmatpush2.msra.mxu0 0.0
  %3316 = vmatprep.subr.mxu0 0.0
  %3317 = vmatpush2.msra.mxu0 0.0
  %3318 = vmatprep.subr.mxu0 0.0
  %3319 = vmatpush2.msra.mxu0 0.0
  %3320 = vmatprep.mubr.f32.mxu0 0.0
  %3321 = vmatmul.mubr.f32.gmra.mxu0 %v3183
  %v3322 = vpop.f32.mrf.mxu0
  %v3323 = vadd.f32 %v2074, %v3322
  %v3324 = vpop.f32.mrf.mxu0
  %3325 = vdwg.mxu0
  %v3327 = vrot.slane %v3252, 2
  %v3329 = vadd.f32 %v2034, %v3327
  %v3330 = vxor.u32 %v3329, 2147483648
  %v3331 = vmul.f32 %v3330, 1.442695
  %v3332 = vpow.pop %v3331
  %v3333 = vadd.f32 %v3332, 1.0
  %v3334 = vrcp.pop %v3333
  %v3335 = vmul.f32 1.0, %v3334
  %v3337 = vrot.slane %v3254, 2
  %v3339 = vadd.f32 %v2035, %v3337
  %v3340 = vxor.u32 %v3339, 2147483648
  %v3341 = vmul.f32 %v3340, 1.442695
  %v3342 = vpow.pop %v3341
  %v3343 = vadd.f32 %v3342, 1.0
  %v3344 = vrcp.pop %v3343
  %v3345 = vmul.f32 1.0, %v3344
  %v3347 = vrot.slane %v3323, 2
  %v3349 = vmul.f32 %v3335, %v3347
  %v3350 = vadd.f32 %v2036, %v3349
  %v3351 = vtanh.pop %v3350
  %v3352 = vsub.f32 1.0, %v3345
  %v3353 = vmul.f32 %v3352, %v3351
  %v3354 = vrot.slane %v3171, 7
  %v3356 = vmul.f32 %v3345, %v3354
  %v3357 = vadd.f32 %v3353, %v3356
  %vm3358 = vcmp.eq.s32.totalorder %v2030, 6
  %v3359 = vsel %vm3358, 1, 0
  %vm3360 = vcmp.eq.s32.totalorder %v3359, 1
  %v3361 = vlaneseq
  %v3362 = vshrl.u32 %v3361, 7
  %v3363 = vsub.s32 6, %v3362
  %v3364 = vrot.slane %v3357, %v3363
  %v3365 = vsel %vm3360, %v3364, 0.0
  %v3366 = vadd.f32 %v3180, %v3365
  %v3368 = vrot.slane %v3357, 6
  %v3369 = vsel %vm1285, %v3368, 0
  %3371 = vmatprep.subr.mxu0 0.0
  %3372 = vmatpush1.msra.mxu0 0.0
  %3373 = vmatprep.subr.mxu0 0.0
  %3374 = vmatpush1.msra.mxu0 0.0
  %3375 = vmatprep.subr.mxu0 0.0
  %3376 = vmatpush1.msra.mxu0 0.0
  %3377 = vmatprep.subr.mxu0 0.0
  %3378 = vmatpush1.msra.mxu0 0.0
  %3379 = vmatprep.subr.mxu0 0.0
  %3380 = vmatpush1.msra.mxu0 0.0
  %3381 = vmatprep.subr.mxu0 0.0
  %3382 = vmatpush1.msra.mxu0 0.0
  %3383 = vmatprep.subr.mxu0 0.0
  %3384 = vmatpush1.msra.mxu0 0.0
  %3385 = vmatprep.subr.mxu0 0.0
  %3386 = vmatpush1.msra.mxu0 0.0
  %3387 = vmatprep.subr.mxu0 %v2059
  %3388 = vmatpush1.msra.mxu0 %v2058
  %3389 = vmatprep.subr.mxu0 %v2056
  %3390 = vmatpush1.msra.mxu0 %v2055
  %3391 = vmatprep.subr.mxu0 %v2053
  %3392 = vmatpush1.msra.mxu0 %v2052
  %3393 = vmatprep.subr.mxu0 %v2050
  %3394 = vmatpush1.msra.mxu0 %v2049
  %3395 = vmatprep.subr.mxu0 %v2047
  %3396 = vmatpush1.msra.mxu0 %v2046
  %3397 = vmatprep.subr.mxu0 %v2044
  %3398 = vmatpush1.msra.mxu0 %v2043
  %3399 = vmatprep.subr.mxu0 %v2041
  %3400 = vmatpush1.msra.mxu0 %v2040
  %3401 = vmatprep.subr.mxu0 %v2038
  %3402 = vmatpush1.msra.mxu0 %v2037
  %3403 = vmatprep.subr.mxu0 0.0
  %3404 = vmatpush2.msra.mxu0 0.0
  %3405 = vmatprep.subr.mxu0 0.0
  %3406 = vmatpush2.msra.mxu0 0.0
  %3407 = vmatprep.subr.mxu0 0.0
  %3408 = vmatpush2.msra.mxu0 0.0
  %3409 = vmatprep.subr.mxu0 0.0
  %3410 = vmatpush2.msra.mxu0 0.0
  %3411 = vmatprep.subr.mxu0 0.0
  %3412 = vmatpush2.msra.mxu0 0.0
  %3413 = vmatprep.subr.mxu0 0.0
  %3414 = vmatpush2.msra.mxu0 0.0
  %3415 = vmatprep.subr.mxu0 0.0
  %3416 = vmatpush2.msra.mxu0 0.0
  %3417 = vmatprep.subr.mxu0 0.0
  %3418 = vmatpush2.msra.mxu0 0.0
  %3419 = vmatprep.subr.mxu0 0.0
  %3420 = vmatpush2.msra.mxu0 0.0
  %3421 = vmatprep.subr.mxu0 0.0
  %3422 = vmatpush2.msra.mxu0 0.0
  %3423 = vmatprep.subr.mxu0 0.0
  %3424 = vmatpush2.msra.mxu0 0.0
  %3425 = vmatprep.subr.mxu0 0.0
  %3426 = vmatpush2.msra.mxu0 0.0
  %3427 = vmatprep.subr.mxu0 0.0
  %3428 = vmatpush2.msra.mxu0 0.0
  %3429 = vmatprep.subr.mxu0 0.0
  %3430 = vmatpush2.msra.mxu0 0.0
  %3431 = vmatprep.subr.mxu0 0.0
  %3432 = vmatpush2.msra.mxu0 0.0
  %3433 = vmatprep.subr.mxu0 0.0
  %3434 = vmatpush2.msra.mxu0 0.0
  %3435 = vmatprep.mubr.f32.mxu0 0.0
  %3436 = vmatmul.mubr.f32.gmra.mxu0 %v3369
  %v3437 = vpop.f32.mrf.mxu0
  %v3438 = vadd.f32 %v2066, %v3437
  %v3439 = vpop.f32.mrf.mxu0
  %v3440 = vadd.f32 %v2070, %v3439
  %3441 = vdwg.mxu0
  %3442 = vmatprep.subr.mxu0 0.0
  %3443 = vmatpush1.msra.mxu0 0.0
  %3444 = vmatprep.subr.mxu0 0.0
  %3445 = vmatpush1.msra.mxu0 0.0
  %3446 = vmatprep.subr.mxu0 0.0
  %3447 = vmatpush1.msra.mxu0 0.0
  %3448 = vmatprep.subr.mxu0 0.0
  %3449 = vmatpush1.msra.mxu0 0.0
  %3450 = vmatprep.subr.mxu0 0.0
  %3451 = vmatpush1.msra.mxu0 0.0
  %3452 = vmatprep.subr.mxu0 0.0
  %3453 = vmatpush1.msra.mxu0 0.0
  %3454 = vmatprep.subr.mxu0 0.0
  %3455 = vmatpush1.msra.mxu0 0.0
  %3456 = vmatprep.subr.mxu0 0.0
  %3457 = vmatpush1.msra.mxu0 0.0
  %3458 = vmatprep.subr.mxu0 0.0
  %3459 = vmatpush1.msra.mxu0 %v2060
  %3460 = vmatprep.subr.mxu0 0.0
  %3461 = vmatpush1.msra.mxu0 %v2057
  %3462 = vmatprep.subr.mxu0 0.0
  %3463 = vmatpush1.msra.mxu0 %v2054
  %3464 = vmatprep.subr.mxu0 0.0
  %3465 = vmatpush1.msra.mxu0 %v2051
  %3466 = vmatprep.subr.mxu0 0.0
  %3467 = vmatpush1.msra.mxu0 %v2048
  %3468 = vmatprep.subr.mxu0 0.0
  %3469 = vmatpush1.msra.mxu0 %v2045
  %3470 = vmatprep.subr.mxu0 0.0
  %3471 = vmatpush1.msra.mxu0 %v2042
  %3472 = vmatprep.subr.mxu0 0.0
  %3473 = vmatpush1.msra.mxu0 %v2039
  %3474 = vmatprep.subr.mxu0 0.0
  %3475 = vmatpush2.msra.mxu0 0.0
  %3476 = vmatprep.subr.mxu0 0.0
  %3477 = vmatpush2.msra.mxu0 0.0
  %3478 = vmatprep.subr.mxu0 0.0
  %3479 = vmatpush2.msra.mxu0 0.0
  %3480 = vmatprep.subr.mxu0 0.0
  %3481 = vmatpush2.msra.mxu0 0.0
  %3482 = vmatprep.subr.mxu0 0.0
  %3483 = vmatpush2.msra.mxu0 0.0
  %3484 = vmatprep.subr.mxu0 0.0
  %3485 = vmatpush2.msra.mxu0 0.0
  %3486 = vmatprep.subr.mxu0 0.0
  %3487 = vmatpush2.msra.mxu0 0.0
  %3488 = vmatprep.subr.mxu0 0.0
  %3489 = vmatpush2.msra.mxu0 0.0
  %3490 = vmatprep.subr.mxu0 0.0
  %3491 = vmatpush2.msra.mxu0 0.0
  %3492 = vmatprep.subr.mxu0 0.0
  %3493 = vmatpush2.msra.mxu0 0.0
  %3494 = vmatprep.subr.mxu0 0.0
  %3495 = vmatpush2.msra.mxu0 0.0
  %3496 = vmatprep.subr.mxu0 0.0
  %3497 = vmatpush2.msra.mxu0 0.0
  %3498 = vmatprep.subr.mxu0 0.0
  %3499 = vmatpush2.msra.mxu0 0.0
  %3500 = vmatprep.subr.mxu0 0.0
  %3501 = vmatpush2.msra.mxu0 0.0
  %3502 = vmatprep.subr.mxu0 0.0
  %3503 = vmatpush2.msra.mxu0 0.0
  %3504 = vmatprep.subr.mxu0 0.0
  %3505 = vmatpush2.msra.mxu0 0.0
  %3506 = vmatprep.mubr.f32.mxu0 0.0
  %3507 = vmatmul.mubr.f32.gmra.mxu0 %v3369
  %v3508 = vpop.f32.mrf.mxu0
  %v3509 = vadd.f32 %v2074, %v3508
  %v3510 = vpop.f32.mrf.mxu0
  %3511 = vdwg.mxu0
  %v3513 = vrot.slane %v3438, 1
  %v3515 = vadd.f32 %v2034, %v3513
  %v3516 = vxor.u32 %v3515, 2147483648
  %v3517 = vmul.f32 %v3516, 1.442695
  %v3518 = vpow.pop %v3517
  %v3519 = vadd.f32 %v3518, 1.0
  %v3520 = vrcp.pop %v3519
  %v3521 = vmul.f32 1.0, %v3520
  %v3523 = vrot.slane %v3440, 1
  %v3525 = vadd.f32 %v2035, %v3523
  %v3526 = vxor.u32 %v3525, 2147483648
  %v3527 = vmul.f32 %v3526, 1.442695
  %v3528 = vpow.pop %v3527
  %v3529 = vadd.f32 %v3528, 1.0
  %v3530 = vrcp.pop %v3529
  %v3531 = vmul.f32 1.0, %v3530
  %v3533 = vrot.slane %v3509, 1
  %v3535 = vmul.f32 %v3521, %v3533
  %v3536 = vadd.f32 %v2036, %v3535
  %v3537 = vtanh.pop %v3536
  %v3538 = vsub.f32 1.0, %v3531
  %v3539 = vmul.f32 %v3538, %v3537
  %v3540 = vrot.slane %v3357, 7
  %v3542 = vmul.f32 %v3531, %v3540
  %v3543 = vadd.f32 %v3539, %v3542
  %vm3544 = vcmp.eq.s32.totalorder %v2030, 7
  %v3545 = vsel %vm3544, 1, 0
  %vm3546 = vcmp.eq.s32.totalorder %v3545, 1
  %v3547 = vlaneseq
  %v3548 = vshrl.u32 %v3547, 7
  %v3549 = vsub.s32 7, %v3548
  %v3550 = vrot.slane %v3543, %v3549
  %v3551 = vsel %vm3546, %v3550, 0.0
  %v3552 = vadd.f32 %v3366, %v3551
  %3553 = vst [vmem:[#allocation3] sm:$0xff] %v3552
  %v3554 = vld [vmem:[#allocation3] sm:$0xff]
  %v3555 = vpack.c.bf16 %v3554, %v3554
  %v3556 = vld [vmem:[%s13] sm:$0xf]
  %v3557 = vld [vmem:[%s13 + $0x4] sm:$0xf]
  %v3558 = vld [vmem:[%s13 + $0x8] sm:$0xf]
  %v3559 = vld [vmem:[%s13 + $0xc] sm:$0xf]
  %v3560 = vld [vmem:[%s13 + $0x10] sm:$0xf]
  %v3561 = vld [vmem:[%s13 + $0x14] sm:$0xf]
  %v3562 = vld [vmem:[%s13 + $0x18] sm:$0xf]
  %v3563 = vld [vmem:[%s13 + $0x1c] sm:$0xf]
  %v3564 = vld [vmem:[%s13 + $0x20] sm:$0xf]
  %v3565 = vld [vmem:[%s13 + $0x24] sm:$0xf]
  %v3566 = vld [vmem:[%s13 + $0x28] sm:$0xf]
  %v3567 = vld [vmem:[%s13 + $0x2c] sm:$0xf]
  %v3568 = vld [vmem:[%s13 + $0x30] sm:$0xf]
  %v3569 = vld [vmem:[%s13 + $0x34] sm:$0xf]
  %v3570 = vld [vmem:[%s13 + $0x38] sm:$0xf]
  %v3571 = vld [vmem:[%s13 + $0x3c] sm:$0xf]
  %v3572 = vld [vmem:[%s14] sm:$0x1]
  %v3574 = vlaneseq
  %v3575 = vshrl.u32 %v3574, 7
  %v3576 = vsub.s32 0, %v3575
  %v3577 = vrot.slane %v3572, %v3576
  %v3595 = vunpack.c.l.b16 %v3556
  %v3596 = vunpack.c.l.b16 %v3557
  %v3597 = vunpack.c.l.b16 %v3558
  %v3598 = vunpack.c.l.b16 %v3559
  %v3599 = vunpack.c.l.b16 %v3560
  %v3600 = vunpack.c.l.b16 %v3561
  %v3601 = vunpack.c.l.b16 %v3562
  %v3602 = vunpack.c.l.b16 %v3563
  %v3603 = vunpack.c.l.b16 %v3564
  %v3604 = vunpack.c.l.b16 %v3565
  %v3605 = vunpack.c.l.b16 %v3566
  %v3606 = vunpack.c.l.b16 %v3567
  %v3607 = vunpack.c.l.b16 %v3568
  %v3608 = vunpack.c.l.b16 %v3569
  %v3609 = vunpack.c.l.b16 %v3570
  %v3610 = vunpack.c.l.b16 %v3571
  %v3611 = vpack.c.b16 %v3596, %v3595
  %v3612 = vpack.c.b16 %v3598, %v3597
  %v3613 = vpack.c.b16 %v3600, %v3599
  %v3614 = vpack.c.b16 %v3602, %v3601
  %v3615 = vpack.c.b16 %v3604, %v3603
  %v3616 = vpack.c.b16 %v3606, %v3605
  %v3617 = vpack.c.b16 %v3608, %v3607
  %v3618 = vpack.c.b16 %v3610, %v3609
  %3627 = vmatprep.subr.bf16.mxu0 0
  %3628 = vmatpush1.bf16.msra.mxu0 %v3618
  %3629 = vmatprep.subr.bf16.mxu0 0
  %3630 = vmatpush1.bf16.msra.mxu0 %v3617
  %3631 = vmatprep.subr.bf16.mxu0 0
  %3632 = vmatpush1.bf16.msra.mxu0 %v3616
  %3633 = vmatprep.subr.bf16.mxu0 0
  %3634 = vmatpush1.bf16.msra.mxu0 %v3615
  %3635 = vmatprep.subr.bf16.mxu0 0
  %3636 = vmatpush1.bf16.msra.mxu0 %v3614
  %3637 = vmatprep.subr.bf16.mxu0 0
  %3638 = vmatpush1.bf16.msra.mxu0 %v3613
  %3639 = vmatprep.subr.bf16.mxu0 0
  %3640 = vmatpush1.bf16.msra.mxu0 %v3612
  %3641 = vmatprep.subr.bf16.mxu0 0
  %3642 = vmatpush1.bf16.msra.mxu0 %v3611
  %3643 = vmatprep.subr.bf16.mxu0 0
  %3644 = vmatpush2.bf16.msra.mxu0 0
  %3645 = vmatprep.subr.bf16.mxu0 0
  %3646 = vmatpush2.bf16.msra.mxu0 0
  %3647 = vmatprep.subr.bf16.mxu0 0
  %3648 = vmatpush2.bf16.msra.mxu0 0
  %3649 = vmatprep.subr.bf16.mxu0 0
  %3650 = vmatpush2.bf16.msra.mxu0 0
  %3651 = vmatprep.subr.bf16.mxu0 0
  %3652 = vmatpush2.bf16.msra.mxu0 0
  %3653 = vmatprep.subr.bf16.mxu0 0
  %3654 = vmatpush2.bf16.msra.mxu0 0
  %3655 = vmatprep.subr.bf16.mxu0 0
  %3656 = vmatpush2.bf16.msra.mxu0 0
  %3657 = vmatprep.subr.bf16.mxu0 0
  %3658 = vmatpush2.bf16.msra.mxu0 0
  %3659 = vmatprep.mubr.bf16.mxu0 0
  %3660 = vmatmul.mubr.bf16.gmra.mxu0 %v3555
  %v3661 = vpop.f32.mrf.mxu0
  %v3662 = vadd.f32 %v3577, %v3661
  %v3663 = vpop.f32.mrf.mxu0
  %v3664 = vpop.f32.mrf.mxu0
  %v3665 = vpop.f32.mrf.mxu0
  %3666 = vdwg.mxu0
  %v3667 = vlaneseq
  %v3668 = vand.u32 %v3667, 127
  %vm3669 = vcmp.lt.s32.totalorder %v3668, 7
  %v3670 = vsel %vm3669, %v3662, -1e+30
  %3671 = vmax.xlane.f32.xlu0 %v3670
  %v3672 = vpop.xlane.xlu0 %3671
  %v3673 = vsub.f32 %v3670, %v3672
  %v3674 = vmul.f32 %v3673, 1.442695
  %v3675 = vpow.pop %v3674
  %v3676 = vsel %vm3669, %v3675, 0.0
  %3677 = vadd.xlane.f32.xlu0 %v3676
  %v3678 = vpop.xlane.xlu0 %3677
  %v3679 = vrcp.pop %v3678
  %v3680 = vmul.f32 %v3676, %v3679
  %v3681 = vsel %vm3669, %v3680, %v3662
  %3682 = vst [vmem:[%s15] sm:$0xff] %v3681
  // Predicated region
  $region62: #{rnn_agent_forward.1} parent=0 // pred_check
    _
  $region63: #{rnn_agent_forward.1} parent=0 // pred_check_branch
    %3684 = sbr.rel (0) target = $region65
  $region64: #{rnn_agent_forward.1} parent=0 // pred_region
    _
  $region65: #{rnn_agent_forward.1} parent=0 // pred_fallthru
    _
  // Predicated region
  $region66: #{rnn_agent_forward.1} parent=0 // pred_check
    _
  $region67: #{rnn_agent_forward.1} parent=0 // pred_check_branch
    %3686 = sbr.rel (0) target = $region69
  $region68: #{rnn_agent_forward.1} parent=0 // pred_region
    _
  $region69: #{rnn_agent_forward.1} parent=0 // pred_fallthru
    _

</llo_original>
